<compile_context>
chip_gen: v7x
topology: tpu7x:2x2x1
jax: 0.10.0
libtpu: 0.0.40
codegen_flags: <defaults>
</compile_context>

<pallas_src>
import functools

import jax
import jax.numpy as jnp
import numpy as np
from jax.experimental import pallas as pl
from jax.experimental.pallas import tpu as pltpu


# -----------------------------------------------------------------------------
# Parameter packing layout.
# -----------------------------------------------------------------------------
_VEC_ROWS = (
    "ln_in_g", "ln_in_b", "ln_slot_g", "ln_slot_b", "ln_out_g", "ln_out_b",
    "ln_dec_g", "ln_dec_b", "mu", "log_sigma",
    "b_rz", "b_ih_n", "b_hh_n",
    "mlp_b1", "mlp_b2", "dec_b1", "dec_b2", "dec_b3",
)


def _round_up(x, m):
    return ((x + m - 1) // m) * m


def _vec_width(name, emb_pad, key_d):
    if name in ("ln_in_g", "ln_in_b", "dec_b2", "dec_b3"):
        return emb_pad
    if name in ("b_rz", "dec_b1"):
        return 2 * key_d
    return key_d


def pack_params(params, emb_d, key_d):
    """Pack the small parameters into 4 arrays (1 f32 vector bundle, 3 bf16 weight bundles).

    All weight-bundle column segments start on 128-lane boundaries; the E
    dimension is zero-padded to a multiple of 128 lanes.
    """
    E, K = emb_d, key_d
    assert K % 128 == 0, "key_dim must be a multiple of 128"
    EP = _round_up(E, 128)
    pe = EP - E

    def f32v(v):
        return v.reshape(1, -1).astype(jnp.float32)

    def padE(v):
        return jnp.pad(f32v(v), ((0, 0), (0, pe)))

    src = {
        "ln_in_g": padE(params["ln_in_g"]),
        "ln_in_b": padE(params["ln_in_b"]),
        "ln_slot_g": f32v(params["ln_slot_g"]),
        "ln_slot_b": f32v(params["ln_slot_b"]),
        "ln_out_g": f32v(params["ln_out_g"]),
        "ln_out_b": f32v(params["ln_out_b"]),
        "ln_dec_g": f32v(params["ln_dec_g"]),
        "ln_dec_b": f32v(params["ln_dec_b"]),
        "mu": f32v(params["mu"]),
        "log_sigma": f32v(params["log_sigma"]),
        # GRU bias layout for the fused gate dot: r/z biases pre-summed.
        "b_rz": f32v(params["b_ih"][..., :2 * K] + params["b_hh"][..., :2 * K]),
        "b_ih_n": f32v(params["b_ih"][..., 2 * K:]),
        "b_hh_n": f32v(params["b_hh"][..., 2 * K:]),
        "mlp_b1": f32v(params["mlp_b1"]),
        "mlp_b2": f32v(params["mlp_b2"]),
        "dec_b1": f32v(params["dec_b1"]),
        "dec_b2": padE(params["dec_b2"]),
        "dec_b3": padE(params["dec_b3"]),
    }
    wmax = max(2 * K, EP)
    rows = []
    for name in _VEC_ROWS:
        v = src[name].reshape(-1)
        w = _vec_width(name, EP, K)
        assert v.shape[0] == w, (name, v.shape, w)
        rows.append(jnp.pad(v, (0, wmax - w)))
    vec = jnp.stack(rows, axis=0)
    rpad = (-len(_VEC_ROWS)) % 8                      # pad rows to a sublane multiple
    if rpad:
        vec = jnp.pad(vec, ((0, rpad), (0, 0)))

    # K-input-row weights: [wq | mlp_w1 | mlp_w2 | dec_w1] -> (K, 5K)
    wk_pack = jnp.concatenate(
        [params["wq"], params["mlp_w1"], params["mlp_w2"], params["dec_w1"]],
        axis=1).astype(jnp.bfloat16)

    # E-input-row weights (E padded to EP), K**-0.5 folded into wk:
    #   [wk * K^-0.5 | wv | dec_w3] -> (EP, 2K + EP)
    def pad_rows(a):
        return jnp.pad(a, ((0, pe), (0, 0)))
    wk_scaled = params["wk"] * (K ** -0.5)
    dec_w3_p = jnp.pad(params["dec_w3"], ((0, pe), (0, pe)))
    we_pack = jnp.concatenate(
        [pad_rows(wk_scaled), pad_rows(params["wv"]), dec_w3_p],
        axis=1).astype(jnp.bfloat16)

    # 2K-input-row weights: fused-GRU layouts + decoder mid weight:
    #   [W_rz (stacked) | W_n (block-diag) | dec_w2] -> (2K, 4K + EP)
    w_rz = jnp.concatenate(
        [params["w_ih_t"][:, :2 * K], params["w_hh_t"][:, :2 * K]], axis=0)
    zKK = jnp.zeros((K, K), jnp.float32)
    w_n = jnp.concatenate(
        [jnp.concatenate([params["w_ih_t"][:, 2 * K:], zKK], axis=1),
         jnp.concatenate([zKK, params["w_hh_t"][:, 2 * K:]], axis=1)], axis=0)
    dec_w2_p = jnp.pad(params["dec_w2"], ((0, 0), (0, pe)))
    g2_pack = jnp.concatenate([w_rz, w_n, dec_w2_p], axis=1).astype(jnp.bfloat16)

    return {"vec": vec, "wk_pack": wk_pack, "we_pack": we_pack, "g2_pack": g2_pack,
            "emb_d": E, "emb_pad": EP, "key_d": K}


def _layernorm(x, g, b, eps=1e-5):
    m = jnp.mean(x, axis=-1, keepdims=True)
    xc = x - m
    var = jnp.mean(xc * xc, axis=-1, keepdims=True)
    return xc * jax.lax.rsqrt(var + eps) * g + b


def _layernorm_masked(x, g, b, d_true, mask, eps=1e-5):
    """LayerNorm over the first d_true lanes of a zero-padded last dim."""
    inv_d = 1.0 / d_true
    m = jnp.sum(x, axis=-1, keepdims=True) * inv_d
    xc = (x - m) * mask
    var = jnp.sum(xc * xc, axis=-1, keepdims=True) * inv_d
    return xc * jax.lax.rsqrt(var + eps) * g + b


# -----------------------------------------------------------------------------
# Kernel
# -----------------------------------------------------------------------------
def slot_attention_kernel(
    feats_ref, noise_ref, vec_ref, wkp_ref, wep_ref, g2p_ref,
    slots_out_ref, attn_out_ref, sse_ref,
    *, emb_d, emb_pad, key_d, n_batch, n_tokens, n_slots, n_iter, attn_eps,
):
    E, EP, K = emb_d, emb_pad, key_d
    BB, N, S = n_batch, n_tokens, n_slots

    def vec(name):                                    # (1, width) f32 view
        i = _VEC_ROWS.index(name)
        return vec_ref[i:i + 1, : _vec_width(name, EP, K)]

    def b16(x):
        return x.astype(jnp.bfloat16)

    # Small (1, width) f32 bias/LayerNorm vectors: hoisted once (tiny).
    # Large weight tiles are NOT hoisted: they are streamed from the packed refs
    # at every dot call site to keep register pressure per-pass.
    ln_in_g, ln_in_b = vec("ln_in_g"), vec("ln_in_b")
    ln_slot_g, ln_slot_b = vec("ln_slot_g"), vec("ln_slot_b")
    ln_out_g, ln_out_b = vec("ln_out_g"), vec("ln_out_b")
    ln_dec_g, ln_dec_b = vec("ln_dec_g"), vec("ln_dec_b")
    mu, log_sigma = vec("mu"), vec("log_sigma")
    b_rz, b_ih_n, b_hh_n = vec("b_rz"), vec("b_ih_n"), vec("b_hh_n")
    mlp_b1, mlp_b2 = vec("mlp_b1"), vec("mlp_b2")
    dec_b1, dec_b2, dec_b3 = vec("dec_b1"), vec("dec_b2"), vec("dec_b3")

    # Lane mask for the zero-padded E dimension (pad lanes excluded from LN stats).
    e_mask = (jax.lax.broadcasted_iota(jnp.int32, (1, EP), 1) < E).astype(jnp.float32)

    # -------- input projections: batch folded into the MXU M dimension --------
    f2 = feats_ref[...].reshape(BB * N, EP)           # (BB*N, EP) f32, pad lanes = 0
    f_ln = _layernorm_masked(f2, ln_in_g, ln_in_b, E, e_mask)
    # Fused k/v projection: width 2K, K**-0.5 already folded into wk.
    kv = jnp.dot(b16(f_ln), wep_ref[:, 0:2 * K], preferred_element_type=jnp.float32)
    k3 = b16(kv[:, 0:K]).reshape(BB, N, K)            # loop-invariant bf16 copies
    v3 = b16(kv[:, K:2 * K]).reshape(BB, N, K)

    # slots = randn * exp(log_sigma) + mu   (noise generated outside, passed in)
    slots = noise_ref[...].reshape(BB * S, K) * jnp.exp(log_sigma) + mu   # (BB*S, K) f32

    attn_sn = None
    for _ in range(n_iter):                           # static unroll (n_iter >= 1)
        slots_prev = slots
        sl = _layernorm(slots, ln_slot_g, ln_slot_b)
        q = jnp.dot(b16(sl), wkp_ref[:, 0:K], preferred_element_type=jnp.float32)
        q3 = b16(q).reshape(BB, S, K)

        # logits in (S, N) layout: contraction over the minor (K) dim of both operands.
        logits = jnp.einsum("bsk,bnk->bsn", q3, k3,
                            preferred_element_type=jnp.float32)           # (BB, S, N)
        lmax = jnp.max(logits, axis=1, keepdims=True)
        e = jnp.exp(logits - lmax)
        attn_sn = e * pl.reciprocal(jnp.sum(e, axis=1, keepdims=True), approx=True)
        attn = attn_sn + attn_eps
        attn = attn * pl.reciprocal(jnp.sum(attn, axis=2, keepdims=True), approx=True)

        # updates: contraction over attn's minor (N) dim against v.
        updates = jnp.einsum("bsn,bnk->bsk", b16(attn), v3,
                             preferred_element_type=jnp.float32)          # (BB, S, K)
        upd2 = updates.reshape(BB * S, K)

        # GRUCell(updates, slots_prev) — PyTorch gate order (r, z, n).
        # One fused depth-2K / width-4K MXU pass over [W_rz | W_n(block-diag)].
        xcat = jnp.concatenate([b16(upd2), b16(slots_prev)], axis=1)      # (BB*S, 2K)
        g = jnp.dot(xcat, g2p_ref[:, 0:4 * K], preferred_element_type=jnp.float32)
        rz = jax.nn.sigmoid(g[:, 0:2 * K] + b_rz)
        r = rz[:, 0:K]
        z = rz[:, K:2 * K]
        n = jnp.tanh(g[:, 2 * K:3 * K] + b_ih_n + r * (g[:, 3 * K:4 * K] + b_hh_n))
        slots = (1.0 - z) * n + z * slots_prev

        # residual MLP
        so = _layernorm(slots, ln_out_g, ln_out_b)
        h = jnp.maximum(
            jnp.dot(b16(so), wkp_ref[:, K:2 * K],
                    preferred_element_type=jnp.float32) + mlp_b1, 0.0)
        slots = slots + jnp.dot(b16(h), wkp_ref[:, 2 * K:3 * K],
                                preferred_element_type=jnp.float32) + mlp_b2

    slots_out_ref[...] = slots.reshape(BB, S, K)
    # attn is stored in its natural (BB, S, N) compute layout (no in-kernel
    # output transpose); the user-facing (B, N, S) transpose is done in XLA.
    attn_out_ref[...] = attn_sn

    # decoder + reconstruction (forward(), all_loss=False -> per-block SSE here)
    sd = _layernorm(slots, ln_dec_g, ln_dec_b)
    h1 = jnp.maximum(
        jnp.dot(b16(sd), wkp_ref[:, 3 * K:5 * K],
                preferred_element_type=jnp.float32) + dec_b1, 0.0)        # (BB*S, 2K)
    h2 = jnp.maximum(
        jnp.dot(b16(h1), g2p_ref[:, 4 * K:4 * K + EP],
                preferred_element_type=jnp.float32) + dec_b2, 0.0)        # (BB*S, EP)
    sf = jnp.dot(b16(h2), wep_ref[:, 2 * K:2 * K + EP],
                 preferred_element_type=jnp.float32) + dec_b3             # (BB*S, EP)
    sf3 = b16(sf).reshape(BB, S, EP)

    # einsum 'bkd,bnk->bnd': attn (N,S) @ sf (S,E); contraction over attn's minor dim.
    attn_ns = b16(jnp.swapaxes(attn_sn, 1, 2))                            # (BB, N, S)
    recon = jnp.einsum("bns,bse->bne", attn_ns, sf3,
                       preferred_element_type=jnp.float32)                # (BB, N, EP)
    diff = recon - feats_ref[...]                     # pad lanes are zero on both sides
    row = jnp.sum((diff * diff).reshape(BB * N, EP), axis=-1, keepdims=True)
    sse_ref[0] = jnp.sum(row, axis=0, keepdims=True)                      # (1, 1)


# -----------------------------------------------------------------------------
# Wrapper
# -----------------------------------------------------------------------------
def slot_attention_forward(features, noise, packed, *, n_iter=3, attn_eps=1e-8):
    assert n_iter >= 1, "n_iter must be >= 1 (attn is produced inside the loop)"
    B, N, E = features.shape
    _, S, K = noise.shape
    EP = packed["emb_pad"]
    assert packed["emb_d"] == E and packed["key_d"] == K

    vec, wkp = packed["vec"], packed["wk_pack"]
    wep, g2p = packed["we_pack"], packed["g2_pack"]
    param_bytes = vec.size * 4 + (wkp.size + wep.size + g2p.size) * 2

    # Zero-pad the embedding dim so the whole E path is lane dense (128 lanes).
    feats_p = features if EP == E else jnp.pad(features, ((0, 0), (0, 0), (0, EP - E)))

    # Pick BB (batches folded per grid step) from a conservative VMEM budget
    # (fits v7x's 64 MiB physical VMEM with headroom); grid = B // BB "parallel"
    # steps.  Small B stays a single fat step (no defeated batch folding); large
    # B gets multiple steps -> feature-block DMA pipelining / multi-core sharding.
    def block_bytes(bb):
        per_b = 4 * (N * EP * 6 + N * K * 6 + S * K * 10 + S * N * 8
                     + S * EP * 6 + S * 4 * K * 2)
        return bb * per_b

    budget = 40 * 1024 * 1024
    BB = 1
    for bb in range(1, B + 1):
        if B % bb == 0 and 2 * block_bytes(bb) + 2 * param_bytes <= budget:
            BB = bb
    G = B // BB

    vmem_limit = int(min(64 * 1024 * 1024,
                         max(32 * 1024 * 1024, 4 * block_bytes(BB) + 4 * param_bytes)))

    # Advisory cost estimate for XLA's scheduler.
    flops = int(2 * B * (
        N * EP * 2 * K
        + n_iter * (S * K * K + 2 * S * N * K + S * (2 * K) * (4 * K) + 2 * S * K * K)
        + S * (K * 2 * K + 2 * K * EP + EP * EP)
        + N * S * EP))
    transcendentals = int(B * (n_iter * (S * N + 4 * S * K) + S * K))
    bytes_accessed = int(feats_p.size * 4 + noise.size * 4
                         + B * S * K * 4 + B * S * N * 4 + param_bytes)

    kernel = functools.partial(
        slot_attention_kernel,
        emb_d=E, emb_pad=EP, key_d=K, n_batch=BB, n_tokens=N, n_slots=S,
        n_iter=n_iter, attn_eps=attn_eps)

    in_specs = [
        pl.BlockSpec((BB, N, EP), lambda g: (g, 0, 0)),  # features (E-padded)
        pl.BlockSpec((BB, S, K), lambda g: (g, 0, 0)),   # slot-init noise
        pl.BlockSpec(vec.shape, lambda g: (0, 0)),       # packed vectors (f32)
        pl.BlockSpec(wkp.shape, lambda g: (0, 0)),       # packed K-row weights (bf16)
        pl.BlockSpec(wep.shape, lambda g: (0, 0)),       # packed E-row weights (bf16)
        pl.BlockSpec(g2p.shape, lambda g: (0, 0)),       # packed 2K-row weights (bf16)
    ]
    out_specs = [
        pl.BlockSpec((BB, S, K), lambda g: (g, 0, 0)),   # slots (lane-dense, K=128)
        pl.BlockSpec((BB, S, N), lambda g: (g, 0, 0)),   # attn in (S, N) compute layout
        pl.BlockSpec((1, 1, 1), lambda g: (g, 0, 0)),    # per-block squared-error sum
    ]
    out_shape = [
        jax.ShapeDtypeStruct((B, S, K), jnp.float32),
        jax.ShapeDtypeStruct((B, S, N), jnp.float32),
        jax.ShapeDtypeStruct((G, 1, 1), jnp.float32),
    ]

    slots, attn_sn, sse = pl.pallas_call(
        kernel,
        out_shape=out_shape,
        grid_spec=pltpu.PrefetchScalarGridSpec(
            num_scalar_prefetch=0,
            grid=(G,),
            in_specs=in_specs,
            out_specs=out_specs,
        ),
        compiler_params=pltpu.CompilerParams(
            dimension_semantics=("parallel",),
            vmem_limit_bytes=vmem_limit),
        cost_estimate=pl.CostEstimate(flops=flops, transcendentals=transcendentals,
                                      bytes_accessed=bytes_accessed),
    )(feats_p, noise, vec, wkp, wep, g2p)

    attn = jnp.transpose(attn_sn, (0, 2, 1))             # user-facing (B, N, S), in XLA
    recon_loss = jnp.sum(sse) / (B * N * E)              # mse_loss(...).mean()
    return slots, attn, recon_loss


# -----------------------------------------------------------------------------
# Parameter init (mirrors the PyTorch module's init schemes closely enough)
# -----------------------------------------------------------------------------
def init_params(key, emb_d, key_d):
    keys = iter(jax.random.split(key, 24))

    def xavier(k, shape):
        lim = float(np.sqrt(6.0 / (shape[0] + shape[1])))
        return jax.random.uniform(k, shape, jnp.float32, -lim, lim)

    def unif(k, shape, lim):
        return jax.random.uniform(k, shape, jnp.float32, -lim, lim)

    gru_lim = 1.0 / float(np.sqrt(key_d))
    return {
        "ln_in_g": jnp.ones((1, emb_d), jnp.float32),
        "ln_in_b": jnp.zeros((1, emb_d), jnp.float32),
        "ln_slot_g": jnp.ones((1, key_d), jnp.float32),
        "ln_slot_b": jnp.zeros((1, key_d), jnp.float32),
        "ln_out_g": jnp.ones((1, key_d), jnp.float32),
        "ln_out_b": jnp.zeros((1, key_d), jnp.float32),
        "ln_dec_g": jnp.ones((1, key_d), jnp.float32),
        "ln_dec_b": jnp.zeros((1, key_d), jnp.float32),
        "mu": xavier(next(keys), (1, key_d)),
        "log_sigma": xavier(next(keys), (1, key_d)),
        "wk": xavier(next(keys), (emb_d, key_d)),
        "wq": xavier(next(keys), (key_d, key_d)),
        "wv": xavier(next(keys), (emb_d, key_d)),
        "w_ih_t": unif(next(keys), (key_d, 3 * key_d), gru_lim),
        "w_hh_t": unif(next(keys), (key_d, 3 * key_d), gru_lim),
        "b_ih": unif(next(keys), (1, 3 * key_d), gru_lim),
        "b_hh": unif(next(keys), (1, 3 * key_d), gru_lim),
        "mlp_w1": xavier(next(keys), (key_d, key_d)),
        "mlp_b1": unif(next(keys), (1, key_d), gru_lim),
        "mlp_w2": xavier(next(keys), (key_d, key_d)),
        "mlp_b2": unif(next(keys), (1, key_d), gru_lim),
        "dec_w1": xavier(next(keys), (key_d, 2 * key_d)),
        "dec_b1": unif(next(keys), (1, 2 * key_d), gru_lim),
        "dec_w2": xavier(next(keys), (2 * key_d, emb_d)),
        "dec_b2": unif(next(keys), (1, emb_d), 1.0 / float(np.sqrt(2 * key_d))),
        "dec_w3": xavier(next(keys), (emb_d, emb_d)),
        "dec_b3": unif(next(keys), (1, emb_d), 1.0 / float(np.sqrt(emb_d))),
    }


def reference_forward(features, noise, p, n_iter, attn_eps=1e-8):
    """Pure-JAX f32 reference mirroring SlotAttention.forward(all_loss=False)."""
    def ln(x, g, b, eps=1e-5):
        m = jnp.mean(x, -1, keepdims=True)
        v = jnp.mean((x - m) ** 2, -1, keepdims=True)
        return (x - m) / jnp.sqrt(v + eps) * g + b

    K = p["wq"].shape[0]
    f = ln(features, p["ln_in_g"], p["ln_in_b"])
    slots = noise * jnp.exp(p["log_sigma"]) + p["mu"]
    k = (f @ p["wk"]) * K ** -0.5
    v = f @ p["wv"]
    attn_vis = None
    for _ in range(n_iter):
        slots_prev = slots
        sl = ln(slots, p["ln_slot_g"], p["ln_slot_b"])
        q = sl @ p["wq"]
        logits = jnp.einsum("bnd,bkd->bnk", k, q)
        attn_vis = jax.nn.softmax(logits, axis=-1)
        attn = attn_vis + attn_eps
        attn = attn / jnp.sum(attn, axis=-2, keepdims=True)
        updates = jnp.einsum("bnk,bnd->bkd", attn, v)
        gi = updates @ p["w_ih_t"] + p["b_ih"]
        gh = slots_prev @ p["w_hh_t"] + p["b_hh"]
        r = jax.nn.sigmoid(gi[..., :K] + gh[..., :K])
        z = jax.nn.sigmoid(gi[..., K:2 * K] + gh[..., K:2 * K])
        n = jnp.tanh(gi[..., 2 * K:] + r * gh[..., 2 * K:])
        slots = (1.0 - z) * n + z * slots_prev
        so = ln(slots, p["ln_out_g"], p["ln_out_b"])
        slots = slots + jnp.maximum(so @ p["mlp_w1"] + p["mlp_b1"], 0.0) @ p["mlp_w2"] + p["mlp_b2"]
    sd = ln(slots, p["ln_dec_g"], p["ln_dec_b"])
    h = jnp.maximum(sd @ p["dec_w1"] + p["dec_b1"], 0.0)
    h = jnp.maximum(h @ p["dec_w2"] + p["dec_b2"], 0.0)
    sf = h @ p["dec_w3"] + p["dec_b3"]
    recon = jnp.einsum("bkd,bnk->bnd", sf, attn_vis)
    loss = jnp.mean((recon - features) ** 2)
    return slots, attn_vis, loss


if __name__ == "__main__":
    B, N, E = 2, 16, 64          # batch, tokens, emb_d
    S, K = 8, 128                # n_slots, key_dim (module default key_dim=128)
    N_ITER = 3

    root = jax.random.PRNGKey(0)
    k_feat, k_noise, k_param = jax.random.split(root, 3)
    features = jax.random.normal(k_feat, (B, N, E), jnp.float32)
    # TODO(synk): torch.randn slot init has no in-kernel equivalent here; the noise is
    # generated deterministically in JAX and passed to the kernel as an input.
    noise = jax.random.normal(k_noise, (B, S, K), jnp.float32)
    params = init_params(k_param, E, K)
    packed = pack_params(params, E, K)   # pre-pack once: 6 kernel inputs total

    slots, attn, loss = slot_attention_forward(features, noise, packed, n_iter=N_ITER)
    jax.block_until_ready((slots, attn, loss))

    with jax.default_matmul_precision("float32"):
        ref_slots, ref_attn, ref_loss = reference_forward(features, noise, params, N_ITER)
    ref_slots, ref_attn, ref_loss = jax.block_until_ready((ref_slots, ref_attn, ref_loss))

    assert np.all(np.isfinite(np.asarray(slots)))
    np.testing.assert_allclose(np.asarray(slots), np.asarray(ref_slots), rtol=5e-2, atol=5e-2)
    np.testing.assert_allclose(np.asarray(attn), np.asarray(ref_attn), rtol=5e-2, atol=5e-2)
    np.testing.assert_allclose(np.asarray(loss), np.asarray(ref_loss), rtol=5e-2, atol=5e-2)

    print("KERNEL_OK")
</pallas_src>

<mosaic_0001>
module attributes {stable_mosaic.version = 11 : i64} {
  func.func @slot_attention_kernel(%arg0: i32, %arg1: memref<2x16x128xf32, #tpu.memory_space<vmem>>, %arg2: memref<2x8x128xf32, #tpu.memory_space<vmem>>, %arg3: memref<24x256xf32, #tpu.memory_space<vmem>>, %arg4: memref<128x640xbf16, #tpu.memory_space<vmem>>, %arg5: memref<128x384xbf16, #tpu.memory_space<vmem>>, %arg6: memref<256x640xbf16, #tpu.memory_space<vmem>>, %arg7: memref<2x8x128xf32, #tpu.memory_space<vmem>>, %arg8: memref<2x8x16xf32, #tpu.memory_space<vmem>>, %arg9: memref<1x1x1xf32, #tpu.memory_space<vmem>>) attributes {dimension_semantics = [#tpu.dimension_semantics<parallel>], iteration_bounds = array<i64: 1>, scalar_prefetch = 0 : i64, scratch_operands = 0 : i64, tpu.core_type = #tpu.core_type<tc>, window_params = [{transform_indices = @transform_0, window_bounds = array<i64: 2, 16, 128>}, {transform_indices = @transform_1, window_bounds = array<i64: 2, 8, 128>}, {pipeline_mode = #tpu.pipeline_mode<synchronous>, transform_indices = @transform_2, window_bounds = array<i64: 24, 256>}, {pipeline_mode = #tpu.pipeline_mode<synchronous>, transform_indices = @transform_3, window_bounds = array<i64: 128, 640>}, {pipeline_mode = #tpu.pipeline_mode<synchronous>, transform_indices = @transform_4, window_bounds = array<i64: 128, 384>}, {pipeline_mode = #tpu.pipeline_mode<synchronous>, transform_indices = @transform_5, window_bounds = array<i64: 256, 640>}, {transform_indices = @transform_6, window_bounds = array<i64: 2, 8, 128>}, {transform_indices = @transform_7, window_bounds = array<i64: 2, 8, 16>}, {transform_indices = @transform_8, window_bounds = array<i64: 1, 1, 1>}]} {
    %c0 = arith.constant 0 : index
    %c0_0 = arith.constant 0 : index
    %0 = vector.load %arg3[%c0, %c0_0] : memref<24x256xf32, #tpu.memory_space<vmem>>, vector<1x128xf32>
    %c1 = arith.constant 1 : index
    %c0_1 = arith.constant 0 : index
    %1 = vector.load %arg3[%c1, %c0_1] : memref<24x256xf32, #tpu.memory_space<vmem>>, vector<1x128xf32>
    %c2 = arith.constant 2 : index
    %c0_2 = arith.constant 0 : index
    %2 = vector.load %arg3[%c2, %c0_2] : memref<24x256xf32, #tpu.memory_space<vmem>>, vector<1x128xf32>
    %c3 = arith.constant 3 : index
    %c0_3 = arith.constant 0 : index
    %3 = vector.load %arg3[%c3, %c0_3] : memref<24x256xf32, #tpu.memory_space<vmem>>, vector<1x128xf32>
    %c4 = arith.constant 4 : index
    %c0_4 = arith.constant 0 : index
    %4 = vector.load %arg3[%c4, %c0_4] : memref<24x256xf32, #tpu.memory_space<vmem>>, vector<1x128xf32>
    %c5 = arith.constant 5 : index
    %c0_5 = arith.constant 0 : index
    %5 = vector.load %arg3[%c5, %c0_5] : memref<24x256xf32, #tpu.memory_space<vmem>>, vector<1x128xf32>
    %c6 = arith.constant 6 : index
    %c0_6 = arith.constant 0 : index
    %6 = vector.load %arg3[%c6, %c0_6] : memref<24x256xf32, #tpu.memory_space<vmem>>, vector<1x128xf32>
    %c7 = arith.constant 7 : index
    %c0_7 = arith.constant 0 : index
    %7 = vector.load %arg3[%c7, %c0_7] : memref<24x256xf32, #tpu.memory_space<vmem>>, vector<1x128xf32>
    %c8 = arith.constant 8 : index
    %c0_8 = arith.constant 0 : index
    %8 = vector.load %arg3[%c8, %c0_8] : memref<24x256xf32, #tpu.memory_space<vmem>>, vector<1x128xf32>
    %c9 = arith.constant 9 : index
    %c0_9 = arith.constant 0 : index
    %9 = vector.load %arg3[%c9, %c0_9] : memref<24x256xf32, #tpu.memory_space<vmem>>, vector<1x128xf32>
    %c10 = arith.constant 10 : index
    %c0_10 = arith.constant 0 : index
    %10 = vector.load %arg3[%c10, %c0_10] : memref<24x256xf32, #tpu.memory_space<vmem>>, vector<1x256xf32>
    %c11 = arith.constant 11 : index
    %c0_11 = arith.constant 0 : index
    %11 = vector.load %arg3[%c11, %c0_11] : memref<24x256xf32, #tpu.memory_space<vmem>>, vector<1x128xf32>
    %c12 = arith.constant 12 : index
    %c0_12 = arith.constant 0 : index
    %12 = vector.load %arg3[%c12, %c0_12] : memref<24x256xf32, #tpu.memory_space<vmem>>, vector<1x128xf32>
    %c13 = arith.constant 13 : index
    %c0_13 = arith.constant 0 : index
    %13 = vector.load %arg3[%c13, %c0_13] : memref<24x256xf32, #tpu.memory_space<vmem>>, vector<1x128xf32>
    %c14 = arith.constant 14 : index
    %c0_14 = arith.constant 0 : index
    %14 = vector.load %arg3[%c14, %c0_14] : memref<24x256xf32, #tpu.memory_space<vmem>>, vector<1x128xf32>
    %c15 = arith.constant 15 : index
    %c0_15 = arith.constant 0 : index
    %15 = vector.load %arg3[%c15, %c0_15] : memref<24x256xf32, #tpu.memory_space<vmem>>, vector<1x256xf32>
    %c16 = arith.constant 16 : index
    %c0_16 = arith.constant 0 : index
    %16 = vector.load %arg3[%c16, %c0_16] : memref<24x256xf32, #tpu.memory_space<vmem>>, vector<1x128xf32>
    %c17 = arith.constant 17 : index
    %c0_17 = arith.constant 0 : index
    %17 = vector.load %arg3[%c17, %c0_17] : memref<24x256xf32, #tpu.memory_space<vmem>>, vector<1x128xf32>
    %18 = tpu.iota {dimensions = array<i32: 1>} : vector<1x128xi32>
    %c64_i32 = arith.constant 64 : i32
    %19 = vector.broadcast %c64_i32 : i32 to vector<1x128xi32>
    %20 = arith.cmpi slt, %18, %19 : vector<1x128xi32>
    %21 = arith.extui %20 : vector<1x128xi1> to vector<1x128xi32>
    %22 = arith.sitofp %21 : vector<1x128xi32> to vector<1x128xf32>
    %c0_18 = arith.constant 0 : index
    %c0_19 = arith.constant 0 : index
    %c0_20 = arith.constant 0 : index
    %23 = vector.load %arg1[%c0_18, %c0_19, %c0_20] : memref<2x16x128xf32, #tpu.memory_space<vmem>>, vector<2x16x128xf32>
    %24 = vector.shape_cast %23 : vector<2x16x128xf32> to vector<32x128xf32>
    %cst = arith.constant dense<0.000000e+00> : vector<32xf32>
    %25 = vector.multi_reduction <add>, %24, %cst [1] : vector<32x128xf32> to vector<32xf32>
    %26 = vector.shape_cast %25 : vector<32xf32> to vector<32x1xf32>
    %cst_21 = arith.constant 1.562500e-02 : f32
    %27 = vector.broadcast %cst_21 : f32 to vector<32x1xf32>
    %28 = arith.mulf %26, %27 : vector<32x1xf32>
    %29 = vector.broadcast %28 : vector<32x1xf32> to vector<32x128xf32>
    %30 = arith.subf %24, %29 : vector<32x128xf32>
    %31 = vector.broadcast %22 : vector<1x128xf32> to vector<32x128xf32>
    %32 = arith.mulf %30, %31 : vector<32x128xf32>
    %33 = arith.mulf %32, %32 : vector<32x128xf32>
    %cst_22 = arith.constant dense<0.000000e+00> : vector<32xf32>
    %34 = vector.multi_reduction <add>, %33, %cst_22 [1] : vector<32x128xf32> to vector<32xf32>
    %35 = vector.shape_cast %34 : vector<32xf32> to vector<32x1xf32>
    %cst_23 = arith.constant 1.562500e-02 : f32
    %36 = vector.broadcast %cst_23 : f32 to vector<32x1xf32>
    %37 = arith.mulf %35, %36 : vector<32x1xf32>
    %cst_24 = arith.constant 9.99999974E-6 : f32
    %38 = vector.broadcast %cst_24 : f32 to vector<32x1xf32>
    %39 = arith.addf %37, %38 : vector<32x1xf32>
    %40 = math.rsqrt %39 : vector<32x1xf32>
    %41 = vector.broadcast %40 : vector<32x1xf32> to vector<32x128xf32>
    %42 = arith.mulf %32, %41 : vector<32x128xf32>
    %43 = vector.broadcast %0 : vector<1x128xf32> to vector<32x128xf32>
    %44 = arith.mulf %42, %43 : vector<32x128xf32>
    %45 = vector.broadcast %1 : vector<1x128xf32> to vector<32x128xf32>
    %46 = arith.addf %44, %45 : vector<32x128xf32>
    %47 = arith.truncf %46 : vector<32x128xf32> to vector<32x128xbf16>
    %c0_25 = arith.constant 0 : index
    %c0_26 = arith.constant 0 : index
    %48 = vector.load %arg5[%c0_25, %c0_26] : memref<128x384xbf16, #tpu.memory_space<vmem>>, vector<128x256xbf16>
    %cst_27 = arith.constant dense<0.000000e+00> : vector<32x256xf32>
    %49 = tpu.matmul %47, %48, %cst_27 {dimension_numbers = #tpu.dot_dimension_numbers<[1], [0], [0], [1], [0, 0, 1, 1], [], []>} : vector<32x128xbf16>, vector<128x256xbf16>, vector<32x256xf32> -> vector<32x256xf32>
    %50 = vector.extract_strided_slice %49 {offsets = [0, 0], sizes = [32, 128], strides = [1, 1]} : vector<32x256xf32> to vector<32x128xf32>
    %51 = arith.truncf %50 : vector<32x128xf32> to vector<32x128xbf16>
    %52 = vector.shape_cast %51 : vector<32x128xbf16> to vector<2x16x128xbf16>
    %53 = vector.extract_strided_slice %49 {offsets = [0, 128], sizes = [32, 128], strides = [1, 1]} : vector<32x256xf32> to vector<32x128xf32>
    %54 = arith.truncf %53 : vector<32x128xf32> to vector<32x128xbf16>
    %55 = vector.shape_cast %54 : vector<32x128xbf16> to vector<2x16x128xbf16>
    %c0_28 = arith.constant 0 : index
    %c0_29 = arith.constant 0 : index
    %c0_30 = arith.constant 0 : index
    %56 = vector.load %arg2[%c0_28, %c0_29, %c0_30] : memref<2x8x128xf32, #tpu.memory_space<vmem>>, vector<2x8x128xf32>
    %57 = vector.shape_cast %56 : vector<2x8x128xf32> to vector<16x128xf32>
    %58 = math.exp %9 : vector<1x128xf32>
    %59 = vector.broadcast %58 : vector<1x128xf32> to vector<16x128xf32>
    %60 = arith.mulf %57, %59 : vector<16x128xf32>
    %61 = vector.broadcast %8 : vector<1x128xf32> to vector<16x128xf32>
    %62 = arith.addf %60, %61 : vector<16x128xf32>
    %cst_31 = arith.constant dense<0.000000e+00> : vector<16xf32>
    %63 = vector.multi_reduction <add>, %62, %cst_31 [1] : vector<16x128xf32> to vector<16xf32>
    %64 = vector.shape_cast %63 : vector<16xf32> to vector<16x1xf32>
    %cst_32 = arith.constant 1.280000e+02 : f32
    %65 = vector.broadcast %cst_32 : f32 to vector<16x1xf32>
    %66 = arith.divf %64, %65 : vector<16x1xf32>
    %67 = vector.broadcast %66 : vector<16x1xf32> to vector<16x128xf32>
    %68 = arith.subf %62, %67 : vector<16x128xf32>
    %69 = arith.mulf %68, %68 : vector<16x128xf32>
    %cst_33 = arith.constant dense<0.000000e+00> : vector<16xf32>
    %70 = vector.multi_reduction <add>, %69, %cst_33 [1] : vector<16x128xf32> to vector<16xf32>
    %71 = vector.shape_cast %70 : vector<16xf32> to vector<16x1xf32>
    %cst_34 = arith.constant 1.280000e+02 : f32
    %72 = vector.broadcast %cst_34 : f32 to vector<16x1xf32>
    %73 = arith.divf %71, %72 : vector<16x1xf32>
    %cst_35 = arith.constant 9.99999974E-6 : f32
    %74 = vector.broadcast %cst_35 : f32 to vector<16x1xf32>
    %75 = arith.addf %73, %74 : vector<16x1xf32>
    %76 = math.rsqrt %75 : vector<16x1xf32>
    %77 = vector.broadcast %76 : vector<16x1xf32> to vector<16x128xf32>
    %78 = arith.mulf %68, %77 : vector<16x128xf32>
    %79 = vector.broadcast %2 : vector<1x128xf32> to vector<16x128xf32>
    %80 = arith.mulf %78, %79 : vector<16x128xf32>
    %81 = vector.broadcast %3 : vector<1x128xf32> to vector<16x128xf32>
    %82 = arith.addf %80, %81 : vector<16x128xf32>
    %83 = arith.truncf %82 : vector<16x128xf32> to vector<16x128xbf16>
    %c0_36 = arith.constant 0 : index
    %c0_37 = arith.constant 0 : index
    %84 = vector.load %arg4[%c0_36, %c0_37] : memref<128x640xbf16, #tpu.memory_space<vmem>>, vector<128x128xbf16>
    %cst_38 = arith.constant dense<0.000000e+00> : vector<16x128xf32>
    %85 = tpu.matmul %83, %84, %cst_38 {dimension_numbers = #tpu.dot_dimension_numbers<[1], [0], [0], [1], [0, 0, 1, 1], [], []>} : vector<16x128xbf16>, vector<128x128xbf16>, vector<16x128xf32> -> vector<16x128xf32>
    %86 = arith.truncf %85 : vector<16x128xf32> to vector<16x128xbf16>
    %87 = vector.shape_cast %86 : vector<16x128xbf16> to vector<2x8x128xbf16>
    "tpu.trace_start"() <{level = 10 : i32, message = "bsk,bnk->bsn"}> : () -> ()
    %cst_39 = arith.constant dense<0.000000e+00> : vector<2x8x16xf32>
    %88 = tpu.matmul %87, %52, %cst_39 {dimension_numbers = #tpu.dot_dimension_numbers<[2], [2], [1], [1], [0, 0, 0, 1, 1, 1], [0], [0]>} : vector<2x8x128xbf16>, vector<2x16x128xbf16>, vector<2x8x16xf32> -> vector<2x8x16xf32>
    "tpu.trace_stop"() : () -> ()
    %cst_40 = arith.constant dense<0xFF800000> : vector<2x16xf32>
    %89 = vector.multi_reduction <maximumf>, %88, %cst_40 [1] : vector<2x8x16xf32> to vector<2x16xf32>
    %90 = vector.shape_cast %89 : vector<2x16xf32> to vector<2x1x16xf32>
    %91 = vector.broadcast %90 : vector<2x1x16xf32> to vector<2x8x16xf32>
    %92 = arith.subf %88, %91 : vector<2x8x16xf32>
    %93 = math.exp %92 : vector<2x8x16xf32>
    %cst_41 = arith.constant dense<0.000000e+00> : vector<2x16xf32>
    %94 = vector.multi_reduction <add>, %93, %cst_41 [1] : vector<2x8x16xf32> to vector<2x16xf32>
    %95 = vector.shape_cast %94 : vector<2x16xf32> to vector<2x1x16xf32>
    %96 = tpu.reciprocal %95 {approx = true} : vector<2x1x16xf32> -> vector<2x1x16xf32>
    %97 = vector.broadcast %96 : vector<2x1x16xf32> to vector<2x8x16xf32>
    %98 = arith.mulf %93, %97 : vector<2x8x16xf32>
    %cst_42 = arith.constant 9.99999993E-9 : f32
    %99 = vector.broadcast %cst_42 : f32 to vector<2x8x16xf32>
    %100 = arith.addf %98, %99 : vector<2x8x16xf32>
    %cst_43 = arith.constant dense<0.000000e+00> : vector<2x8xf32>
    %101 = vector.multi_reduction <add>, %100, %cst_43 [2] : vector<2x8x16xf32> to vector<2x8xf32>
    %102 = vector.shape_cast %101 : vector<2x8xf32> to vector<2x8x1xf32>
    %103 = tpu.reciprocal %102 {approx = true} : vector<2x8x1xf32> -> vector<2x8x1xf32>
    %104 = vector.broadcast %103 : vector<2x8x1xf32> to vector<2x8x16xf32>
    %105 = arith.mulf %100, %104 : vector<2x8x16xf32>
    %106 = arith.truncf %105 : vector<2x8x16xf32> to vector<2x8x16xbf16>
    "tpu.trace_start"() <{level = 10 : i32, message = "bsn,bnk->bsk"}> : () -> ()
    %cst_44 = arith.constant dense<0.000000e+00> : vector<2x8x128xf32>
    %107 = tpu.matmul %106, %55, %cst_44 {dimension_numbers = #tpu.dot_dimension_numbers<[2], [1], [1], [2], [0, 0, 0, 1, 1, 2], [0], [0]>} : vector<2x8x16xbf16>, vector<2x16x128xbf16>, vector<2x8x128xf32> -> vector<2x8x128xf32>
    "tpu.trace_stop"() : () -> ()
    %108 = vector.shape_cast %107 : vector<2x8x128xf32> to vector<16x128xf32>
    %109 = arith.truncf %108 : vector<16x128xf32> to vector<16x128xbf16>
    %110 = arith.truncf %62 : vector<16x128xf32> to vector<16x128xbf16>
    %111 = tpu.concatenate %109, %110 in 1 : vector<16x128xbf16>, vector<16x128xbf16> -> vector<16x256xbf16>
    %c0_45 = arith.constant 0 : index
    %c0_46 = arith.constant 0 : index
    %112 = vector.load %arg6[%c0_45, %c0_46] : memref<256x640xbf16, #tpu.memory_space<vmem>>, vector<256x512xbf16>
    %cst_47 = arith.constant dense<0.000000e+00> : vector<16x512xf32>
    %113 = tpu.matmul %111, %112, %cst_47 {dimension_numbers = #tpu.dot_dimension_numbers<[1], [0], [0], [1], [0, 0, 1, 1], [], []>} : vector<16x256xbf16>, vector<256x512xbf16>, vector<16x512xf32> -> vector<16x512xf32>
    %114 = vector.extract_strided_slice %113 {offsets = [0, 0], sizes = [16, 256], strides = [1, 1]} : vector<16x512xf32> to vector<16x256xf32>
    %115 = vector.broadcast %10 : vector<1x256xf32> to vector<16x256xf32>
    %116 = arith.addf %114, %115 : vector<16x256xf32>
    %117 = arith.negf %116 : vector<16x256xf32>
    %118 = math.exp %117 : vector<16x256xf32>
    %cst_48 = arith.constant 1.000000e+00 : f32
    %119 = vector.broadcast %cst_48 : f32 to vector<16x256xf32>
    %120 = arith.addf %119, %118 : vector<16x256xf32>
    %121 = arith.divf %119, %120 : vector<16x256xf32>
    %122 = vector.extract_strided_slice %121 {offsets = [0, 0], sizes = [16, 128], strides = [1, 1]} : vector<16x256xf32> to vector<16x128xf32>
    %123 = vector.extract_strided_slice %121 {offsets = [0, 128], sizes = [16, 128], strides = [1, 1]} : vector<16x256xf32> to vector<16x128xf32>
    %124 = vector.extract_strided_slice %113 {offsets = [0, 256], sizes = [16, 128], strides = [1, 1]} : vector<16x512xf32> to vector<16x128xf32>
    %125 = vector.broadcast %11 : vector<1x128xf32> to vector<16x128xf32>
    %126 = arith.addf %124, %125 : vector<16x128xf32>
    %127 = vector.extract_strided_slice %113 {offsets = [0, 384], sizes = [16, 128], strides = [1, 1]} : vector<16x512xf32> to vector<16x128xf32>
    %128 = vector.broadcast %12 : vector<1x128xf32> to vector<16x128xf32>
    %129 = arith.addf %127, %128 : vector<16x128xf32>
    %130 = arith.mulf %122, %129 : vector<16x128xf32>
    %131 = arith.addf %126, %130 : vector<16x128xf32>
    %132 = math.tanh %131 : vector<16x128xf32>
    %cst_49 = arith.constant 1.000000e+00 : f32
    %133 = vector.broadcast %cst_49 : f32 to vector<16x128xf32>
    %134 = arith.subf %133, %123 : vector<16x128xf32>
    %135 = arith.mulf %134, %132 : vector<16x128xf32>
    %136 = arith.mulf %123, %62 : vector<16x128xf32>
    %137 = arith.addf %135, %136 : vector<16x128xf32>
    %cst_50 = arith.constant dense<0.000000e+00> : vector<16xf32>
    %138 = vector.multi_reduction <add>, %137, %cst_50 [1] : vector<16x128xf32> to vector<16xf32>
    %139 = vector.shape_cast %138 : vector<16xf32> to vector<16x1xf32>
    %cst_51 = arith.constant 1.280000e+02 : f32
    %140 = vector.broadcast %cst_51 : f32 to vector<16x1xf32>
    %141 = arith.divf %139, %140 : vector<16x1xf32>
    %142 = vector.broadcast %141 : vector<16x1xf32> to vector<16x128xf32>
    %143 = arith.subf %137, %142 : vector<16x128xf32>
    %144 = arith.mulf %143, %143 : vector<16x128xf32>
    %cst_52 = arith.constant dense<0.000000e+00> : vector<16xf32>
    %145 = vector.multi_reduction <add>, %144, %cst_52 [1] : vector<16x128xf32> to vector<16xf32>
    %146 = vector.shape_cast %145 : vector<16xf32> to vector<16x1xf32>
    %cst_53 = arith.constant 1.280000e+02 : f32
    %147 = vector.broadcast %cst_53 : f32 to vector<16x1xf32>
    %148 = arith.divf %146, %147 : vector<16x1xf32>
    %cst_54 = arith.constant 9.99999974E-6 : f32
    %149 = vector.broadcast %cst_54 : f32 to vector<16x1xf32>
    %150 = arith.addf %148, %149 : vector<16x1xf32>
    %151 = math.rsqrt %150 : vector<16x1xf32>
    %152 = vector.broadcast %151 : vector<16x1xf32> to vector<16x128xf32>
    %153 = arith.mulf %143, %152 : vector<16x128xf32>
    %154 = vector.broadcast %4 : vector<1x128xf32> to vector<16x128xf32>
    %155 = arith.mulf %153, %154 : vector<16x128xf32>
    %156 = vector.broadcast %5 : vector<1x128xf32> to vector<16x128xf32>
    %157 = arith.addf %155, %156 : vector<16x128xf32>
    %158 = arith.truncf %157 : vector<16x128xf32> to vector<16x128xbf16>
    %c0_55 = arith.constant 0 : index
    %c128 = arith.constant 128 : index
    %159 = vector.load %arg4[%c0_55, %c128] : memref<128x640xbf16, #tpu.memory_space<vmem>>, vector<128x128xbf16>
    %cst_56 = arith.constant dense<0.000000e+00> : vector<16x128xf32>
    %160 = tpu.matmul %158, %159, %cst_56 {dimension_numbers = #tpu.dot_dimension_numbers<[1], [0], [0], [1], [0, 0, 1, 1], [], []>} : vector<16x128xbf16>, vector<128x128xbf16>, vector<16x128xf32> -> vector<16x128xf32>
    %161 = vector.broadcast %13 : vector<1x128xf32> to vector<16x128xf32>
    %162 = arith.addf %160, %161 : vector<16x128xf32>
    %cst_57 = arith.constant 0.000000e+00 : f32
    %163 = vector.broadcast %cst_57 : f32 to vector<16x128xf32>
    %164 = arith.maximumf %162, %163 : vector<16x128xf32>
    %165 = arith.truncf %164 : vector<16x128xf32> to vector<16x128xbf16>
    %c0_58 = arith.constant 0 : index
    %c256 = arith.constant 256 : index
    %166 = vector.load %arg4[%c0_58, %c256] : memref<128x640xbf16, #tpu.memory_space<vmem>>, vector<128x128xbf16>
    %cst_59 = arith.constant dense<0.000000e+00> : vector<16x128xf32>
    %167 = tpu.matmul %165, %166, %cst_59 {dimension_numbers = #tpu.dot_dimension_numbers<[1], [0], [0], [1], [0, 0, 1, 1], [], []>} : vector<16x128xbf16>, vector<128x128xbf16>, vector<16x128xf32> -> vector<16x128xf32>
    %168 = arith.addf %137, %167 : vector<16x128xf32>
    %169 = vector.broadcast %14 : vector<1x128xf32> to vector<16x128xf32>
    %170 = arith.addf %168, %169 : vector<16x128xf32>
    %cst_60 = arith.constant dense<0.000000e+00> : vector<16xf32>
    %171 = vector.multi_reduction <add>, %170, %cst_60 [1] : vector<16x128xf32> to vector<16xf32>
    %172 = vector.shape_cast %171 : vector<16xf32> to vector<16x1xf32>
    %cst_61 = arith.constant 1.280000e+02 : f32
    %173 = vector.broadcast %cst_61 : f32 to vector<16x1xf32>
    %174 = arith.divf %172, %173 : vector<16x1xf32>
    %175 = vector.broadcast %174 : vector<16x1xf32> to vector<16x128xf32>
    %176 = arith.subf %170, %175 : vector<16x128xf32>
    %177 = arith.mulf %176, %176 : vector<16x128xf32>
    %cst_62 = arith.constant dense<0.000000e+00> : vector<16xf32>
    %178 = vector.multi_reduction <add>, %177, %cst_62 [1] : vector<16x128xf32> to vector<16xf32>
    %179 = vector.shape_cast %178 : vector<16xf32> to vector<16x1xf32>
    %cst_63 = arith.constant 1.280000e+02 : f32
    %180 = vector.broadcast %cst_63 : f32 to vector<16x1xf32>
    %181 = arith.divf %179, %180 : vector<16x1xf32>
    %cst_64 = arith.constant 9.99999974E-6 : f32
    %182 = vector.broadcast %cst_64 : f32 to vector<16x1xf32>
    %183 = arith.addf %181, %182 : vector<16x1xf32>
    %184 = math.rsqrt %183 : vector<16x1xf32>
    %185 = vector.broadcast %184 : vector<16x1xf32> to vector<16x128xf32>
    %186 = arith.mulf %176, %185 : vector<16x128xf32>
    %187 = vector.broadcast %2 : vector<1x128xf32> to vector<16x128xf32>
    %188 = arith.mulf %186, %187 : vector<16x128xf32>
    %189 = vector.broadcast %3 : vector<1x128xf32> to vector<16x128xf32>
    %190 = arith.addf %188, %189 : vector<16x128xf32>
    %191 = arith.truncf %190 : vector<16x128xf32> to vector<16x128xbf16>
    %c0_65 = arith.constant 0 : index
    %c0_66 = arith.constant 0 : index
    %192 = vector.load %arg4[%c0_65, %c0_66] : memref<128x640xbf16, #tpu.memory_space<vmem>>, vector<128x128xbf16>
    %cst_67 = arith.constant dense<0.000000e+00> : vector<16x128xf32>
    %193 = tpu.matmul %191, %192, %cst_67 {dimension_numbers = #tpu.dot_dimension_numbers<[1], [0], [0], [1], [0, 0, 1, 1], [], []>} : vector<16x128xbf16>, vector<128x128xbf16>, vector<16x128xf32> -> vector<16x128xf32>
    %194 = arith.truncf %193 : vector<16x128xf32> to vector<16x128xbf16>
    %195 = vector.shape_cast %194 : vector<16x128xbf16> to vector<2x8x128xbf16>
    "tpu.trace_start"() <{level = 10 : i32, message = "bsk,bnk->bsn"}> : () -> ()
    %cst_68 = arith.constant dense<0.000000e+00> : vector<2x8x16xf32>
    %196 = tpu.matmul %195, %52, %cst_68 {dimension_numbers = #tpu.dot_dimension_numbers<[2], [2], [1], [1], [0, 0, 0, 1, 1, 1], [0], [0]>} : vector<2x8x128xbf16>, vector<2x16x128xbf16>, vector<2x8x16xf32> -> vector<2x8x16xf32>
    "tpu.trace_stop"() : () -> ()
    %cst_69 = arith.constant dense<0xFF800000> : vector<2x16xf32>
    %197 = vector.multi_reduction <maximumf>, %196, %cst_69 [1] : vector<2x8x16xf32> to vector<2x16xf32>
    %198 = vector.shape_cast %197 : vector<2x16xf32> to vector<2x1x16xf32>
    %199 = vector.broadcast %198 : vector<2x1x16xf32> to vector<2x8x16xf32>
    %200 = arith.subf %196, %199 : vector<2x8x16xf32>
    %201 = math.exp %200 : vector<2x8x16xf32>
    %cst_70 = arith.constant dense<0.000000e+00> : vector<2x16xf32>
    %202 = vector.multi_reduction <add>, %201, %cst_70 [1] : vector<2x8x16xf32> to vector<2x16xf32>
    %203 = vector.shape_cast %202 : vector<2x16xf32> to vector<2x1x16xf32>
    %204 = tpu.reciprocal %203 {approx = true} : vector<2x1x16xf32> -> vector<2x1x16xf32>
    %205 = vector.broadcast %204 : vector<2x1x16xf32> to vector<2x8x16xf32>
    %206 = arith.mulf %201, %205 : vector<2x8x16xf32>
    %cst_71 = arith.constant 9.99999993E-9 : f32
    %207 = vector.broadcast %cst_71 : f32 to vector<2x8x16xf32>
    %208 = arith.addf %206, %207 : vector<2x8x16xf32>
    %cst_72 = arith.constant dense<0.000000e+00> : vector<2x8xf32>
    %209 = vector.multi_reduction <add>, %208, %cst_72 [2] : vector<2x8x16xf32> to vector<2x8xf32>
    %210 = vector.shape_cast %209 : vector<2x8xf32> to vector<2x8x1xf32>
    %211 = tpu.reciprocal %210 {approx = true} : vector<2x8x1xf32> -> vector<2x8x1xf32>
    %212 = vector.broadcast %211 : vector<2x8x1xf32> to vector<2x8x16xf32>
    %213 = arith.mulf %208, %212 : vector<2x8x16xf32>
    %214 = arith.truncf %213 : vector<2x8x16xf32> to vector<2x8x16xbf16>
    "tpu.trace_start"() <{level = 10 : i32, message = "bsn,bnk->bsk"}> : () -> ()
    %cst_73 = arith.constant dense<0.000000e+00> : vector<2x8x128xf32>
    %215 = tpu.matmul %214, %55, %cst_73 {dimension_numbers = #tpu.dot_dimension_numbers<[2], [1], [1], [2], [0, 0, 0, 1, 1, 2], [0], [0]>} : vector<2x8x16xbf16>, vector<2x16x128xbf16>, vector<2x8x128xf32> -> vector<2x8x128xf32>
    "tpu.trace_stop"() : () -> ()
    %216 = vector.shape_cast %215 : vector<2x8x128xf32> to vector<16x128xf32>
    %217 = arith.truncf %216 : vector<16x128xf32> to vector<16x128xbf16>
    %218 = arith.truncf %170 : vector<16x128xf32> to vector<16x128xbf16>
    %219 = tpu.concatenate %217, %218 in 1 : vector<16x128xbf16>, vector<16x128xbf16> -> vector<16x256xbf16>
    %c0_74 = arith.constant 0 : index
    %c0_75 = arith.constant 0 : index
    %220 = vector.load %arg6[%c0_74, %c0_75] : memref<256x640xbf16, #tpu.memory_space<vmem>>, vector<256x512xbf16>
    %cst_76 = arith.constant dense<0.000000e+00> : vector<16x512xf32>
    %221 = tpu.matmul %219, %220, %cst_76 {dimension_numbers = #tpu.dot_dimension_numbers<[1], [0], [0], [1], [0, 0, 1, 1], [], []>} : vector<16x256xbf16>, vector<256x512xbf16>, vector<16x512xf32> -> vector<16x512xf32>
    %222 = vector.extract_strided_slice %221 {offsets = [0, 0], sizes = [16, 256], strides = [1, 1]} : vector<16x512xf32> to vector<16x256xf32>
    %223 = vector.broadcast %10 : vector<1x256xf32> to vector<16x256xf32>
    %224 = arith.addf %222, %223 : vector<16x256xf32>
    %225 = arith.negf %224 : vector<16x256xf32>
    %226 = math.exp %225 : vector<16x256xf32>
    %cst_77 = arith.constant 1.000000e+00 : f32
    %227 = vector.broadcast %cst_77 : f32 to vector<16x256xf32>
    %228 = arith.addf %227, %226 : vector<16x256xf32>
    %229 = arith.divf %227, %228 : vector<16x256xf32>
    %230 = vector.extract_strided_slice %229 {offsets = [0, 0], sizes = [16, 128], strides = [1, 1]} : vector<16x256xf32> to vector<16x128xf32>
    %231 = vector.extract_strided_slice %229 {offsets = [0, 128], sizes = [16, 128], strides = [1, 1]} : vector<16x256xf32> to vector<16x128xf32>
    %232 = vector.extract_strided_slice %221 {offsets = [0, 256], sizes = [16, 128], strides = [1, 1]} : vector<16x512xf32> to vector<16x128xf32>
    %233 = vector.broadcast %11 : vector<1x128xf32> to vector<16x128xf32>
    %234 = arith.addf %232, %233 : vector<16x128xf32>
    %235 = vector.extract_strided_slice %221 {offsets = [0, 384], sizes = [16, 128], strides = [1, 1]} : vector<16x512xf32> to vector<16x128xf32>
    %236 = vector.broadcast %12 : vector<1x128xf32> to vector<16x128xf32>
    %237 = arith.addf %235, %236 : vector<16x128xf32>
    %238 = arith.mulf %230, %237 : vector<16x128xf32>
    %239 = arith.addf %234, %238 : vector<16x128xf32>
    %240 = math.tanh %239 : vector<16x128xf32>
    %cst_78 = arith.constant 1.000000e+00 : f32
    %241 = vector.broadcast %cst_78 : f32 to vector<16x128xf32>
    %242 = arith.subf %241, %231 : vector<16x128xf32>
    %243 = arith.mulf %242, %240 : vector<16x128xf32>
    %244 = arith.mulf %231, %170 : vector<16x128xf32>
    %245 = arith.addf %243, %244 : vector<16x128xf32>
    %cst_79 = arith.constant dense<0.000000e+00> : vector<16xf32>
    %246 = vector.multi_reduction <add>, %245, %cst_79 [1] : vector<16x128xf32> to vector<16xf32>
    %247 = vector.shape_cast %246 : vector<16xf32> to vector<16x1xf32>
    %cst_80 = arith.constant 1.280000e+02 : f32
    %248 = vector.broadcast %cst_80 : f32 to vector<16x1xf32>
    %249 = arith.divf %247, %248 : vector<16x1xf32>
    %250 = vector.broadcast %249 : vector<16x1xf32> to vector<16x128xf32>
    %251 = arith.subf %245, %250 : vector<16x128xf32>
    %252 = arith.mulf %251, %251 : vector<16x128xf32>
    %cst_81 = arith.constant dense<0.000000e+00> : vector<16xf32>
    %253 = vector.multi_reduction <add>, %252, %cst_81 [1] : vector<16x128xf32> to vector<16xf32>
    %254 = vector.shape_cast %253 : vector<16xf32> to vector<16x1xf32>
    %cst_82 = arith.constant 1.280000e+02 : f32
    %255 = vector.broadcast %cst_82 : f32 to vector<16x1xf32>
    %256 = arith.divf %254, %255 : vector<16x1xf32>
    %cst_83 = arith.constant 9.99999974E-6 : f32
    %257 = vector.broadcast %cst_83 : f32 to vector<16x1xf32>
    %258 = arith.addf %256, %257 : vector<16x1xf32>
    %259 = math.rsqrt %258 : vector<16x1xf32>
    %260 = vector.broadcast %259 : vector<16x1xf32> to vector<16x128xf32>
    %261 = arith.mulf %251, %260 : vector<16x128xf32>
    %262 = vector.broadcast %4 : vector<1x128xf32> to vector<16x128xf32>
    %263 = arith.mulf %261, %262 : vector<16x128xf32>
    %264 = vector.broadcast %5 : vector<1x128xf32> to vector<16x128xf32>
    %265 = arith.addf %263, %264 : vector<16x128xf32>
    %266 = arith.truncf %265 : vector<16x128xf32> to vector<16x128xbf16>
    %c0_84 = arith.constant 0 : index
    %c128_85 = arith.constant 128 : index
    %267 = vector.load %arg4[%c0_84, %c128_85] : memref<128x640xbf16, #tpu.memory_space<vmem>>, vector<128x128xbf16>
    %cst_86 = arith.constant dense<0.000000e+00> : vector<16x128xf32>
    %268 = tpu.matmul %266, %267, %cst_86 {dimension_numbers = #tpu.dot_dimension_numbers<[1], [0], [0], [1], [0, 0, 1, 1], [], []>} : vector<16x128xbf16>, vector<128x128xbf16>, vector<16x128xf32> -> vector<16x128xf32>
    %269 = vector.broadcast %13 : vector<1x128xf32> to vector<16x128xf32>
    %270 = arith.addf %268, %269 : vector<16x128xf32>
    %cst_87 = arith.constant 0.000000e+00 : f32
    %271 = vector.broadcast %cst_87 : f32 to vector<16x128xf32>
    %272 = arith.maximumf %270, %271 : vector<16x128xf32>
    %273 = arith.truncf %272 : vector<16x128xf32> to vector<16x128xbf16>
    %c0_88 = arith.constant 0 : index
    %c256_89 = arith.constant 256 : index
    %274 = vector.load %arg4[%c0_88, %c256_89] : memref<128x640xbf16, #tpu.memory_space<vmem>>, vector<128x128xbf16>
    %cst_90 = arith.constant dense<0.000000e+00> : vector<16x128xf32>
    %275 = tpu.matmul %273, %274, %cst_90 {dimension_numbers = #tpu.dot_dimension_numbers<[1], [0], [0], [1], [0, 0, 1, 1], [], []>} : vector<16x128xbf16>, vector<128x128xbf16>, vector<16x128xf32> -> vector<16x128xf32>
    %276 = arith.addf %245, %275 : vector<16x128xf32>
    %277 = vector.broadcast %14 : vector<1x128xf32> to vector<16x128xf32>
    %278 = arith.addf %276, %277 : vector<16x128xf32>
    %cst_91 = arith.constant dense<0.000000e+00> : vector<16xf32>
    %279 = vector.multi_reduction <add>, %278, %cst_91 [1] : vector<16x128xf32> to vector<16xf32>
    %280 = vector.shape_cast %279 : vector<16xf32> to vector<16x1xf32>
    %cst_92 = arith.constant 1.280000e+02 : f32
    %281 = vector.broadcast %cst_92 : f32 to vector<16x1xf32>
    %282 = arith.divf %280, %281 : vector<16x1xf32>
    %283 = vector.broadcast %282 : vector<16x1xf32> to vector<16x128xf32>
    %284 = arith.subf %278, %283 : vector<16x128xf32>
    %285 = arith.mulf %284, %284 : vector<16x128xf32>
    %cst_93 = arith.constant dense<0.000000e+00> : vector<16xf32>
    %286 = vector.multi_reduction <add>, %285, %cst_93 [1] : vector<16x128xf32> to vector<16xf32>
    %287 = vector.shape_cast %286 : vector<16xf32> to vector<16x1xf32>
    %cst_94 = arith.constant 1.280000e+02 : f32
    %288 = vector.broadcast %cst_94 : f32 to vector<16x1xf32>
    %289 = arith.divf %287, %288 : vector<16x1xf32>
    %cst_95 = arith.constant 9.99999974E-6 : f32
    %290 = vector.broadcast %cst_95 : f32 to vector<16x1xf32>
    %291 = arith.addf %289, %290 : vector<16x1xf32>
    %292 = math.rsqrt %291 : vector<16x1xf32>
    %293 = vector.broadcast %292 : vector<16x1xf32> to vector<16x128xf32>
    %294 = arith.mulf %284, %293 : vector<16x128xf32>
    %295 = vector.broadcast %2 : vector<1x128xf32> to vector<16x128xf32>
    %296 = arith.mulf %294, %295 : vector<16x128xf32>
    %297 = vector.broadcast %3 : vector<1x128xf32> to vector<16x128xf32>
    %298 = arith.addf %296, %297 : vector<16x128xf32>
    %299 = arith.truncf %298 : vector<16x128xf32> to vector<16x128xbf16>
    %c0_96 = arith.constant 0 : index
    %c0_97 = arith.constant 0 : index
    %300 = vector.load %arg4[%c0_96, %c0_97] : memref<128x640xbf16, #tpu.memory_space<vmem>>, vector<128x128xbf16>
    %cst_98 = arith.constant dense<0.000000e+00> : vector<16x128xf32>
    %301 = tpu.matmul %299, %300, %cst_98 {dimension_numbers = #tpu.dot_dimension_numbers<[1], [0], [0], [1], [0, 0, 1, 1], [], []>} : vector<16x128xbf16>, vector<128x128xbf16>, vector<16x128xf32> -> vector<16x128xf32>
    %302 = arith.truncf %301 : vector<16x128xf32> to vector<16x128xbf16>
    %303 = vector.shape_cast %302 : vector<16x128xbf16> to vector<2x8x128xbf16>
    "tpu.trace_start"() <{level = 10 : i32, message = "bsk,bnk->bsn"}> : () -> ()
    %cst_99 = arith.constant dense<0.000000e+00> : vector<2x8x16xf32>
    %304 = tpu.matmul %303, %52, %cst_99 {dimension_numbers = #tpu.dot_dimension_numbers<[2], [2], [1], [1], [0, 0, 0, 1, 1, 1], [0], [0]>} : vector<2x8x128xbf16>, vector<2x16x128xbf16>, vector<2x8x16xf32> -> vector<2x8x16xf32>
    "tpu.trace_stop"() : () -> ()
    %cst_100 = arith.constant dense<0xFF800000> : vector<2x16xf32>
    %305 = vector.multi_reduction <maximumf>, %304, %cst_100 [1] : vector<2x8x16xf32> to vector<2x16xf32>
    %306 = vector.shape_cast %305 : vector<2x16xf32> to vector<2x1x16xf32>
    %307 = vector.broadcast %306 : vector<2x1x16xf32> to vector<2x8x16xf32>
    %308 = arith.subf %304, %307 : vector<2x8x16xf32>
    %309 = math.exp %308 : vector<2x8x16xf32>
    %cst_101 = arith.constant dense<0.000000e+00> : vector<2x16xf32>
    %310 = vector.multi_reduction <add>, %309, %cst_101 [1] : vector<2x8x16xf32> to vector<2x16xf32>
    %311 = vector.shape_cast %310 : vector<2x16xf32> to vector<2x1x16xf32>
    %312 = tpu.reciprocal %311 {approx = true} : vector<2x1x16xf32> -> vector<2x1x16xf32>
    %313 = vector.broadcast %312 : vector<2x1x16xf32> to vector<2x8x16xf32>
    %314 = arith.mulf %309, %313 : vector<2x8x16xf32>
    %cst_102 = arith.constant 9.99999993E-9 : f32
    %315 = vector.broadcast %cst_102 : f32 to vector<2x8x16xf32>
    %316 = arith.addf %314, %315 : vector<2x8x16xf32>
    %cst_103 = arith.constant dense<0.000000e+00> : vector<2x8xf32>
    %317 = vector.multi_reduction <add>, %316, %cst_103 [2] : vector<2x8x16xf32> to vector<2x8xf32>
    %318 = vector.shape_cast %317 : vector<2x8xf32> to vector<2x8x1xf32>
    %319 = tpu.reciprocal %318 {approx = true} : vector<2x8x1xf32> -> vector<2x8x1xf32>
    %320 = vector.broadcast %319 : vector<2x8x1xf32> to vector<2x8x16xf32>
    %321 = arith.mulf %316, %320 : vector<2x8x16xf32>
    %322 = arith.truncf %321 : vector<2x8x16xf32> to vector<2x8x16xbf16>
    "tpu.trace_start"() <{level = 10 : i32, message = "bsn,bnk->bsk"}> : () -> ()
    %cst_104 = arith.constant dense<0.000000e+00> : vector<2x8x128xf32>
    %323 = tpu.matmul %322, %55, %cst_104 {dimension_numbers = #tpu.dot_dimension_numbers<[2], [1], [1], [2], [0, 0, 0, 1, 1, 2], [0], [0]>} : vector<2x8x16xbf16>, vector<2x16x128xbf16>, vector<2x8x128xf32> -> vector<2x8x128xf32>
    "tpu.trace_stop"() : () -> ()
    %324 = vector.shape_cast %323 : vector<2x8x128xf32> to vector<16x128xf32>
    %325 = arith.truncf %324 : vector<16x128xf32> to vector<16x128xbf16>
    %326 = arith.truncf %278 : vector<16x128xf32> to vector<16x128xbf16>
    %327 = tpu.concatenate %325, %326 in 1 : vector<16x128xbf16>, vector<16x128xbf16> -> vector<16x256xbf16>
    %c0_105 = arith.constant 0 : index
    %c0_106 = arith.constant 0 : index
    %328 = vector.load %arg6[%c0_105, %c0_106] : memref<256x640xbf16, #tpu.memory_space<vmem>>, vector<256x512xbf16>
    %cst_107 = arith.constant dense<0.000000e+00> : vector<16x512xf32>
    %329 = tpu.matmul %327, %328, %cst_107 {dimension_numbers = #tpu.dot_dimension_numbers<[1], [0], [0], [1], [0, 0, 1, 1], [], []>} : vector<16x256xbf16>, vector<256x512xbf16>, vector<16x512xf32> -> vector<16x512xf32>
    %330 = vector.extract_strided_slice %329 {offsets = [0, 0], sizes = [16, 256], strides = [1, 1]} : vector<16x512xf32> to vector<16x256xf32>
    %331 = vector.broadcast %10 : vector<1x256xf32> to vector<16x256xf32>
    %332 = arith.addf %330, %331 : vector<16x256xf32>
    %333 = arith.negf %332 : vector<16x256xf32>
    %334 = math.exp %333 : vector<16x256xf32>
    %cst_108 = arith.constant 1.000000e+00 : f32
    %335 = vector.broadcast %cst_108 : f32 to vector<16x256xf32>
    %336 = arith.addf %335, %334 : vector<16x256xf32>
    %337 = arith.divf %335, %336 : vector<16x256xf32>
    %338 = vector.extract_strided_slice %337 {offsets = [0, 0], sizes = [16, 128], strides = [1, 1]} : vector<16x256xf32> to vector<16x128xf32>
    %339 = vector.extract_strided_slice %337 {offsets = [0, 128], sizes = [16, 128], strides = [1, 1]} : vector<16x256xf32> to vector<16x128xf32>
    %340 = vector.extract_strided_slice %329 {offsets = [0, 256], sizes = [16, 128], strides = [1, 1]} : vector<16x512xf32> to vector<16x128xf32>
    %341 = vector.broadcast %11 : vector<1x128xf32> to vector<16x128xf32>
    %342 = arith.addf %340, %341 : vector<16x128xf32>
    %343 = vector.extract_strided_slice %329 {offsets = [0, 384], sizes = [16, 128], strides = [1, 1]} : vector<16x512xf32> to vector<16x128xf32>
    %344 = vector.broadcast %12 : vector<1x128xf32> to vector<16x128xf32>
    %345 = arith.addf %343, %344 : vector<16x128xf32>
    %346 = arith.mulf %338, %345 : vector<16x128xf32>
    %347 = arith.addf %342, %346 : vector<16x128xf32>
    %348 = math.tanh %347 : vector<16x128xf32>
    %cst_109 = arith.constant 1.000000e+00 : f32
    %349 = vector.broadcast %cst_109 : f32 to vector<16x128xf32>
    %350 = arith.subf %349, %339 : vector<16x128xf32>
    %351 = arith.mulf %350, %348 : vector<16x128xf32>
    %352 = arith.mulf %339, %278 : vector<16x128xf32>
    %353 = arith.addf %351, %352 : vector<16x128xf32>
    %cst_110 = arith.constant dense<0.000000e+00> : vector<16xf32>
    %354 = vector.multi_reduction <add>, %353, %cst_110 [1] : vector<16x128xf32> to vector<16xf32>
    %355 = vector.shape_cast %354 : vector<16xf32> to vector<16x1xf32>
    %cst_111 = arith.constant 1.280000e+02 : f32
    %356 = vector.broadcast %cst_111 : f32 to vector<16x1xf32>
    %357 = arith.divf %355, %356 : vector<16x1xf32>
    %358 = vector.broadcast %357 : vector<16x1xf32> to vector<16x128xf32>
    %359 = arith.subf %353, %358 : vector<16x128xf32>
    %360 = arith.mulf %359, %359 : vector<16x128xf32>
    %cst_112 = arith.constant dense<0.000000e+00> : vector<16xf32>
    %361 = vector.multi_reduction <add>, %360, %cst_112 [1] : vector<16x128xf32> to vector<16xf32>
    %362 = vector.shape_cast %361 : vector<16xf32> to vector<16x1xf32>
    %cst_113 = arith.constant 1.280000e+02 : f32
    %363 = vector.broadcast %cst_113 : f32 to vector<16x1xf32>
    %364 = arith.divf %362, %363 : vector<16x1xf32>
    %cst_114 = arith.constant 9.99999974E-6 : f32
    %365 = vector.broadcast %cst_114 : f32 to vector<16x1xf32>
    %366 = arith.addf %364, %365 : vector<16x1xf32>
    %367 = math.rsqrt %366 : vector<16x1xf32>
    %368 = vector.broadcast %367 : vector<16x1xf32> to vector<16x128xf32>
    %369 = arith.mulf %359, %368 : vector<16x128xf32>
    %370 = vector.broadcast %4 : vector<1x128xf32> to vector<16x128xf32>
    %371 = arith.mulf %369, %370 : vector<16x128xf32>
    %372 = vector.broadcast %5 : vector<1x128xf32> to vector<16x128xf32>
    %373 = arith.addf %371, %372 : vector<16x128xf32>
    %374 = arith.truncf %373 : vector<16x128xf32> to vector<16x128xbf16>
    %c0_115 = arith.constant 0 : index
    %c128_116 = arith.constant 128 : index
    %375 = vector.load %arg4[%c0_115, %c128_116] : memref<128x640xbf16, #tpu.memory_space<vmem>>, vector<128x128xbf16>
    %cst_117 = arith.constant dense<0.000000e+00> : vector<16x128xf32>
    %376 = tpu.matmul %374, %375, %cst_117 {dimension_numbers = #tpu.dot_dimension_numbers<[1], [0], [0], [1], [0, 0, 1, 1], [], []>} : vector<16x128xbf16>, vector<128x128xbf16>, vector<16x128xf32> -> vector<16x128xf32>
    %377 = vector.broadcast %13 : vector<1x128xf32> to vector<16x128xf32>
    %378 = arith.addf %376, %377 : vector<16x128xf32>
    %cst_118 = arith.constant 0.000000e+00 : f32
    %379 = vector.broadcast %cst_118 : f32 to vector<16x128xf32>
    %380 = arith.maximumf %378, %379 : vector<16x128xf32>
    %381 = arith.truncf %380 : vector<16x128xf32> to vector<16x128xbf16>
    %c0_119 = arith.constant 0 : index
    %c256_120 = arith.constant 256 : index
    %382 = vector.load %arg4[%c0_119, %c256_120] : memref<128x640xbf16, #tpu.memory_space<vmem>>, vector<128x128xbf16>
    %cst_121 = arith.constant dense<0.000000e+00> : vector<16x128xf32>
    %383 = tpu.matmul %381, %382, %cst_121 {dimension_numbers = #tpu.dot_dimension_numbers<[1], [0], [0], [1], [0, 0, 1, 1], [], []>} : vector<16x128xbf16>, vector<128x128xbf16>, vector<16x128xf32> -> vector<16x128xf32>
    %384 = arith.addf %353, %383 : vector<16x128xf32>
    %385 = vector.broadcast %14 : vector<1x128xf32> to vector<16x128xf32>
    %386 = arith.addf %384, %385 : vector<16x128xf32>
    %387 = vector.shape_cast %386 : vector<16x128xf32> to vector<2x8x128xf32>
    %c0_122 = arith.constant 0 : index
    %c0_123 = arith.constant 0 : index
    %c0_124 = arith.constant 0 : index
    %388 = vector.load %arg7[%c0_122, %c0_123, %c0_124] : memref<2x8x128xf32, #tpu.memory_space<vmem>>, vector<2x8x128xf32>
    tpu.vector_store %arg7[%c0_122, %c0_123, %c0_124], %387 {strides = array<i32>} : memref<2x8x128xf32, #tpu.memory_space<vmem>>, vector<2x8x128xf32>,
    %c0_125 = arith.constant 0 : index
    %c0_126 = arith.constant 0 : index
    %c0_127 = arith.constant 0 : index
    %389 = vector.load %arg8[%c0_125, %c0_126, %c0_127] : memref<2x8x16xf32, #tpu.memory_space<vmem>>, vector<2x8x16xf32>
    tpu.vector_store %arg8[%c0_125, %c0_126, %c0_127], %314 {strides = array<i32>} : memref<2x8x16xf32, #tpu.memory_space<vmem>>, vector<2x8x16xf32>,
    %cst_128 = arith.constant dense<0.000000e+00> : vector<16xf32>
    %390 = vector.multi_reduction <add>, %386, %cst_128 [1] : vector<16x128xf32> to vector<16xf32>
    %391 = vector.shape_cast %390 : vector<16xf32> to vector<16x1xf32>
    %cst_129 = arith.constant 1.280000e+02 : f32
    %392 = vector.broadcast %cst_129 : f32 to vector<16x1xf32>
    %393 = arith.divf %391, %392 : vector<16x1xf32>
    %394 = vector.broadcast %393 : vector<16x1xf32> to vector<16x128xf32>
    %395 = arith.subf %386, %394 : vector<16x128xf32>
    %396 = arith.mulf %395, %395 : vector<16x128xf32>
    %cst_130 = arith.constant dense<0.000000e+00> : vector<16xf32>
    %397 = vector.multi_reduction <add>, %396, %cst_130 [1] : vector<16x128xf32> to vector<16xf32>
    %398 = vector.shape_cast %397 : vector<16xf32> to vector<16x1xf32>
    %cst_131 = arith.constant 1.280000e+02 : f32
    %399 = vector.broadcast %cst_131 : f32 to vector<16x1xf32>
    %400 = arith.divf %398, %399 : vector<16x1xf32>
    %cst_132 = arith.constant 9.99999974E-6 : f32
    %401 = vector.broadcast %cst_132 : f32 to vector<16x1xf32>
    %402 = arith.addf %400, %401 : vector<16x1xf32>
    %403 = math.rsqrt %402 : vector<16x1xf32>
    %404 = vector.broadcast %403 : vector<16x1xf32> to vector<16x128xf32>
    %405 = arith.mulf %395, %404 : vector<16x128xf32>
    %406 = vector.broadcast %6 : vector<1x128xf32> to vector<16x128xf32>
    %407 = arith.mulf %405, %406 : vector<16x128xf32>
    %408 = vector.broadcast %7 : vector<1x128xf32> to vector<16x128xf32>
    %409 = arith.addf %407, %408 : vector<16x128xf32>
    %410 = arith.truncf %409 : vector<16x128xf32> to vector<16x128xbf16>
    %c0_133 = arith.constant 0 : index
    %c384 = arith.constant 384 : index
    %411 = vector.load %arg4[%c0_133, %c384] : memref<128x640xbf16, #tpu.memory_space<vmem>>, vector<128x256xbf16>
    %cst_134 = arith.constant dense<0.000000e+00> : vector<16x256xf32>
    %412 = tpu.matmul %410, %411, %cst_134 {dimension_numbers = #tpu.dot_dimension_numbers<[1], [0], [0], [1], [0, 0, 1, 1], [], []>} : vector<16x128xbf16>, vector<128x256xbf16>, vector<16x256xf32> -> vector<16x256xf32>
    %413 = vector.broadcast %15 : vector<1x256xf32> to vector<16x256xf32>
    %414 = arith.addf %412, %413 : vector<16x256xf32>
    %cst_135 = arith.constant 0.000000e+00 : f32
    %415 = vector.broadcast %cst_135 : f32 to vector<16x256xf32>
    %416 = arith.maximumf %414, %415 : vector<16x256xf32>
    %417 = arith.truncf %416 : vector<16x256xf32> to vector<16x256xbf16>
    %c0_136 = arith.constant 0 : index
    %c512 = arith.constant 512 : index
    %418 = vector.load %arg6[%c0_136, %c512] : memref<256x640xbf16, #tpu.memory_space<vmem>>, vector<256x128xbf16>
    %cst_137 = arith.constant dense<0.000000e+00> : vector<16x128xf32>
    %419 = tpu.matmul %417, %418, %cst_137 {dimension_numbers = #tpu.dot_dimension_numbers<[1], [0], [0], [1], [0, 0, 1, 1], [], []>} : vector<16x256xbf16>, vector<256x128xbf16>, vector<16x128xf32> -> vector<16x128xf32>
    %420 = vector.broadcast %16 : vector<1x128xf32> to vector<16x128xf32>
    %421 = arith.addf %419, %420 : vector<16x128xf32>
    %cst_138 = arith.constant 0.000000e+00 : f32
    %422 = vector.broadcast %cst_138 : f32 to vector<16x128xf32>
    %423 = arith.maximumf %421, %422 : vector<16x128xf32>
    %424 = arith.truncf %423 : vector<16x128xf32> to vector<16x128xbf16>
    %c0_139 = arith.constant 0 : index
    %c256_140 = arith.constant 256 : index
    %425 = vector.load %arg5[%c0_139, %c256_140] : memref<128x384xbf16, #tpu.memory_space<vmem>>, vector<128x128xbf16>
    %cst_141 = arith.constant dense<0.000000e+00> : vector<16x128xf32>
    %426 = tpu.matmul %424, %425, %cst_141 {dimension_numbers = #tpu.dot_dimension_numbers<[1], [0], [0], [1], [0, 0, 1, 1], [], []>} : vector<16x128xbf16>, vector<128x128xbf16>, vector<16x128xf32> -> vector<16x128xf32>
    %427 = vector.broadcast %17 : vector<1x128xf32> to vector<16x128xf32>
    %428 = arith.addf %426, %427 : vector<16x128xf32>
    %429 = arith.truncf %428 : vector<16x128xf32> to vector<16x128xbf16>
    %430 = vector.shape_cast %429 : vector<16x128xbf16> to vector<2x8x128xbf16>
    %431 = tpu.transpose %314, [0, 2, 1] : vector<2x8x16xf32> -> vector<2x16x8xf32>
    %432 = arith.truncf %431 : vector<2x16x8xf32> to vector<2x16x8xbf16>
    "tpu.trace_start"() <{level = 10 : i32, message = "bns,bse->bne"}> : () -> ()
    %cst_142 = arith.constant dense<0.000000e+00> : vector<2x16x128xf32>
    %433 = tpu.matmul %432, %430, %cst_142 {dimension_numbers = #tpu.dot_dimension_numbers<[2], [1], [1], [2], [0, 0, 0, 1, 1, 2], [0], [0]>} : vector<2x16x8xbf16>, vector<2x8x128xbf16>, vector<2x16x128xf32> -> vector<2x16x128xf32>
    "tpu.trace_stop"() : () -> ()
    %c0_143 = arith.constant 0 : index
    %c0_144 = arith.constant 0 : index
    %c0_145 = arith.constant 0 : index
    %434 = vector.load %arg1[%c0_143, %c0_144, %c0_145] : memref<2x16x128xf32, #tpu.memory_space<vmem>>, vector<2x16x128xf32>
    %435 = arith.subf %433, %434 : vector<2x16x128xf32>
    %436 = arith.mulf %435, %435 : vector<2x16x128xf32>
    %437 = vector.shape_cast %436 : vector<2x16x128xf32> to vector<32x128xf32>
    %cst_146 = arith.constant dense<0.000000e+00> : vector<32xf32>
    %438 = vector.multi_reduction <add>, %437, %cst_146 [1] : vector<32x128xf32> to vector<32xf32>
    %439 = vector.shape_cast %438 : vector<32xf32> to vector<32x1xf32>
    %cst_147 = arith.constant dense<0.000000e+00> : vector<1xf32>
    %440 = vector.multi_reduction <add>, %439, %cst_147 [0] : vector<32x1xf32> to vector<1xf32>
    %441 = vector.shape_cast %440 : vector<1xf32> to vector<1x1xf32>
    %c0_148 = arith.constant 0 : index
    %c0_149 = arith.constant 0 : index
    %c0_150 = arith.constant 0 : index
    %442 = vector.load %arg9[%c0_148, %c0_149, %c0_150] : memref<1x1x1xf32, #tpu.memory_space<vmem>>, vector<1x1x1xf32>
    %443 = vector.shape_cast %442 : vector<1x1x1xf32> to vector<1x1xf32>
    %444 = vector.shape_cast %441 : vector<1x1xf32> to vector<1x1x1xf32>
    tpu.vector_store %arg9[%c0_148, %c0_149, %c0_150], %444 {strides = array<i32>} : memref<1x1x1xf32, #tpu.memory_space<vmem>>, vector<1x1x1xf32>,
    return
  }
  func.func @transform_0(%arg0: i32) -> (i32, i32, i32) {
    %c0_i32 = arith.constant 0 : i32
    %c0_i32_0 = arith.constant 0 : i32
    %c0_i32_1 = arith.constant 0 : i32
    return %arg0, %c0_i32, %c0_i32_0 : i32, i32, i32
  }
  func.func @transform_1(%arg0: i32) -> (i32, i32, i32) {
    %c0_i32 = arith.constant 0 : i32
    %c0_i32_0 = arith.constant 0 : i32
    %c0_i32_1 = arith.constant 0 : i32
    return %arg0, %c0_i32, %c0_i32_0 : i32, i32, i32
  }
  func.func @transform_2(%arg0: i32) -> (i32, i32) {
    %c0_i32 = arith.constant 0 : i32
    %c0_i32_0 = arith.constant 0 : i32
    %c0_i32_1 = arith.constant 0 : i32
    return %c0_i32, %c0_i32_0 : i32, i32
  }
  func.func @transform_3(%arg0: i32) -> (i32, i32) {
    %c0_i32 = arith.constant 0 : i32
    %c0_i32_0 = arith.constant 0 : i32
    %c0_i32_1 = arith.constant 0 : i32
    return %c0_i32, %c0_i32_0 : i32, i32
  }
  func.func @transform_4(%arg0: i32) -> (i32, i32) {
    %c0_i32 = arith.constant 0 : i32
    %c0_i32_0 = arith.constant 0 : i32
    %c0_i32_1 = arith.constant 0 : i32
    return %c0_i32, %c0_i32_0 : i32, i32
  }
  func.func @transform_5(%arg0: i32) -> (i32, i32) {
    %c0_i32 = arith.constant 0 : i32
    %c0_i32_0 = arith.constant 0 : i32
    %c0_i32_1 = arith.constant 0 : i32
    return %c0_i32, %c0_i32_0 : i32, i32
  }
  func.func @transform_6(%arg0: i32) -> (i32, i32, i32) {
    %c0_i32 = arith.constant 0 : i32
    %c0_i32_0 = arith.constant 0 : i32
    %c0_i32_1 = arith.constant 0 : i32
    return %arg0, %c0_i32, %c0_i32_0 : i32, i32, i32
  }
  func.func @transform_7(%arg0: i32) -> (i32, i32, i32) {
    %c0_i32 = arith.constant 0 : i32
    %c0_i32_0 = arith.constant 0 : i32
    %c0_i32_1 = arith.constant 0 : i32
    return %arg0, %c0_i32, %c0_i32_0 : i32, i32, i32
  }
  func.func @transform_8(%arg0: i32) -> (i32, i32, i32) {
    %c0_i32 = arith.constant 0 : i32
    %c0_i32_0 = arith.constant 0 : i32
    %c0_i32_1 = arith.constant 0 : i32
    return %arg0, %c0_i32, %c0_i32_0 : i32, i32, i32
  }
}

</mosaic_0001>

<llo_original>
// kernel: tpu_custom_call.1
$region0: #{tpu_custom_call.1}
  #allocation0 [shape = 'u32[]', space=smem, size = 0x4, offset = 0x4, fixed_abs, tag = 'smem constant byte address 0x4 - core index']
  #allocation1 [shape = 'u32[144,128]{1,0:T(1,128)}', space=vmem, size = 0x12000, scoped, tag = 'internal scratch']
  %s0 = inlined_call_operand.hbm [shape: f32[2,16,128], index: 0, kind: input, shape index: {}]
  %s1 = inlined_call_operand.hbm [shape: f32[2,8,128], index: 1, kind: input, shape index: {}]
  %s2 = inlined_call_operand.hbm [shape: f32[24,256], index: 2, kind: input, shape index: {}]
  %s3 = inlined_call_operand.hbm [shape: bf16[128,640], index: 3, kind: input, shape index: {}]
  %s4 = inlined_call_operand.hbm [shape: bf16[128,384], index: 4, kind: input, shape index: {}]
  %s5 = inlined_call_operand.hbm [shape: bf16[256,640], index: 5, kind: input, shape index: {}]
  %s6 = inlined_call_operand.hbm [shape: f32[2,8,128], index: 6, kind: output, shape index: {0}]
  %s7 = inlined_call_operand.hbm [shape: f32[2,8,16], index: 7, kind: output, shape index: {1}]
  %s8 = inlined_call_operand.hbm [shape: f32[1,1,1], index: 8, kind: output, shape index: {2}]
  %9 = xla_tuple %s6, %s7, %s8
  %s10 = sld [smem:[#allocation0]]
  $region74: #{tpu_custom_call.1} parent=0
    _
  %s12 = ssub.s32 1, %s10
  %s13 = scalar_select 0, %s12, %s10
  $region1: #{tpu_custom_call.1} parent=0
    #allocation2 [shape = 'u8[16384]{0}', space=vmem, size = 0x4000, scoped, tag = 'input window, operand 0, single buffered']
    #allocation3 [shape = 's32[1]{0}', space=sflag, size = 0x4, scoped, tag = 'scoped memory for tpu_custom_call.1']
    #allocation4 [shape = 's32[1]{0}', space=sflag, size = 0x4, scoped, tag = 'scoped memory for tpu_custom_call.1']
    #allocation5 [shape = 'u8[8192]{0}', space=vmem, size = 0x2000, scoped, tag = 'input window, operand 1, single buffered']
    #allocation6 [shape = 's32[1]{0}', space=sflag, size = 0x4, scoped, tag = 'scoped memory for tpu_custom_call.1']
    #allocation7 [shape = 'u8[24576]{0}', space=vmem, size = 0x6000, scoped, tag = 'input window, operand 2, single buffered']
    #allocation8 [shape = 'u8[163840]{0}', space=vmem, size = 0x28000, scoped, tag = 'input window, operand 3, single buffered']
    #allocation9 [shape = 's32[1]{0}', space=sflag, size = 0x4, scoped, tag = 'scoped memory for tpu_custom_call.1']
    #allocation10 [shape = 'u8[98304]{0}', space=vmem, size = 0x18000, scoped, tag = 'input window, operand 4, single buffered']
    #allocation11 [shape = 'u8[327680]{0}', space=vmem, size = 0x50000, scoped, tag = 'input window, operand 5, single buffered']
    #allocation12 [shape = 's32[1]{0}', space=sflag, size = 0x4, scoped, tag = 'scoped memory for tpu_custom_call.1']
    #allocation13 [shape = 'u8[8192]{0}', space=vmem, size = 0x2000, scoped, tag = 'output window, operand 0, single buffered']
    #allocation14 [shape = 'u8[8192]{0}', space=vmem, size = 0x2000, scoped, tag = 'output window, operand 1, single buffered']
    #allocation15 [shape = 's32[1]{0}', space=sflag, size = 0x4, scoped, tag = 'scoped memory for tpu_custom_call.1']
    #allocation16 [shape = 'u8[512]{0}', space=vmem, size = 0x400, scoped, tag = 'output window, operand 2, single buffered']
    %14 = vsyncpa [#allocation3], 0
    %15 = vsyncpa [#allocation6], 0
    %16 = vsyncpa [#allocation9], 0
    %17 = vsyncpa [#allocation12], 0
    %18 = vsyncpa [#allocation4], 0
    %19 = vsyncpa [#allocation15], 0
    // Predicated region
    $region2: #{tpu_custom_call.1} parent=1 // pred_check
      _
    $region3: #{tpu_custom_call.1} parent=1 // pred_check_branch
      %21 = sbr.rel (0) target = $region5
    $region4: #{tpu_custom_call.1} parent=1 // pred_region
      %s23 = ssub.s32 512, 512
      %24 = vsyncadd [#allocation3], %s23
      %s25 = sshll.u32 [#allocation2], 4
      %s26 = int_to_ptr.vmem [resolvable:$true] %s25
      %31 = dma.hbm_to_vmem [thread:$0]  %s0, 512, %s26, [#allocation3], 128, 128, 8
    $region5: #{tpu_custom_call.1} parent=1 // pred_fallthru
      _
    // Predicated region
    $region6: #{tpu_custom_call.1} parent=1 // pred_check
      _
    $region7: #{tpu_custom_call.1} parent=1 // pred_check_branch
      %33 = sbr.rel (0) target = $region9
    $region8: #{tpu_custom_call.1} parent=1 // pred_region
      %s35 = ssub.s32 256, 256
      %36 = vsyncadd [#allocation6], %s35
      %s37 = sshll.u32 [#allocation5], 4
      %s38 = int_to_ptr.vmem [resolvable:$true] %s37
      %43 = dma.hbm_to_vmem [thread:$0]  %s1, 256, %s38, [#allocation6], 128, 128, 8
    $region9: #{tpu_custom_call.1} parent=1 // pred_fallthru
      _
    // Predicated region
    $region10: #{tpu_custom_call.1} parent=1 // pred_check
      _
    $region11: #{tpu_custom_call.1} parent=1 // pred_check_branch
      %45 = sbr.rel (0) target = $region13
    $region12: #{tpu_custom_call.1} parent=1 // pred_region
      %s47 = ssub.s32 768, 768
      %48 = vsyncadd [#allocation6], %s47
      %s49 = sshll.u32 [#allocation7], 4
      %s50 = int_to_ptr.vmem [resolvable:$true] %s49
      %55 = dma.hbm_to_vmem [thread:$0]  %s2, 768, %s50, [#allocation6], 256, 256, 16
    $region13: #{tpu_custom_call.1} parent=1 // pred_fallthru
      _
    // Predicated region
    $region14: #{tpu_custom_call.1} parent=1 // pred_check
      _
    $region15: #{tpu_custom_call.1} parent=1 // pred_check_branch
      %57 = sbr.rel (0) target = $region17
    $region16: #{tpu_custom_call.1} parent=1 // pred_region
      %s59 = ssub.s32 5120, 5120
      %60 = vsyncadd [#allocation9], %s59
      %s61 = sshll.u32 [#allocation8], 4
      %s62 = int_to_ptr.vmem [resolvable:$true] %s61
      %67 = dma.hbm_to_vmem [thread:$0]  %s3, 5120, %s62, [#allocation9], 320, 320, 20
    $region17: #{tpu_custom_call.1} parent=1 // pred_fallthru
      _
    // Predicated region
    $region18: #{tpu_custom_call.1} parent=1 // pred_check
      _
    $region19: #{tpu_custom_call.1} parent=1 // pred_check_branch
      %69 = sbr.rel (0) target = $region21
    $region20: #{tpu_custom_call.1} parent=1 // pred_region
      %s71 = ssub.s32 3072, 3072
      %72 = vsyncadd [#allocation9], %s71
      %s73 = sshll.u32 [#allocation10], 4
      %s74 = int_to_ptr.vmem [resolvable:$true] %s73
      %79 = dma.hbm_to_vmem [thread:$0]  %s4, 3072, %s74, [#allocation9], 192, 192, 12
    $region21: #{tpu_custom_call.1} parent=1 // pred_fallthru
      _
    // Predicated region
    $region22: #{tpu_custom_call.1} parent=1 // pred_check
      _
    $region23: #{tpu_custom_call.1} parent=1 // pred_check_branch
      %81 = sbr.rel (0) target = $region25
    $region24: #{tpu_custom_call.1} parent=1 // pred_region
      %s83 = ssub.s32 10240, 10240
      %84 = vsyncadd [#allocation12], %s83
      %s85 = sshll.u32 [#allocation11], 4
      %s86 = int_to_ptr.vmem [resolvable:$true] %s85
      %91 = dma.hbm_to_vmem [thread:$0]  %s5, 10240, %s86, [#allocation12], 320, 320, 20
    $region25: #{tpu_custom_call.1} parent=1 // pred_fallthru
      _
    // Predicated region
    $region26: #{tpu_custom_call.1} parent=1 // pred_check
      _
    $region27: #{tpu_custom_call.1} parent=1 // pred_check_branch
      %93 = sbr.rel (0) target = $region29
    $region28: #{tpu_custom_call.1} parent=1 // pred_region
      %94 = dma.done [#allocation3], 512
    $region29: #{tpu_custom_call.1} parent=1 // pred_fallthru
      _
    // Predicated region
    $region30: #{tpu_custom_call.1} parent=1 // pred_check
      _
    $region31: #{tpu_custom_call.1} parent=1 // pred_check_branch
      %96 = sbr.rel (0) target = $region33
    $region32: #{tpu_custom_call.1} parent=1 // pred_region
      %97 = dma.done [#allocation6], 256
    $region33: #{tpu_custom_call.1} parent=1 // pred_fallthru
      _
    // Predicated region
    $region34: #{tpu_custom_call.1} parent=1 // pred_check
      _
    $region35: #{tpu_custom_call.1} parent=1 // pred_check_branch
      %99 = sbr.rel (0) target = $region37
    $region36: #{tpu_custom_call.1} parent=1 // pred_region
      %100 = dma.done [#allocation6], 768
    $region37: #{tpu_custom_call.1} parent=1 // pred_fallthru
      _
    // Predicated region
    $region38: #{tpu_custom_call.1} parent=1 // pred_check
      _
    $region39: #{tpu_custom_call.1} parent=1 // pred_check_branch
      %102 = sbr.rel (0) target = $region41
    $region40: #{tpu_custom_call.1} parent=1 // pred_region
      %103 = dma.done [#allocation9], 5120
    $region41: #{tpu_custom_call.1} parent=1 // pred_fallthru
      _
    // Predicated region
    $region42: #{tpu_custom_call.1} parent=1 // pred_check
      _
    $region43: #{tpu_custom_call.1} parent=1 // pred_check_branch
      %105 = sbr.rel (0) target = $region45
    $region44: #{tpu_custom_call.1} parent=1 // pred_region
      %106 = dma.done [#allocation9], 3072
    $region45: #{tpu_custom_call.1} parent=1 // pred_fallthru
      _
    // Predicated region
    $region46: #{tpu_custom_call.1} parent=1 // pred_check
      _
    $region47: #{tpu_custom_call.1} parent=1 // pred_check_branch
      %108 = sbr.rel (0) target = $region49
    $region48: #{tpu_custom_call.1} parent=1 // pred_region
      %109 = dma.done [#allocation12], 10240
    $region49: #{tpu_custom_call.1} parent=1 // pred_fallthru
      _
    %v111 = vld [vmem:[#allocation7] ss:$0 sm:$0xff]
    %v112 = vld [vmem:[#allocation7 + $0x1] ss:$0 sm:$0xff]
    %v113 = vld [vmem:[#allocation7 + $0x2] ss:$0 sm:$0xff]
    %v114 = vld [vmem:[#allocation7 + $0x3] ss:$0 sm:$0xff]
    %v115 = vld [vmem:[#allocation7 + $0x4] ss:$0 sm:$0xff]
    %v116 = vld [vmem:[#allocation7 + $0x5] ss:$0 sm:$0xff]
    %v117 = vld [vmem:[#allocation7 + $0x6] ss:$0 sm:$0xff]
    %v118 = vld [vmem:[#allocation7 + $0x7] ss:$0 sm:$0xff]
    %v119 = vld [vmem:[#allocation7 + $0x10] ss:$0 sm:$0xff]
    %v120 = vld [vmem:[#allocation7 + $0x11] ss:$0 sm:$0xff]
    %s121 = scalar_lea.vmem [#allocation7], 18
    %v122 = vld [vmem:[%s121] ss:$8 sm:$0x3]
    %v123 = vld [vmem:[#allocation7 + $0x13] ss:$0 sm:$0xff]
    %v124 = vld [vmem:[#allocation7 + $0x14] ss:$0 sm:$0xff]
    %v125 = vld [vmem:[#allocation7 + $0x15] ss:$0 sm:$0xff]
    %v126 = vld [vmem:[#allocation7 + $0x16] ss:$0 sm:$0xff]
    %s127 = scalar_lea.vmem [#allocation7], 23
    %v128 = vld [vmem:[%s127] ss:$8 sm:$0x3]
    %v129 = vld [vmem:[#allocation7 + $0x20] ss:$0 sm:$0xff]
    %v130 = vld [vmem:[#allocation7 + $0x21] ss:$0 sm:$0xff]
    %v131 = vlaneseq
    %v132 = vand.u32 %v131, 127
    %vm133 = vcmp.lt.s32.totalorder %v132, 64
    %v134 = vsel %vm133, 1, 0
    %v135 = vcvt.s32.f32 %v134
    %v136 = vld [vmem:[#allocation2] sm:$0xff]
    %v137 = vld [vmem:[#allocation2 + $0x8] sm:$0xff]
    %v138 = vld [vmem:[#allocation2 + $0x10] sm:$0xff]
    %v139 = vld [vmem:[#allocation2 + $0x18] sm:$0xff]
    %140 = vadd.xlane.f32.xlu0 %v136
    %v141 = vpop.xlane.xlu0 %140
    %142 = vadd.xlane.f32.xlu0 %v137
    %v143 = vpop.xlane.xlu0 %142
    %144 = vadd.xlane.f32.xlu0 %v138
    %v145 = vpop.xlane.xlu0 %144
    %146 = vadd.xlane.f32.xlu0 %v139
    %v147 = vpop.xlane.xlu0 %146
    %v148 = vmul.f32 %v141, 0.015625
    %v149 = vmul.f32 %v143, 0.015625
    %v150 = vmul.f32 %v145, 0.015625
    %v151 = vmul.f32 %v147, 0.015625
    %v152 = vsub.f32 %v136, %v148
    %v153 = vsub.f32 %v137, %v149
    %v154 = vsub.f32 %v138, %v150
    %v155 = vsub.f32 %v139, %v151
    %v156 = vmul.f32 %v152, %v135
    %v157 = vmul.f32 %v153, %v135
    %v158 = vmul.f32 %v154, %v135
    %v159 = vmul.f32 %v155, %v135
    %v160 = vmul.f32 %v156, %v156
    %v161 = vmul.f32 %v157, %v157
    %v162 = vmul.f32 %v158, %v158
    %v163 = vmul.f32 %v159, %v159
    %164 = vadd.xlane.f32.xlu0 %v160
    %v165 = vpop.xlane.xlu0 %164
    %166 = vadd.xlane.f32.xlu0 %v161
    %v167 = vpop.xlane.xlu0 %166
    %168 = vadd.xlane.f32.xlu0 %v162
    %v169 = vpop.xlane.xlu0 %168
    %170 = vadd.xlane.f32.xlu0 %v163
    %v171 = vpop.xlane.xlu0 %170
    %v172 = vmul.f32 %v165, 0.015625
    %v173 = vmul.f32 %v167, 0.015625
    %v174 = vmul.f32 %v169, 0.015625
    %v175 = vmul.f32 %v171, 0.015625
    %v176 = vadd.f32 %v172, 1e-05
    %v177 = vadd.f32 %v173, 1e-05
    %v178 = vadd.f32 %v174, 1e-05
    %v179 = vadd.f32 %v175, 1e-05
    %v180 = vrsqrt.pop %v176
    %v181 = vrsqrt.pop %v177
    %v182 = vrsqrt.pop %v178
    %v183 = vrsqrt.pop %v179
    %v184 = vmul.f32 %v156, %v180
    %v185 = vmul.f32 %v157, %v181
    %v186 = vmul.f32 %v158, %v182
    %v187 = vmul.f32 %v159, %v183
    %v188 = vmul.f32 %v184, %v111
    %v189 = vmul.f32 %v185, %v111
    %v190 = vmul.f32 %v186, %v111
    %v191 = vmul.f32 %v187, %v111
    %v192 = vadd.f32 %v188, %v112
    %v193 = vadd.f32 %v189, %v112
    %v194 = vadd.f32 %v190, %v112
    %v195 = vadd.f32 %v191, %v112
    %v196 = vpack.c.bf16 %v193, %v192
    %v197 = vpack.c.bf16 %v195, %v194
    %v198 = vld [vmem:[#allocation10] sm:$0xff]
    %v199 = vld [vmem:[#allocation10 + $0xc] sm:$0xff]
    %v200 = vld [vmem:[#allocation10 + $0x18] sm:$0xff]
    %v201 = vld [vmem:[#allocation10 + $0x24] sm:$0xff]
    %v202 = vld [vmem:[#allocation10 + $0x30] sm:$0xff]
    %v203 = vld [vmem:[#allocation10 + $0x3c] sm:$0xff]
    %v204 = vld [vmem:[#allocation10 + $0x48] sm:$0xff]
    %v205 = vld [vmem:[#allocation10 + $0x54] sm:$0xff]
    %v206 = vld [vmem:[#allocation10 + $0x60] sm:$0xff]
    %v207 = vld [vmem:[#allocation10 + $0x6c] sm:$0xff]
    %v208 = vld [vmem:[#allocation10 + $0x78] sm:$0xff]
    %v209 = vld [vmem:[#allocation10 + $0x84] sm:$0xff]
    %v210 = vld [vmem:[#allocation10 + $0x90] sm:$0xff]
    %v211 = vld [vmem:[#allocation10 + $0x9c] sm:$0xff]
    %v212 = vld [vmem:[#allocation10 + $0xa8] sm:$0xff]
    %v213 = vld [vmem:[#allocation10 + $0xb4] sm:$0xff]
    %v230 = vunpack.c.l.b16 %v198
    %v231 = vunpack.c.h.b16 %v198
    %v232 = vunpack.c.l.b16 %v199
    %v233 = vunpack.c.h.b16 %v199
    %v234 = vunpack.c.l.b16 %v200
    %v235 = vunpack.c.h.b16 %v200
    %v236 = vunpack.c.l.b16 %v201
    %v237 = vunpack.c.h.b16 %v201
    %v238 = vunpack.c.l.b16 %v202
    %v239 = vunpack.c.h.b16 %v202
    %v240 = vunpack.c.l.b16 %v203
    %v241 = vunpack.c.h.b16 %v203
    %v242 = vunpack.c.l.b16 %v204
    %v243 = vunpack.c.h.b16 %v204
    %v244 = vunpack.c.l.b16 %v205
    %v245 = vunpack.c.h.b16 %v205
    %v246 = vunpack.c.l.b16 %v206
    %v247 = vunpack.c.h.b16 %v206
    %v248 = vunpack.c.l.b16 %v207
    %v249 = vunpack.c.h.b16 %v207
    %v250 = vunpack.c.l.b16 %v208
    %v251 = vunpack.c.h.b16 %v208
    %v252 = vunpack.c.l.b16 %v209
    %v253 = vunpack.c.h.b16 %v209
    %v254 = vunpack.c.l.b16 %v210
    %v255 = vunpack.c.h.b16 %v210
    %v256 = vunpack.c.l.b16 %v211
    %v257 = vunpack.c.h.b16 %v211
    %v258 = vunpack.c.l.b16 %v212
    %v259 = vunpack.c.h.b16 %v212
    %v260 = vunpack.c.l.b16 %v213
    %v261 = vunpack.c.h.b16 %v213
    %v262 = vpack.c.b16 %v232, %v230
    %v263 = vpack.c.b16 %v233, %v231
    %v264 = vpack.c.b16 %v236, %v234
    %v265 = vpack.c.b16 %v237, %v235
    %v266 = vpack.c.b16 %v240, %v238
    %v267 = vpack.c.b16 %v241, %v239
    %v268 = vpack.c.b16 %v244, %v242
    %v269 = vpack.c.b16 %v245, %v243
    %v270 = vpack.c.b16 %v248, %v246
    %v271 = vpack.c.b16 %v249, %v247
    %v272 = vpack.c.b16 %v252, %v250
    %v273 = vpack.c.b16 %v253, %v251
    %v274 = vpack.c.b16 %v256, %v254
    %v275 = vpack.c.b16 %v257, %v255
    %v276 = vpack.c.b16 %v260, %v258
    %v277 = vpack.c.b16 %v261, %v259
    %294 = vmatprep.subr.bf16.mxu0 %v263
    %295 = vmatpush1.bf16.msra.mxu0 %v262
    %296 = vmatprep.subr.bf16.mxu0 %v265
    %297 = vmatpush1.bf16.msra.mxu0 %v264
    %298 = vmatprep.subr.bf16.mxu0 %v267
    %299 = vmatpush1.bf16.msra.mxu0 %v266
    %300 = vmatprep.subr.bf16.mxu0 %v269
    %301 = vmatpush1.bf16.msra.mxu0 %v268
    %302 = vmatprep.subr.bf16.mxu0 %v271
    %303 = vmatpush1.bf16.msra.mxu0 %v270
    %304 = vmatprep.subr.bf16.mxu0 %v273
    %305 = vmatpush1.bf16.msra.mxu0 %v272
    %306 = vmatprep.subr.bf16.mxu0 %v275
    %307 = vmatpush1.bf16.msra.mxu0 %v274
    %308 = vmatprep.subr.bf16.mxu0 %v277
    %309 = vmatpush1.bf16.msra.mxu0 %v276
    %310 = vmatprep.subr.bf16.mxu0 0
    %311 = vmatpush1.bf16.msra.mxu0 0
    %312 = vmatprep.subr.bf16.mxu0 0
    %313 = vmatpush1.bf16.msra.mxu0 0
    %314 = vmatprep.subr.bf16.mxu0 0
    %315 = vmatpush1.bf16.msra.mxu0 0
    %316 = vmatprep.subr.bf16.mxu0 0
    %317 = vmatpush1.bf16.msra.mxu0 0
    %318 = vmatprep.subr.bf16.mxu0 0
    %319 = vmatpush1.bf16.msra.mxu0 0
    %320 = vmatprep.subr.bf16.mxu0 0
    %321 = vmatpush1.bf16.msra.mxu0 0
    %322 = vmatprep.subr.bf16.mxu0 0
    %323 = vmatpush1.bf16.msra.mxu0 0
    %324 = vmatprep.subr.bf16.mxu0 0
    %325 = vmatpush1.bf16.msra.mxu0 0
    %326 = vmatprep.mubr.bf16.mxu0 0
    %327 = vmatmul.mubr.bf16.gmra.mrb[0].mxu0 %v196
    %v328 = vpop.f32.mrb[0].mxu0
    %v329 = vadd.f32 0.0, %v328
    %v330 = vpop.f32.mrb[0].mxu0
    %v331 = vadd.f32 0.0, %v330
    %v332 = vpop.f32.mrb[0].mxu0
    %v333 = vadd.f32 0.0, %v332
    %v334 = vpop.f32.mrb[0].mxu0
    %v335 = vadd.f32 0.0, %v334
    %336 = vmatprep.mubr.bf16.mxu0 0
    %337 = vmatmul.mubr.bf16.gmra.mrb[0].mxu0 %v197
    %v338 = vpop.f32.mrb[0].mxu0
    %v339 = vadd.f32 0.0, %v338
    %v340 = vpop.f32.mrb[0].mxu0
    %v341 = vadd.f32 0.0, %v340
    %v342 = vpop.f32.mrb[0].mxu0
    %v343 = vadd.f32 0.0, %v342
    %v344 = vpop.f32.mrb[0].mxu0
    %v345 = vadd.f32 0.0, %v344
    %346 = vdwg.mxu0
    %v347 = vpack.c.bf16 %v333, %v329
    %v348 = vpack.c.bf16 %v343, %v339
    %v349 = vpack.c.bf16 %v335, %v331
    %v350 = vpack.c.bf16 %v345, %v341
    %v351 = vld [vmem:[#allocation5] sm:$0xff]
    %v352 = vld [vmem:[#allocation5 + $0x8] sm:$0xff]
    %v353 = vmul.f32 %v120, 1.442695
    %v354 = vpow.pop %v353
    %v355 = vmul.f32 %v351, %v354
    %v356 = vmul.f32 %v352, %v354
    %v357 = vadd.f32 %v355, %v119
    %v358 = vadd.f32 %v356, %v119
    %359 = vadd.xlane.f32.xlu0 %v357
    %v360 = vpop.xlane.xlu0 %359
    %361 = vadd.xlane.f32.xlu0 %v358
    %v362 = vpop.xlane.xlu0 %361
    %v363 = vrcp.pop 128.0
    %v364 = vmul.f32 %v360, %v363
    %v365 = vmul.f32 %v362, %v363
    %v366 = vsub.f32 %v357, %v364
    %v367 = vsub.f32 %v358, %v365
    %v368 = vmul.f32 %v366, %v366
    %v369 = vmul.f32 %v367, %v367
    %370 = vadd.xlane.f32.xlu0 %v368
    %v371 = vpop.xlane.xlu0 %370
    %372 = vadd.xlane.f32.xlu0 %v369
    %v373 = vpop.xlane.xlu0 %372
    %v374 = vmul.f32 %v371, %v363
    %v375 = vmul.f32 %v373, %v363
    %v376 = vadd.f32 %v374, 1e-05
    %v377 = vadd.f32 %v375, 1e-05
    %v378 = vrsqrt.pop %v376
    %v379 = vrsqrt.pop %v377
    %v380 = vmul.f32 %v366, %v378
    %v381 = vmul.f32 %v367, %v379
    %v382 = vmul.f32 %v380, %v113
    %v383 = vmul.f32 %v381, %v113
    %v384 = vadd.f32 %v382, %v114
    %v385 = vadd.f32 %v383, %v114
    %v386 = vpack.c.bf16 %v385, %v384
    %v387 = vld [vmem:[#allocation8] sm:$0xf]
    %v388 = vld [vmem:[#allocation8 + $0x14] sm:$0xf]
    %v389 = vld [vmem:[#allocation8 + $0x28] sm:$0xf]
    %v390 = vld [vmem:[#allocation8 + $0x3c] sm:$0xf]
    %v391 = vld [vmem:[#allocation8 + $0x50] sm:$0xf]
    %v392 = vld [vmem:[#allocation8 + $0x64] sm:$0xf]
    %v393 = vld [vmem:[#allocation8 + $0x78] sm:$0xf]
    %v394 = vld [vmem:[#allocation8 + $0x8c] sm:$0xf]
    %v395 = vld [vmem:[#allocation8 + $0xa0] sm:$0xf]
    %v396 = vld [vmem:[#allocation8 + $0xb4] sm:$0xf]
    %v397 = vld [vmem:[#allocation8 + $0xc8] sm:$0xf]
    %v398 = vld [vmem:[#allocation8 + $0xdc] sm:$0xf]
    %v399 = vld [vmem:[#allocation8 + $0xf0] sm:$0xf]
    %v400 = vld [vmem:[#allocation8 + $0x104] sm:$0xf]
    %v401 = vld [vmem:[#allocation8 + $0x118] sm:$0xf]
    %v402 = vld [vmem:[#allocation8 + $0x12c] sm:$0xf]
    %v419 = vunpack.c.l.b16 %v387
    %v420 = vunpack.c.l.b16 %v388
    %v421 = vunpack.c.l.b16 %v389
    %v422 = vunpack.c.l.b16 %v390
    %v423 = vunpack.c.l.b16 %v391
    %v424 = vunpack.c.l.b16 %v392
    %v425 = vunpack.c.l.b16 %v393
    %v426 = vunpack.c.l.b16 %v394
    %v427 = vunpack.c.l.b16 %v395
    %v428 = vunpack.c.l.b16 %v396
    %v429 = vunpack.c.l.b16 %v397
    %v430 = vunpack.c.l.b16 %v398
    %v431 = vunpack.c.l.b16 %v399
    %v432 = vunpack.c.l.b16 %v400
    %v433 = vunpack.c.l.b16 %v401
    %v434 = vunpack.c.l.b16 %v402
    %v435 = vpack.c.b16 %v420, %v419
    %v436 = vpack.c.b16 %v422, %v421
    %v437 = vpack.c.b16 %v424, %v423
    %v438 = vpack.c.b16 %v426, %v425
    %v439 = vpack.c.b16 %v428, %v427
    %v440 = vpack.c.b16 %v430, %v429
    %v441 = vpack.c.b16 %v432, %v431
    %v442 = vpack.c.b16 %v434, %v433
    %451 = vmatprep.subr.bf16.mxu0 0
    %452 = vmatpush1.bf16.msra.mxu0 %v435
    %453 = vmatprep.subr.bf16.mxu0 0
    %454 = vmatpush1.bf16.msra.mxu0 %v436
    %455 = vmatprep.subr.bf16.mxu0 0
    %456 = vmatpush1.bf16.msra.mxu0 %v437
    %457 = vmatprep.subr.bf16.mxu0 0
    %458 = vmatpush1.bf16.msra.mxu0 %v438
    %459 = vmatprep.subr.bf16.mxu0 0
    %460 = vmatpush1.bf16.msra.mxu0 %v439
    %461 = vmatprep.subr.bf16.mxu0 0
    %462 = vmatpush1.bf16.msra.mxu0 %v440
    %463 = vmatprep.subr.bf16.mxu0 0
    %464 = vmatpush1.bf16.msra.mxu0 %v441
    %465 = vmatprep.subr.bf16.mxu0 0
    %466 = vmatpush1.bf16.msra.mxu0 %v442
    %467 = vmatprep.subr.bf16.mxu0 0
    %468 = vmatpush1.bf16.msra.mxu0 0
    %469 = vmatprep.subr.bf16.mxu0 0
    %470 = vmatpush1.bf16.msra.mxu0 0
    %471 = vmatprep.subr.bf16.mxu0 0
    %472 = vmatpush1.bf16.msra.mxu0 0
    %473 = vmatprep.subr.bf16.mxu0 0
    %474 = vmatpush1.bf16.msra.mxu0 0
    %475 = vmatprep.subr.bf16.mxu0 0
    %476 = vmatpush1.bf16.msra.mxu0 0
    %477 = vmatprep.subr.bf16.mxu0 0
    %478 = vmatpush1.bf16.msra.mxu0 0
    %479 = vmatprep.subr.bf16.mxu0 0
    %480 = vmatpush1.bf16.msra.mxu0 0
    %481 = vmatprep.subr.bf16.mxu0 0
    %482 = vmatpush1.bf16.msra.mxu0 0
    %483 = vmatprep.mubr.bf16.mxu0 0
    %484 = vmatmul.mubr.bf16.gmra.mrb[0].mxu0 %v386
    %v485 = vpop.f32.mrb[0].mxu0
    %v486 = vadd.f32 0.0, %v485
    %v487 = vpop.f32.mrb[0].mxu0
    %v488 = vpop.f32.mrb[0].mxu0
    %v489 = vadd.f32 0.0, %v488
    %v490 = vpop.f32.mrb[0].mxu0
    %491 = vdwg.mxu0
    %v492 = vpack.c.bf16 %v489, %v486
    %v494 = vunpack.c.l.b16 %v492
    %v495 = vunpack.c.h.b16 %v492
    %v496 = vpack.c.b16 %v494, %v494
    %v497 = vpack.c.b16 %v495, %v495
    %500 = vmatprep.subr.bf16.mxu0 0
    %501 = vmatpush1.bf16.xpose.msra.mxu0 %v347
    %502 = vmatprep.subr.bf16.mxu0 0
    %503 = vmatpush1.bf16.xpose.msra.mxu0 0
    %504 = vmatprep.subr.bf16.mxu0 0
    %505 = vmatpush1.bf16.xpose.msra.mxu0 0
    %506 = vmatprep.subr.bf16.mxu0 0
    %507 = vmatpush1.bf16.xpose.msra.mxu0 0
    %508 = vmatprep.subr.bf16.mxu0 0
    %509 = vmatpush1.bf16.xpose.msra.mxu0 0
    %510 = vmatprep.subr.bf16.mxu0 0
    %511 = vmatpush1.bf16.xpose.msra.mxu0 0
    %512 = vmatprep.subr.bf16.mxu0 0
    %513 = vmatpush1.bf16.xpose.msra.mxu0 0
    %514 = vmatprep.subr.bf16.mxu0 0
    %515 = vmatpush1.bf16.xpose.msra.mxu0 0
    %516 = vmatprep.subr.bf16.mxu0 0
    %517 = vmatpush1.bf16.xpose.msra.mxu0 0
    %518 = vmatprep.subr.bf16.mxu0 0
    %519 = vmatpush1.bf16.xpose.msra.mxu0 0
    %520 = vmatprep.subr.bf16.mxu0 0
    %521 = vmatpush1.bf16.xpose.msra.mxu0 0
    %522 = vmatprep.subr.bf16.mxu0 0
    %523 = vmatpush1.bf16.xpose.msra.mxu0 0
    %524 = vmatprep.subr.bf16.mxu0 0
    %525 = vmatpush1.bf16.xpose.msra.mxu0 0
    %526 = vmatprep.subr.bf16.mxu0 0
    %527 = vmatpush1.bf16.xpose.msra.mxu0 0
    %528 = vmatprep.subr.bf16.mxu0 0
    %529 = vmatpush1.bf16.xpose.msra.mxu0 0
    %530 = vmatprep.subr.bf16.mxu0 0
    %531 = vmatpush1.bf16.xpose.msra.mxu0 0
    %532 = vmatprep.mubr.bf16.mxu0 0
    %533 = vmatmul.mubr.bf16.gmra.mrb[0].mxu0 %v496
    %v534 = vpop.f32.mrb[0].mxu0
    %v535 = vadd.f32 0.0, %v534
    %v536 = vpop.f32.mrb[0].mxu0
    %v537 = vpop.f32.mrb[0].mxu0
    %v538 = vpop.f32.mrb[0].mxu0
    %539 = vdwg.mxu0
    %540 = vmatprep.subr.bf16.mxu0 0
    %541 = vmatpush1.bf16.xpose.msra.mxu0 %v348
    %542 = vmatprep.subr.bf16.mxu0 0
    %543 = vmatpush1.bf16.xpose.msra.mxu0 0
    %544 = vmatprep.subr.bf16.mxu0 0
    %545 = vmatpush1.bf16.xpose.msra.mxu0 0
    %546 = vmatprep.subr.bf16.mxu0 0
    %547 = vmatpush1.bf16.xpose.msra.mxu0 0
    %548 = vmatprep.subr.bf16.mxu0 0
    %549 = vmatpush1.bf16.xpose.msra.mxu0 0
    %550 = vmatprep.subr.bf16.mxu0 0
    %551 = vmatpush1.bf16.xpose.msra.mxu0 0
    %552 = vmatprep.subr.bf16.mxu0 0
    %553 = vmatpush1.bf16.xpose.msra.mxu0 0
    %554 = vmatprep.subr.bf16.mxu0 0
    %555 = vmatpush1.bf16.xpose.msra.mxu0 0
    %556 = vmatprep.subr.bf16.mxu0 0
    %557 = vmatpush1.bf16.xpose.msra.mxu0 0
    %558 = vmatprep.subr.bf16.mxu0 0
    %559 = vmatpush1.bf16.xpose.msra.mxu0 0
    %560 = vmatprep.subr.bf16.mxu0 0
    %561 = vmatpush1.bf16.xpose.msra.mxu0 0
    %562 = vmatprep.subr.bf16.mxu0 0
    %563 = vmatpush1.bf16.xpose.msra.mxu0 0
    %564 = vmatprep.subr.bf16.mxu0 0
    %565 = vmatpush1.bf16.xpose.msra.mxu0 0
    %566 = vmatprep.subr.bf16.mxu0 0
    %567 = vmatpush1.bf16.xpose.msra.mxu0 0
    %568 = vmatprep.subr.bf16.mxu0 0
    %569 = vmatpush1.bf16.xpose.msra.mxu0 0
    %570 = vmatprep.subr.bf16.mxu0 0
    %571 = vmatpush1.bf16.xpose.msra.mxu0 0
    %572 = vmatprep.mubr.bf16.mxu0 0
    %573 = vmatmul.mubr.bf16.gmra.mrb[0].mxu0 %v497
    %v574 = vpop.f32.mrb[0].mxu0
    %v575 = vadd.f32 0.0, %v574
    %v576 = vpop.f32.mrb[0].mxu0
    %v577 = vpop.f32.mrb[0].mxu0
    %v578 = vpop.f32.mrb[0].mxu0
    %579 = vdwg.mxu0
    %vm580 = vcmask 130048
    %v581 = vsel %vm580, %v535, -inf
    %v582 = vrot.slane %v581, 4
    %v583 = vmax.f32 %v581, %v582
    %v584 = vrot.slane %v583, 2
    %v585 = vmax.f32 %v583, %v584
    %v586 = vrot.slane %v585, 1
    %v587 = vmax.f32 %v585, %v586
    %v588 = vsel %vm580, %v575, -inf
    %v589 = vrot.slane %v588, 4
    %v590 = vmax.f32 %v588, %v589
    %v591 = vrot.slane %v590, 2
    %v592 = vmax.f32 %v590, %v591
    %v593 = vrot.slane %v592, 1
    %v594 = vmax.f32 %v592, %v593
    %v595 = vsub.f32 %v535, %v587
    %v596 = vsub.f32 %v575, %v594
    %v597 = vmul.f32 %v595, 1.442695
    %v598 = vpow.pop %v597
    %v599 = vmul.f32 %v596, 1.442695
    %v600 = vpow.pop %v599
    %v601 = vsel %vm580, %v598, 0.0
    %v602 = vrot.slane %v601, 4
    %v603 = vadd.f32 %v601, %v602
    %v604 = vrot.slane %v603, 2
    %v605 = vadd.f32 %v603, %v604
    %v606 = vrot.slane %v605, 1
    %v607 = vadd.f32 %v605, %v606
    %v608 = vsel %vm580, %v600, 0.0
    %v609 = vrot.slane %v608, 4
    %v610 = vadd.f32 %v608, %v609
    %v611 = vrot.slane %v610, 2
    %v612 = vadd.f32 %v610, %v611
    %v613 = vrot.slane %v612, 1
    %v614 = vadd.f32 %v612, %v613
    %v615 = vrcp.pop %v607
    %v616 = vrcp.pop %v614
    %v617 = vmul.f32 %v598, %v615
    %v618 = vmul.f32 %v600, %v616
    %v619 = vadd.f32 %v617, 1e-08
    %v620 = vadd.f32 %v618, 1e-08
    %v621 = vsel %vm580, %v619, 0.0
    %622 = vadd.xlane.f32.xlu0 %v621
    %v623 = vpop.xlane.xlu0 %622
    %v624 = vsel %vm580, %v620, 0.0
    %625 = vadd.xlane.f32.xlu0 %v624
    %v626 = vpop.xlane.xlu0 %625
    %v627 = vrcp.pop %v623
    %v628 = vrcp.pop %v626
    %v629 = vmul.f32 %v619, %v627
    %v630 = vmul.f32 %v620, %v628
    %v631 = vpack.c.bf16 %v629, %v629
    %v632 = vpack.c.bf16 %v630, %v630
    %v634 = vsel %vm580, %v631, 0
    %636 = vmatprep.subr.bf16.mxu0 0
    %637 = vmatpush1.bf16.msra.mxu0 %v349
    %638 = vmatprep.subr.bf16.mxu0 0
    %639 = vmatpush1.bf16.msra.mxu0 0
    %640 = vmatprep.subr.bf16.mxu0 0
    %641 = vmatpush1.bf16.msra.mxu0 0
    %642 = vmatprep.subr.bf16.mxu0 0
    %643 = vmatpush1.bf16.msra.mxu0 0
    %644 = vmatprep.subr.bf16.mxu0 0
    %645 = vmatpush1.bf16.msra.mxu0 0
    %646 = vmatprep.subr.bf16.mxu0 0
    %647 = vmatpush1.bf16.msra.mxu0 0
    %648 = vmatprep.subr.bf16.mxu0 0
    %649 = vmatpush1.bf16.msra.mxu0 0
    %650 = vmatprep.subr.bf16.mxu0 0
    %651 = vmatpush1.bf16.msra.mxu0 0
    %652 = vmatprep.subr.bf16.mxu0 0
    %653 = vmatpush1.bf16.msra.mxu0 0
    %654 = vmatprep.subr.bf16.mxu0 0
    %655 = vmatpush1.bf16.msra.mxu0 0
    %656 = vmatprep.subr.bf16.mxu0 0
    %657 = vmatpush1.bf16.msra.mxu0 0
    %658 = vmatprep.subr.bf16.mxu0 0
    %659 = vmatpush1.bf16.msra.mxu0 0
    %660 = vmatprep.subr.bf16.mxu0 0
    %661 = vmatpush1.bf16.msra.mxu0 0
    %662 = vmatprep.subr.bf16.mxu0 0
    %663 = vmatpush1.bf16.msra.mxu0 0
    %664 = vmatprep.subr.bf16.mxu0 0
    %665 = vmatpush1.bf16.msra.mxu0 0
    %666 = vmatprep.subr.bf16.mxu0 0
    %667 = vmatpush1.bf16.msra.mxu0 0
    %668 = vmatprep.mubr.bf16.mxu0 0
    %669 = vmatmul.mubr.bf16.gmra.mrb[0].mxu0 %v634
    %v670 = vpop.f32.mrb[0].mxu0
    %v671 = vadd.f32 0.0, %v670
    %v672 = vpop.f32.mrb[0].mxu0
    %v673 = vpop.f32.mrb[0].mxu0
    %v674 = vpop.f32.mrb[0].mxu0
    %675 = vdwg.mxu0
    %v677 = vsel %vm580, %v632, 0
    %679 = vmatprep.subr.bf16.mxu0 0
    %680 = vmatpush1.bf16.msra.mxu0 %v350
    %681 = vmatprep.subr.bf16.mxu0 0
    %682 = vmatpush1.bf16.msra.mxu0 0
    %683 = vmatprep.subr.bf16.mxu0 0
    %684 = vmatpush1.bf16.msra.mxu0 0
    %685 = vmatprep.subr.bf16.mxu0 0
    %686 = vmatpush1.bf16.msra.mxu0 0
    %687 = vmatprep.subr.bf16.mxu0 0
    %688 = vmatpush1.bf16.msra.mxu0 0
    %689 = vmatprep.subr.bf16.mxu0 0
    %690 = vmatpush1.bf16.msra.mxu0 0
    %691 = vmatprep.subr.bf16.mxu0 0
    %692 = vmatpush1.bf16.msra.mxu0 0
    %693 = vmatprep.subr.bf16.mxu0 0
    %694 = vmatpush1.bf16.msra.mxu0 0
    %695 = vmatprep.subr.bf16.mxu0 0
    %696 = vmatpush1.bf16.msra.mxu0 0
    %697 = vmatprep.subr.bf16.mxu0 0
    %698 = vmatpush1.bf16.msra.mxu0 0
    %699 = vmatprep.subr.bf16.mxu0 0
    %700 = vmatpush1.bf16.msra.mxu0 0
    %701 = vmatprep.subr.bf16.mxu0 0
    %702 = vmatpush1.bf16.msra.mxu0 0
    %703 = vmatprep.subr.bf16.mxu0 0
    %704 = vmatpush1.bf16.msra.mxu0 0
    %705 = vmatprep.subr.bf16.mxu0 0
    %706 = vmatpush1.bf16.msra.mxu0 0
    %707 = vmatprep.subr.bf16.mxu0 0
    %708 = vmatpush1.bf16.msra.mxu0 0
    %709 = vmatprep.subr.bf16.mxu0 0
    %710 = vmatpush1.bf16.msra.mxu0 0
    %711 = vmatprep.mubr.bf16.mxu0 0
    %712 = vmatmul.mubr.bf16.gmra.mrb[0].mxu0 %v677
    %v713 = vpop.f32.mrb[0].mxu0
    %v714 = vadd.f32 0.0, %v713
    %v715 = vpop.f32.mrb[0].mxu0
    %v716 = vpop.f32.mrb[0].mxu0
    %v717 = vpop.f32.mrb[0].mxu0
    %718 = vdwg.mxu0
    %v719 = vpack.c.bf16 %v714, %v671
    %v720 = vpack.c.bf16 %v358, %v357
    %v721 = vld [vmem:[#allocation11] sm:$0xff]
    %v722 = vld [vmem:[#allocation11 + $0x8] sm:$0xff]
    %v723 = vld [vmem:[#allocation11 + $0x14] sm:$0xff]
    %v724 = vld [vmem:[#allocation11 + $0x1c] sm:$0xff]
    %v725 = vld [vmem:[#allocation11 + $0x28] sm:$0xff]
    %v726 = vld [vmem:[#allocation11 + $0x30] sm:$0xff]
    %v727 = vld [vmem:[#allocation11 + $0x3c] sm:$0xff]
    %v728 = vld [vmem:[#allocation11 + $0x44] sm:$0xff]
    %v729 = vld [vmem:[#allocation11 + $0x50] sm:$0xff]
    %v730 = vld [vmem:[#allocation11 + $0x58] sm:$0xff]
    %v731 = vld [vmem:[#allocation11 + $0x64] sm:$0xff]
    %v732 = vld [vmem:[#allocation11 + $0x6c] sm:$0xff]
    %v733 = vld [vmem:[#allocation11 + $0x78] sm:$0xff]
    %v734 = vld [vmem:[#allocation11 + $0x80] sm:$0xff]
    %v735 = vld [vmem:[#allocation11 + $0x8c] sm:$0xff]
    %v736 = vld [vmem:[#allocation11 + $0x94] sm:$0xff]
    %v737 = vld [vmem:[#allocation11 + $0xa0] sm:$0xff]
    %v738 = vld [vmem:[#allocation11 + $0xa8] sm:$0xff]
    %v739 = vld [vmem:[#allocation11 + $0xb4] sm:$0xff]
    %v740 = vld [vmem:[#allocation11 + $0xbc] sm:$0xff]
    %v741 = vld [vmem:[#allocation11 + $0xc8] sm:$0xff]
    %v742 = vld [vmem:[#allocation11 + $0xd0] sm:$0xff]
    %v743 = vld [vmem:[#allocation11 + $0xdc] sm:$0xff]
    %v744 = vld [vmem:[#allocation11 + $0xe4] sm:$0xff]
    %v745 = vld [vmem:[#allocation11 + $0xf0] sm:$0xff]
    %v746 = vld [vmem:[#allocation11 + $0xf8] sm:$0xff]
    %v747 = vld [vmem:[#allocation11 + $0x104] sm:$0xff]
    %v748 = vld [vmem:[#allocation11 + $0x10c] sm:$0xff]
    %v749 = vld [vmem:[#allocation11 + $0x118] sm:$0xff]
    %v750 = vld [vmem:[#allocation11 + $0x120] sm:$0xff]
    %v751 = vld [vmem:[#allocation11 + $0x12c] sm:$0xff]
    %v752 = vld [vmem:[#allocation11 + $0x134] sm:$0xff]
    %v753 = vld [vmem:[#allocation11 + $0x140] sm:$0xff]
    %v754 = vld [vmem:[#allocation11 + $0x148] sm:$0xff]
    %v755 = vld [vmem:[#allocation11 + $0x154] sm:$0xff]
    %v756 = vld [vmem:[#allocation11 + $0x15c] sm:$0xff]
    %v757 = vld [vmem:[#allocation11 + $0x168] sm:$0xff]
    %v758 = vld [vmem:[#allocation11 + $0x170] sm:$0xff]
    %v759 = vld [vmem:[#allocation11 + $0x17c] sm:$0xff]
    %v760 = vld [vmem:[#allocation11 + $0x184] sm:$0xff]
    %v761 = vld [vmem:[#allocation11 + $0x190] sm:$0xff]
    %v762 = vld [vmem:[#allocation11 + $0x198] sm:$0xff]
    %v763 = vld [vmem:[#allocation11 + $0x1a4] sm:$0xff]
    %v764 = vld [vmem:[#allocation11 + $0x1ac] sm:$0xff]
    %v765 = vld [vmem:[#allocation11 + $0x1b8] sm:$0xff]
    %v766 = vld [vmem:[#allocation11 + $0x1c0] sm:$0xff]
    %v767 = vld [vmem:[#allocation11 + $0x1cc] sm:$0xff]
    %v768 = vld [vmem:[#allocation11 + $0x1d4] sm:$0xff]
    %v769 = vld [vmem:[#allocation11 + $0x1e0] sm:$0xff]
    %v770 = vld [vmem:[#allocation11 + $0x1e8] sm:$0xff]
    %v771 = vld [vmem:[#allocation11 + $0x1f4] sm:$0xff]
    %v772 = vld [vmem:[#allocation11 + $0x1fc] sm:$0xff]
    %v773 = vld [vmem:[#allocation11 + $0x208] sm:$0xff]
    %v774 = vld [vmem:[#allocation11 + $0x210] sm:$0xff]
    %v775 = vld [vmem:[#allocation11 + $0x21c] sm:$0xff]
    %v776 = vld [vmem:[#allocation11 + $0x224] sm:$0xff]
    %v777 = vld [vmem:[#allocation11 + $0x230] sm:$0xff]
    %v778 = vld [vmem:[#allocation11 + $0x238] sm:$0xff]
    %v779 = vld [vmem:[#allocation11 + $0x244] sm:$0xff]
    %v780 = vld [vmem:[#allocation11 + $0x24c] sm:$0xff]
    %v781 = vld [vmem:[#allocation11 + $0x258] sm:$0xff]
    %v782 = vld [vmem:[#allocation11 + $0x260] sm:$0xff]
    %v783 = vld [vmem:[#allocation11 + $0x26c] sm:$0xff]
    %v784 = vld [vmem:[#allocation11 + $0x274] sm:$0xff]
    %v849 = vunpack.c.l.b16 %v721
    %v850 = vunpack.c.h.b16 %v721
    %v851 = vunpack.c.l.b16 %v722
    %v852 = vunpack.c.h.b16 %v722
    %v853 = vunpack.c.l.b16 %v723
    %v854 = vunpack.c.h.b16 %v723
    %v855 = vunpack.c.l.b16 %v724
    %v856 = vunpack.c.h.b16 %v724
    %v857 = vunpack.c.l.b16 %v725
    %v858 = vunpack.c.h.b16 %v725
    %v859 = vunpack.c.l.b16 %v726
    %v860 = vunpack.c.h.b16 %v726
    %v861 = vunpack.c.l.b16 %v727
    %v862 = vunpack.c.h.b16 %v727
    %v863 = vunpack.c.l.b16 %v728
    %v864 = vunpack.c.h.b16 %v728
    %v865 = vunpack.c.l.b16 %v729
    %v866 = vunpack.c.h.b16 %v729
    %v867 = vunpack.c.l.b16 %v730
    %v868 = vunpack.c.h.b16 %v730
    %v869 = vunpack.c.l.b16 %v731
    %v870 = vunpack.c.h.b16 %v731
    %v871 = vunpack.c.l.b16 %v732
    %v872 = vunpack.c.h.b16 %v732
    %v873 = vunpack.c.l.b16 %v733
    %v874 = vunpack.c.h.b16 %v733
    %v875 = vunpack.c.l.b16 %v734
    %v876 = vunpack.c.h.b16 %v734
    %v877 = vunpack.c.l.b16 %v735
    %v878 = vunpack.c.h.b16 %v735
    %v879 = vunpack.c.l.b16 %v736
    %v880 = vunpack.c.h.b16 %v736
    %v881 = vunpack.c.l.b16 %v737
    %v882 = vunpack.c.h.b16 %v737
    %v883 = vunpack.c.l.b16 %v738
    %v884 = vunpack.c.h.b16 %v738
    %v885 = vunpack.c.l.b16 %v739
    %v886 = vunpack.c.h.b16 %v739
    %v887 = vunpack.c.l.b16 %v740
    %v888 = vunpack.c.h.b16 %v740
    %v889 = vunpack.c.l.b16 %v741
    %v890 = vunpack.c.h.b16 %v741
    %v891 = vunpack.c.l.b16 %v742
    %v892 = vunpack.c.h.b16 %v742
    %v893 = vunpack.c.l.b16 %v743
    %v894 = vunpack.c.h.b16 %v743
    %v895 = vunpack.c.l.b16 %v744
    %v896 = vunpack.c.h.b16 %v744
    %v897 = vunpack.c.l.b16 %v745
    %v898 = vunpack.c.h.b16 %v745
    %v899 = vunpack.c.l.b16 %v746
    %v900 = vunpack.c.h.b16 %v746
    %v901 = vunpack.c.l.b16 %v747
    %v902 = vunpack.c.h.b16 %v747
    %v903 = vunpack.c.l.b16 %v748
    %v904 = vunpack.c.h.b16 %v748
    %v905 = vunpack.c.l.b16 %v749
    %v906 = vunpack.c.h.b16 %v749
    %v907 = vunpack.c.l.b16 %v750
    %v908 = vunpack.c.h.b16 %v750
    %v909 = vunpack.c.l.b16 %v751
    %v910 = vunpack.c.h.b16 %v751
    %v911 = vunpack.c.l.b16 %v752
    %v912 = vunpack.c.h.b16 %v752
    %v913 = vunpack.c.l.b16 %v753
    %v914 = vunpack.c.h.b16 %v753
    %v915 = vunpack.c.l.b16 %v754
    %v916 = vunpack.c.h.b16 %v754
    %v917 = vunpack.c.l.b16 %v755
    %v918 = vunpack.c.h.b16 %v755
    %v919 = vunpack.c.l.b16 %v756
    %v920 = vunpack.c.h.b16 %v756
    %v921 = vunpack.c.l.b16 %v757
    %v922 = vunpack.c.h.b16 %v757
    %v923 = vunpack.c.l.b16 %v758
    %v924 = vunpack.c.h.b16 %v758
    %v925 = vunpack.c.l.b16 %v759
    %v926 = vunpack.c.h.b16 %v759
    %v927 = vunpack.c.l.b16 %v760
    %v928 = vunpack.c.h.b16 %v760
    %v929 = vunpack.c.l.b16 %v761
    %v930 = vunpack.c.h.b16 %v761
    %v931 = vunpack.c.l.b16 %v762
    %v932 = vunpack.c.h.b16 %v762
    %v933 = vunpack.c.l.b16 %v763
    %v934 = vunpack.c.h.b16 %v763
    %v935 = vunpack.c.l.b16 %v764
    %v936 = vunpack.c.h.b16 %v764
    %v937 = vunpack.c.l.b16 %v765
    %v938 = vunpack.c.h.b16 %v765
    %v939 = vunpack.c.l.b16 %v766
    %v940 = vunpack.c.h.b16 %v766
    %v941 = vunpack.c.l.b16 %v767
    %v942 = vunpack.c.h.b16 %v767
    %v943 = vunpack.c.l.b16 %v768
    %v944 = vunpack.c.h.b16 %v768
    %v945 = vunpack.c.l.b16 %v769
    %v946 = vunpack.c.h.b16 %v769
    %v947 = vunpack.c.l.b16 %v770
    %v948 = vunpack.c.h.b16 %v770
    %v949 = vunpack.c.l.b16 %v771
    %v950 = vunpack.c.h.b16 %v771
    %v951 = vunpack.c.l.b16 %v772
    %v952 = vunpack.c.h.b16 %v772
    %v953 = vunpack.c.l.b16 %v773
    %v954 = vunpack.c.h.b16 %v773
    %v955 = vunpack.c.l.b16 %v774
    %v956 = vunpack.c.h.b16 %v774
    %v957 = vunpack.c.l.b16 %v775
    %v958 = vunpack.c.h.b16 %v775
    %v959 = vunpack.c.l.b16 %v776
    %v960 = vunpack.c.h.b16 %v776
    %v961 = vunpack.c.l.b16 %v777
    %v962 = vunpack.c.h.b16 %v777
    %v963 = vunpack.c.l.b16 %v778
    %v964 = vunpack.c.h.b16 %v778
    %v965 = vunpack.c.l.b16 %v779
    %v966 = vunpack.c.h.b16 %v779
    %v967 = vunpack.c.l.b16 %v780
    %v968 = vunpack.c.h.b16 %v780
    %v969 = vunpack.c.l.b16 %v781
    %v970 = vunpack.c.h.b16 %v781
    %v971 = vunpack.c.l.b16 %v782
    %v972 = vunpack.c.h.b16 %v782
    %v973 = vunpack.c.l.b16 %v783
    %v974 = vunpack.c.h.b16 %v783
    %v975 = vunpack.c.l.b16 %v784
    %v976 = vunpack.c.h.b16 %v784
    %v977 = vpack.c.b16 %v853, %v849
    %v978 = vpack.c.b16 %v854, %v850
    %v979 = vpack.c.b16 %v855, %v851
    %v980 = vpack.c.b16 %v856, %v852
    %v981 = vpack.c.b16 %v861, %v857
    %v982 = vpack.c.b16 %v862, %v858
    %v983 = vpack.c.b16 %v863, %v859
    %v984 = vpack.c.b16 %v864, %v860
    %v985 = vpack.c.b16 %v869, %v865
    %v986 = vpack.c.b16 %v870, %v866
    %v987 = vpack.c.b16 %v871, %v867
    %v988 = vpack.c.b16 %v872, %v868
    %v989 = vpack.c.b16 %v877, %v873
    %v990 = vpack.c.b16 %v878, %v874
    %v991 = vpack.c.b16 %v879, %v875
    %v992 = vpack.c.b16 %v880, %v876
    %v993 = vpack.c.b16 %v885, %v881
    %v994 = vpack.c.b16 %v886, %v882
    %v995 = vpack.c.b16 %v887, %v883
    %v996 = vpack.c.b16 %v888, %v884
    %v997 = vpack.c.b16 %v893, %v889
    %v998 = vpack.c.b16 %v894, %v890
    %v999 = vpack.c.b16 %v895, %v891
    %v1000 = vpack.c.b16 %v896, %v892
    %v1001 = vpack.c.b16 %v901, %v897
    %v1002 = vpack.c.b16 %v902, %v898
    %v1003 = vpack.c.b16 %v903, %v899
    %v1004 = vpack.c.b16 %v904, %v900
    %v1005 = vpack.c.b16 %v909, %v905
    %v1006 = vpack.c.b16 %v910, %v906
    %v1007 = vpack.c.b16 %v911, %v907
    %v1008 = vpack.c.b16 %v912, %v908
    %v1009 = vpack.c.b16 %v917, %v913
    %v1010 = vpack.c.b16 %v918, %v914
    %v1011 = vpack.c.b16 %v919, %v915
    %v1012 = vpack.c.b16 %v920, %v916
    %v1013 = vpack.c.b16 %v925, %v921
    %v1014 = vpack.c.b16 %v926, %v922
    %v1015 = vpack.c.b16 %v927, %v923
    %v1016 = vpack.c.b16 %v928, %v924
    %v1017 = vpack.c.b16 %v933, %v929
    %v1018 = vpack.c.b16 %v934, %v930
    %v1019 = vpack.c.b16 %v935, %v931
    %v1020 = vpack.c.b16 %v936, %v932
    %v1021 = vpack.c.b16 %v941, %v937
    %v1022 = vpack.c.b16 %v942, %v938
    %v1023 = vpack.c.b16 %v943, %v939
    %v1024 = vpack.c.b16 %v944, %v940
    %v1025 = vpack.c.b16 %v949, %v945
    %v1026 = vpack.c.b16 %v950, %v946
    %v1027 = vpack.c.b16 %v951, %v947
    %v1028 = vpack.c.b16 %v952, %v948
    %v1029 = vpack.c.b16 %v957, %v953
    %v1030 = vpack.c.b16 %v958, %v954
    %v1031 = vpack.c.b16 %v959, %v955
    %v1032 = vpack.c.b16 %v960, %v956
    %v1033 = vpack.c.b16 %v965, %v961
    %v1034 = vpack.c.b16 %v966, %v962
    %v1035 = vpack.c.b16 %v967, %v963
    %v1036 = vpack.c.b16 %v968, %v964
    %v1037 = vpack.c.b16 %v973, %v969
    %v1038 = vpack.c.b16 %v974, %v970
    %v1039 = vpack.c.b16 %v975, %v971
    %v1040 = vpack.c.b16 %v976, %v972
    %1105 = vmatprep.subr.bf16.mxu0 %v978
    %1106 = vmatpush1.bf16.msra.mxu0 %v977
    %1107 = vmatprep.subr.bf16.mxu0 %v982
    %1108 = vmatpush1.bf16.msra.mxu0 %v981
    %1109 = vmatprep.subr.bf16.mxu0 %v986
    %1110 = vmatpush1.bf16.msra.mxu0 %v985
    %1111 = vmatprep.subr.bf16.mxu0 %v990
    %1112 = vmatpush1.bf16.msra.mxu0 %v989
    %1113 = vmatprep.subr.bf16.mxu0 %v994
    %1114 = vmatpush1.bf16.msra.mxu0 %v993
    %1115 = vmatprep.subr.bf16.mxu0 %v998
    %1116 = vmatpush1.bf16.msra.mxu0 %v997
    %1117 = vmatprep.subr.bf16.mxu0 %v1002
    %1118 = vmatpush1.bf16.msra.mxu0 %v1001
    %1119 = vmatprep.subr.bf16.mxu0 %v1006
    %1120 = vmatpush1.bf16.msra.mxu0 %v1005
    %1121 = vmatprep.subr.bf16.mxu0 %v1010
    %1122 = vmatpush1.bf16.msra.mxu0 %v1009
    %1123 = vmatprep.subr.bf16.mxu0 %v1014
    %1124 = vmatpush1.bf16.msra.mxu0 %v1013
    %1125 = vmatprep.subr.bf16.mxu0 %v1018
    %1126 = vmatpush1.bf16.msra.mxu0 %v1017
    %1127 = vmatprep.subr.bf16.mxu0 %v1022
    %1128 = vmatpush1.bf16.msra.mxu0 %v1021
    %1129 = vmatprep.subr.bf16.mxu0 %v1026
    %1130 = vmatpush1.bf16.msra.mxu0 %v1025
    %1131 = vmatprep.subr.bf16.mxu0 %v1030
    %1132 = vmatpush1.bf16.msra.mxu0 %v1029
    %1133 = vmatprep.subr.bf16.mxu0 %v1034
    %1134 = vmatpush1.bf16.msra.mxu0 %v1033
    %1135 = vmatprep.subr.bf16.mxu0 %v1038
    %1136 = vmatpush1.bf16.msra.mxu0 %v1037
    %1137 = vmatprep.mubr.bf16.mxu0 %v720
    %1138 = vmatmul.mubr.bf16.gmra.mrb[0].mxu0 %v719
    %v1139 = vpop.f32.mrb[0].mxu0
    %v1140 = vadd.f32 0.0, %v1139
    %v1141 = vpop.f32.mrb[0].mxu0
    %v1142 = vadd.f32 0.0, %v1141
    %v1143 = vpop.f32.mrb[0].mxu0
    %v1144 = vadd.f32 0.0, %v1143
    %v1145 = vpop.f32.mrb[0].mxu0
    %v1146 = vadd.f32 0.0, %v1145
    %1147 = vdwg.mxu0
    %1148 = vmatprep.subr.bf16.mxu0 %v980
    %1149 = vmatpush1.bf16.msra.mxu0 %v979
    %1150 = vmatprep.subr.bf16.mxu0 %v984
    %1151 = vmatpush1.bf16.msra.mxu0 %v983
    %1152 = vmatprep.subr.bf16.mxu0 %v988
    %1153 = vmatpush1.bf16.msra.mxu0 %v987
    %1154 = vmatprep.subr.bf16.mxu0 %v992
    %1155 = vmatpush1.bf16.msra.mxu0 %v991
    %1156 = vmatprep.subr.bf16.mxu0 %v996
    %1157 = vmatpush1.bf16.msra.mxu0 %v995
    %1158 = vmatprep.subr.bf16.mxu0 %v1000
    %1159 = vmatpush1.bf16.msra.mxu0 %v999
    %1160 = vmatprep.subr.bf16.mxu0 %v1004
    %1161 = vmatpush1.bf16.msra.mxu0 %v1003
    %1162 = vmatprep.subr.bf16.mxu0 %v1008
    %1163 = vmatpush1.bf16.msra.mxu0 %v1007
    %1164 = vmatprep.subr.bf16.mxu0 %v1012
    %1165 = vmatpush1.bf16.msra.mxu0 %v1011
    %1166 = vmatprep.subr.bf16.mxu0 %v1016
    %1167 = vmatpush1.bf16.msra.mxu0 %v1015
    %1168 = vmatprep.subr.bf16.mxu0 %v1020
    %1169 = vmatpush1.bf16.msra.mxu0 %v1019
    %1170 = vmatprep.subr.bf16.mxu0 %v1024
    %1171 = vmatpush1.bf16.msra.mxu0 %v1023
    %1172 = vmatprep.subr.bf16.mxu0 %v1028
    %1173 = vmatpush1.bf16.msra.mxu0 %v1027
    %1174 = vmatprep.subr.bf16.mxu0 %v1032
    %1175 = vmatpush1.bf16.msra.mxu0 %v1031
    %1176 = vmatprep.subr.bf16.mxu0 %v1036
    %1177 = vmatpush1.bf16.msra.mxu0 %v1035
    %1178 = vmatprep.subr.bf16.mxu0 %v1040
    %1179 = vmatpush1.bf16.msra.mxu0 %v1039
    %1180 = vmatprep.mubr.bf16.mxu0 %v720
    %1181 = vmatmul.mubr.bf16.gmra.mrb[0].mxu0 %v719
    %v1182 = vpop.f32.mrb[0].mxu0
    %v1183 = vadd.f32 0.0, %v1182
    %v1184 = vpop.f32.mrb[0].mxu0
    %v1185 = vadd.f32 0.0, %v1184
    %v1186 = vpop.f32.mrb[0].mxu0
    %v1187 = vadd.f32 0.0, %v1186
    %v1188 = vpop.f32.mrb[0].mxu0
    %v1189 = vadd.f32 0.0, %v1188
    %1190 = vdwg.mxu0
    %v1192 = vlaneseq
    %v1193 = vshrl.u32 %v1192, 7
    %v1194 = vsub.s32 0, %v1193
    %v1195 = vrot.slane %v122, %v1194
    %v1196 = vlaneseq
    %v1197 = vshrl.u32 %v1196, 7
    %v1198 = vsub.s32 1, %v1197
    %v1199 = vrot.slane %v122, %v1198
    %v1202 = vadd.f32 %v1140, %v1195
    %v1203 = vadd.f32 %v1142, %v1199
    %v1204 = vadd.f32 %v1144, %v1195
    %v1205 = vadd.f32 %v1146, %v1199
    %v1206 = vxor.u32 %v1202, 2147483648
    %v1207 = vxor.u32 %v1203, 2147483648
    %v1208 = vxor.u32 %v1204, 2147483648
    %v1209 = vxor.u32 %v1205, 2147483648
    %v1210 = vmul.f32 %v1206, 1.442695
    %v1211 = vpow.pop %v1210
    %v1212 = vmul.f32 %v1207, 1.442695
    %v1213 = vpow.pop %v1212
    %v1214 = vmul.f32 %v1208, 1.442695
    %v1215 = vpow.pop %v1214
    %v1216 = vmul.f32 %v1209, 1.442695
    %v1217 = vpow.pop %v1216
    %v1218 = vadd.f32 %v1211, 1.0
    %v1219 = vadd.f32 %v1213, 1.0
    %v1220 = vadd.f32 %v1215, 1.0
    %v1221 = vadd.f32 %v1217, 1.0
    %v1222 = vrcp.pop %v1218
    %v1223 = vmul.f32 1.0, %v1222
    %v1224 = vrcp.pop %v1219
    %v1225 = vmul.f32 1.0, %v1224
    %v1226 = vrcp.pop %v1220
    %v1227 = vmul.f32 1.0, %v1226
    %v1228 = vrcp.pop %v1221
    %v1229 = vmul.f32 1.0, %v1228
    %v1230 = vadd.f32 %v1183, %v123
    %v1231 = vadd.f32 %v1187, %v123
    %v1232 = vadd.f32 %v1185, %v124
    %v1233 = vadd.f32 %v1189, %v124
    %v1234 = vmul.f32 %v1223, %v1232
    %v1235 = vmul.f32 %v1227, %v1233
    %v1236 = vadd.f32 %v1230, %v1234
    %v1237 = vadd.f32 %v1231, %v1235
    %v1238 = vtanh.pop %v1236
    %v1239 = vtanh.pop %v1237
    %v1240 = vsub.f32 1.0, %v1225
    %v1241 = vsub.f32 1.0, %v1229
    %v1242 = vmul.f32 %v1240, %v1238
    %v1243 = vmul.f32 %v1241, %v1239
    %v1244 = vmul.f32 %v1225, %v357
    %v1245 = vmul.f32 %v1229, %v358
    %v1246 = vadd.f32 %v1242, %v1244
    %v1247 = vadd.f32 %v1243, %v1245
    %1248 = vadd.xlane.f32.xlu0 %v1246
    %v1249 = vpop.xlane.xlu0 %1248
    %1250 = vadd.xlane.f32.xlu0 %v1247
    %v1251 = vpop.xlane.xlu0 %1250
    %v1252 = vmul.f32 %v1249, %v363
    %v1253 = vmul.f32 %v1251, %v363
    %v1254 = vsub.f32 %v1246, %v1252
    %v1255 = vsub.f32 %v1247, %v1253
    %v1256 = vmul.f32 %v1254, %v1254
    %v1257 = vmul.f32 %v1255, %v1255
    %1258 = vadd.xlane.f32.xlu0 %v1256
    %v1259 = vpop.xlane.xlu0 %1258
    %1260 = vadd.xlane.f32.xlu0 %v1257
    %v1261 = vpop.xlane.xlu0 %1260
    %v1262 = vmul.f32 %v1259, %v363
    %v1263 = vmul.f32 %v1261, %v363
    %v1264 = vadd.f32 %v1262, 1e-05
    %v1265 = vadd.f32 %v1263, 1e-05
    %v1266 = vrsqrt.pop %v1264
    %v1267 = vrsqrt.pop %v1265
    %v1268 = vmul.f32 %v1254, %v1266
    %v1269 = vmul.f32 %v1255, %v1267
    %v1270 = vmul.f32 %v1268, %v115
    %v1271 = vmul.f32 %v1269, %v115
    %v1272 = vadd.f32 %v1270, %v116
    %v1273 = vadd.f32 %v1271, %v116
    %v1274 = vpack.c.bf16 %v1273, %v1272
    %v1275 = vld [vmem:[#allocation8 + $0x4] sm:$0xf]
    %v1276 = vld [vmem:[#allocation8 + $0x18] sm:$0xf]
    %v1277 = vld [vmem:[#allocation8 + $0x2c] sm:$0xf]
    %v1278 = vld [vmem:[#allocation8 + $0x40] sm:$0xf]
    %v1279 = vld [vmem:[#allocation8 + $0x54] sm:$0xf]
    %v1280 = vld [vmem:[#allocation8 + $0x68] sm:$0xf]
    %v1281 = vld [vmem:[#allocation8 + $0x7c] sm:$0xf]
    %v1282 = vld [vmem:[#allocation8 + $0x90] sm:$0xf]
    %v1283 = vld [vmem:[#allocation8 + $0xa4] sm:$0xf]
    %v1284 = vld [vmem:[#allocation8 + $0xb8] sm:$0xf]
    %v1285 = vld [vmem:[#allocation8 + $0xcc] sm:$0xf]
    %v1286 = vld [vmem:[#allocation8 + $0xe0] sm:$0xf]
    %v1287 = vld [vmem:[#allocation8 + $0xf4] sm:$0xf]
    %v1288 = vld [vmem:[#allocation8 + $0x108] sm:$0xf]
    %v1289 = vld [vmem:[#allocation8 + $0x11c] sm:$0xf]
    %v1290 = vld [vmem:[#allocation8 + $0x130] sm:$0xf]
    %v1307 = vunpack.c.l.b16 %v1275
    %v1308 = vunpack.c.l.b16 %v1276
    %v1309 = vunpack.c.l.b16 %v1277
    %v1310 = vunpack.c.l.b16 %v1278
    %v1311 = vunpack.c.l.b16 %v1279
    %v1312 = vunpack.c.l.b16 %v1280
    %v1313 = vunpack.c.l.b16 %v1281
    %v1314 = vunpack.c.l.b16 %v1282
    %v1315 = vunpack.c.l.b16 %v1283
    %v1316 = vunpack.c.l.b16 %v1284
    %v1317 = vunpack.c.l.b16 %v1285
    %v1318 = vunpack.c.l.b16 %v1286
    %v1319 = vunpack.c.l.b16 %v1287
    %v1320 = vunpack.c.l.b16 %v1288
    %v1321 = vunpack.c.l.b16 %v1289
    %v1322 = vunpack.c.l.b16 %v1290
    %v1323 = vpack.c.b16 %v1308, %v1307
    %v1324 = vpack.c.b16 %v1310, %v1309
    %v1325 = vpack.c.b16 %v1312, %v1311
    %v1326 = vpack.c.b16 %v1314, %v1313
    %v1327 = vpack.c.b16 %v1316, %v1315
    %v1328 = vpack.c.b16 %v1318, %v1317
    %v1329 = vpack.c.b16 %v1320, %v1319
    %v1330 = vpack.c.b16 %v1322, %v1321
    %1339 = vmatprep.subr.bf16.mxu0 0
    %1340 = vmatpush1.bf16.msra.mxu0 %v1323
    %1341 = vmatprep.subr.bf16.mxu0 0
    %1342 = vmatpush1.bf16.msra.mxu0 %v1324
    %1343 = vmatprep.subr.bf16.mxu0 0
    %1344 = vmatpush1.bf16.msra.mxu0 %v1325
    %1345 = vmatprep.subr.bf16.mxu0 0
    %1346 = vmatpush1.bf16.msra.mxu0 %v1326
    %1347 = vmatprep.subr.bf16.mxu0 0
    %1348 = vmatpush1.bf16.msra.mxu0 %v1327
    %1349 = vmatprep.subr.bf16.mxu0 0
    %1350 = vmatpush1.bf16.msra.mxu0 %v1328
    %1351 = vmatprep.subr.bf16.mxu0 0
    %1352 = vmatpush1.bf16.msra.mxu0 %v1329
    %1353 = vmatprep.subr.bf16.mxu0 0
    %1354 = vmatpush1.bf16.msra.mxu0 %v1330
    %1355 = vmatprep.subr.bf16.mxu0 0
    %1356 = vmatpush1.bf16.msra.mxu0 0
    %1357 = vmatprep.subr.bf16.mxu0 0
    %1358 = vmatpush1.bf16.msra.mxu0 0
    %1359 = vmatprep.subr.bf16.mxu0 0
    %1360 = vmatpush1.bf16.msra.mxu0 0
    %1361 = vmatprep.subr.bf16.mxu0 0
    %1362 = vmatpush1.bf16.msra.mxu0 0
    %1363 = vmatprep.subr.bf16.mxu0 0
    %1364 = vmatpush1.bf16.msra.mxu0 0
    %1365 = vmatprep.subr.bf16.mxu0 0
    %1366 = vmatpush1.bf16.msra.mxu0 0
    %1367 = vmatprep.subr.bf16.mxu0 0
    %1368 = vmatpush1.bf16.msra.mxu0 0
    %1369 = vmatprep.subr.bf16.mxu0 0
    %1370 = vmatpush1.bf16.msra.mxu0 0
    %1371 = vmatprep.mubr.bf16.mxu0 0
    %1372 = vmatmul.mubr.bf16.gmra.mrb[0].mxu0 %v1274
    %v1373 = vpop.f32.mrb[0].mxu0
    %v1374 = vadd.f32 %v125, %v1373
    %v1375 = vpop.f32.mrb[0].mxu0
    %v1376 = vpop.f32.mrb[0].mxu0
    %v1377 = vadd.f32 %v125, %v1376
    %v1378 = vpop.f32.mrb[0].mxu0
    %1379 = vdwg.mxu0
    %v1380 = vmax.f32 %v1374, 0.0
    %v1381 = vmax.f32 %v1377, 0.0
    %v1382 = vpack.c.bf16 %v1381, %v1380
    %v1383 = vld [vmem:[#allocation8 + $0x8] sm:$0xf]
    %v1384 = vld [vmem:[#allocation8 + $0x1c] sm:$0xf]
    %v1385 = vld [vmem:[#allocation8 + $0x30] sm:$0xf]
    %v1386 = vld [vmem:[#allocation8 + $0x44] sm:$0xf]
    %v1387 = vld [vmem:[#allocation8 + $0x58] sm:$0xf]
    %v1388 = vld [vmem:[#allocation8 + $0x6c] sm:$0xf]
    %v1389 = vld [vmem:[#allocation8 + $0x80] sm:$0xf]
    %v1390 = vld [vmem:[#allocation8 + $0x94] sm:$0xf]
    %v1391 = vld [vmem:[#allocation8 + $0xa8] sm:$0xf]
    %v1392 = vld [vmem:[#allocation8 + $0xbc] sm:$0xf]
    %v1393 = vld [vmem:[#allocation8 + $0xd0] sm:$0xf]
    %v1394 = vld [vmem:[#allocation8 + $0xe4] sm:$0xf]
    %v1395 = vld [vmem:[#allocation8 + $0xf8] sm:$0xf]
    %v1396 = vld [vmem:[#allocation8 + $0x10c] sm:$0xf]
    %v1397 = vld [vmem:[#allocation8 + $0x120] sm:$0xf]
    %v1398 = vld [vmem:[#allocation8 + $0x134] sm:$0xf]
    %v1415 = vunpack.c.l.b16 %v1383
    %v1416 = vunpack.c.l.b16 %v1384
    %v1417 = vunpack.c.l.b16 %v1385
    %v1418 = vunpack.c.l.b16 %v1386
    %v1419 = vunpack.c.l.b16 %v1387
    %v1420 = vunpack.c.l.b16 %v1388
    %v1421 = vunpack.c.l.b16 %v1389
    %v1422 = vunpack.c.l.b16 %v1390
    %v1423 = vunpack.c.l.b16 %v1391
    %v1424 = vunpack.c.l.b16 %v1392
    %v1425 = vunpack.c.l.b16 %v1393
    %v1426 = vunpack.c.l.b16 %v1394
    %v1427 = vunpack.c.l.b16 %v1395
    %v1428 = vunpack.c.l.b16 %v1396
    %v1429 = vunpack.c.l.b16 %v1397
    %v1430 = vunpack.c.l.b16 %v1398
    %v1431 = vpack.c.b16 %v1416, %v1415
    %v1432 = vpack.c.b16 %v1418, %v1417
    %v1433 = vpack.c.b16 %v1420, %v1419
    %v1434 = vpack.c.b16 %v1422, %v1421
    %v1435 = vpack.c.b16 %v1424, %v1423
    %v1436 = vpack.c.b16 %v1426, %v1425
    %v1437 = vpack.c.b16 %v1428, %v1427
    %v1438 = vpack.c.b16 %v1430, %v1429
    %1447 = vmatprep.subr.bf16.mxu0 0
    %1448 = vmatpush1.bf16.msra.mxu0 %v1431
    %1449 = vmatprep.subr.bf16.mxu0 0
    %1450 = vmatpush1.bf16.msra.mxu0 %v1432
    %1451 = vmatprep.subr.bf16.mxu0 0
    %1452 = vmatpush1.bf16.msra.mxu0 %v1433
    %1453 = vmatprep.subr.bf16.mxu0 0
    %1454 = vmatpush1.bf16.msra.mxu0 %v1434
    %1455 = vmatprep.subr.bf16.mxu0 0
    %1456 = vmatpush1.bf16.msra.mxu0 %v1435
    %1457 = vmatprep.subr.bf16.mxu0 0
    %1458 = vmatpush1.bf16.msra.mxu0 %v1436
    %1459 = vmatprep.subr.bf16.mxu0 0
    %1460 = vmatpush1.bf16.msra.mxu0 %v1437
    %1461 = vmatprep.subr.bf16.mxu0 0
    %1462 = vmatpush1.bf16.msra.mxu0 %v1438
    %1463 = vmatprep.subr.bf16.mxu0 0
    %1464 = vmatpush1.bf16.msra.mxu0 0
    %1465 = vmatprep.subr.bf16.mxu0 0
    %1466 = vmatpush1.bf16.msra.mxu0 0
    %1467 = vmatprep.subr.bf16.mxu0 0
    %1468 = vmatpush1.bf16.msra.mxu0 0
    %1469 = vmatprep.subr.bf16.mxu0 0
    %1470 = vmatpush1.bf16.msra.mxu0 0
    %1471 = vmatprep.subr.bf16.mxu0 0
    %1472 = vmatpush1.bf16.msra.mxu0 0
    %1473 = vmatprep.subr.bf16.mxu0 0
    %1474 = vmatpush1.bf16.msra.mxu0 0
    %1475 = vmatprep.subr.bf16.mxu0 0
    %1476 = vmatpush1.bf16.msra.mxu0 0
    %1477 = vmatprep.subr.bf16.mxu0 0
    %1478 = vmatpush1.bf16.msra.mxu0 0
    %1479 = vmatprep.mubr.bf16.mxu0 0
    %1480 = vmatmul.mubr.bf16.gmra.mrb[0].mxu0 %v1382
    %v1481 = vpop.f32.mrb[0].mxu0
    %v1482 = vadd.f32 0.0, %v1481
    %v1483 = vpop.f32.mrb[0].mxu0
    %v1484 = vpop.f32.mrb[0].mxu0
    %v1485 = vadd.f32 0.0, %v1484
    %v1486 = vpop.f32.mrb[0].mxu0
    %1487 = vdwg.mxu0
    %v1488 = vadd.f32 %v1246, %v1482
    %v1489 = vadd.f32 %v1247, %v1485
    %v1490 = vadd.f32 %v1488, %v126
    %v1491 = vadd.f32 %v1489, %v126
    %1492 = vadd.xlane.f32.xlu0 %v1490
    %v1493 = vpop.xlane.xlu0 %1492
    %1494 = vadd.xlane.f32.xlu0 %v1491
    %v1495 = vpop.xlane.xlu0 %1494
    %v1496 = vmul.f32 %v1493, %v363
    %v1497 = vmul.f32 %v1495, %v363
    %v1498 = vsub.f32 %v1490, %v1496
    %v1499 = vsub.f32 %v1491, %v1497
    %v1500 = vmul.f32 %v1498, %v1498
    %v1501 = vmul.f32 %v1499, %v1499
    %1502 = vadd.xlane.f32.xlu0 %v1500
    %v1503 = vpop.xlane.xlu0 %1502
    %1504 = vadd.xlane.f32.xlu0 %v1501
    %v1505 = vpop.xlane.xlu0 %1504
    %v1506 = vmul.f32 %v1503, %v363
    %v1507 = vmul.f32 %v1505, %v363
    %v1508 = vadd.f32 %v1506, 1e-05
    %v1509 = vadd.f32 %v1507, 1e-05
    %v1510 = vrsqrt.pop %v1508
    %v1511 = vrsqrt.pop %v1509
    %v1512 = vmul.f32 %v1498, %v1510
    %v1513 = vmul.f32 %v1499, %v1511
    %v1514 = vmul.f32 %v1512, %v113
    %v1515 = vmul.f32 %v1513, %v113
    %v1516 = vadd.f32 %v1514, %v114
    %v1517 = vadd.f32 %v1515, %v114
    %v1518 = vpack.c.bf16 %v1517, %v1516
    %v1519 = vld [vmem:[#allocation8] sm:$0xf]
    %v1520 = vld [vmem:[#allocation8 + $0x14] sm:$0xf]
    %v1521 = vld [vmem:[#allocation8 + $0x28] sm:$0xf]
    %v1522 = vld [vmem:[#allocation8 + $0x3c] sm:$0xf]
    %v1523 = vld [vmem:[#allocation8 + $0x50] sm:$0xf]
    %v1524 = vld [vmem:[#allocation8 + $0x64] sm:$0xf]
    %v1525 = vld [vmem:[#allocation8 + $0x78] sm:$0xf]
    %v1526 = vld [vmem:[#allocation8 + $0x8c] sm:$0xf]
    %v1527 = vld [vmem:[#allocation8 + $0xa0] sm:$0xf]
    %v1528 = vld [vmem:[#allocation8 + $0xb4] sm:$0xf]
    %v1529 = vld [vmem:[#allocation8 + $0xc8] sm:$0xf]
    %v1530 = vld [vmem:[#allocation8 + $0xdc] sm:$0xf]
    %v1531 = vld [vmem:[#allocation8 + $0xf0] sm:$0xf]
    %v1532 = vld [vmem:[#allocation8 + $0x104] sm:$0xf]
    %v1533 = vld [vmem:[#allocation8 + $0x118] sm:$0xf]
    %v1534 = vld [vmem:[#allocation8 + $0x12c] sm:$0xf]
    %v1551 = vunpack.c.l.b16 %v1519
    %v1552 = vunpack.c.l.b16 %v1520
    %v1553 = vunpack.c.l.b16 %v1521
    %v1554 = vunpack.c.l.b16 %v1522
    %v1555 = vunpack.c.l.b16 %v1523
    %v1556 = vunpack.c.l.b16 %v1524
    %v1557 = vunpack.c.l.b16 %v1525
    %v1558 = vunpack.c.l.b16 %v1526
    %v1559 = vunpack.c.l.b16 %v1527
    %v1560 = vunpack.c.l.b16 %v1528
    %v1561 = vunpack.c.l.b16 %v1529
    %v1562 = vunpack.c.l.b16 %v1530
    %v1563 = vunpack.c.l.b16 %v1531
    %v1564 = vunpack.c.l.b16 %v1532
    %v1565 = vunpack.c.l.b16 %v1533
    %v1566 = vunpack.c.l.b16 %v1534
    %v1567 = vpack.c.b16 %v1552, %v1551
    %v1568 = vpack.c.b16 %v1554, %v1553
    %v1569 = vpack.c.b16 %v1556, %v1555
    %v1570 = vpack.c.b16 %v1558, %v1557
    %v1571 = vpack.c.b16 %v1560, %v1559
    %v1572 = vpack.c.b16 %v1562, %v1561
    %v1573 = vpack.c.b16 %v1564, %v1563
    %v1574 = vpack.c.b16 %v1566, %v1565
    %1583 = vmatprep.subr.bf16.mxu0 0
    %1584 = vmatpush1.bf16.msra.mxu0 %v1567
    %1585 = vmatprep.subr.bf16.mxu0 0
    %1586 = vmatpush1.bf16.msra.mxu0 %v1568
    %1587 = vmatprep.subr.bf16.mxu0 0
    %1588 = vmatpush1.bf16.msra.mxu0 %v1569
    %1589 = vmatprep.subr.bf16.mxu0 0
    %1590 = vmatpush1.bf16.msra.mxu0 %v1570
    %1591 = vmatprep.subr.bf16.mxu0 0
    %1592 = vmatpush1.bf16.msra.mxu0 %v1571
    %1593 = vmatprep.subr.bf16.mxu0 0
    %1594 = vmatpush1.bf16.msra.mxu0 %v1572
    %1595 = vmatprep.subr.bf16.mxu0 0
    %1596 = vmatpush1.bf16.msra.mxu0 %v1573
    %1597 = vmatprep.subr.bf16.mxu0 0
    %1598 = vmatpush1.bf16.msra.mxu0 %v1574
    %1599 = vmatprep.subr.bf16.mxu0 0
    %1600 = vmatpush1.bf16.msra.mxu0 0
    %1601 = vmatprep.subr.bf16.mxu0 0
    %1602 = vmatpush1.bf16.msra.mxu0 0
    %1603 = vmatprep.subr.bf16.mxu0 0
    %1604 = vmatpush1.bf16.msra.mxu0 0
    %1605 = vmatprep.subr.bf16.mxu0 0
    %1606 = vmatpush1.bf16.msra.mxu0 0
    %1607 = vmatprep.subr.bf16.mxu0 0
    %1608 = vmatpush1.bf16.msra.mxu0 0
    %1609 = vmatprep.subr.bf16.mxu0 0
    %1610 = vmatpush1.bf16.msra.mxu0 0
    %1611 = vmatprep.subr.bf16.mxu0 0
    %1612 = vmatpush1.bf16.msra.mxu0 0
    %1613 = vmatprep.subr.bf16.mxu0 0
    %1614 = vmatpush1.bf16.msra.mxu0 0
    %1615 = vmatprep.mubr.bf16.mxu0 0
    %1616 = vmatmul.mubr.bf16.gmra.mrb[0].mxu0 %v1518
    %v1617 = vpop.f32.mrb[0].mxu0
    %v1618 = vadd.f32 0.0, %v1617
    %v1619 = vpop.f32.mrb[0].mxu0
    %v1620 = vpop.f32.mrb[0].mxu0
    %v1621 = vadd.f32 0.0, %v1620
    %v1622 = vpop.f32.mrb[0].mxu0
    %1623 = vdwg.mxu0
    %v1624 = vpack.c.bf16 %v1621, %v1618
    %v1626 = vunpack.c.l.b16 %v1624
    %v1627 = vunpack.c.h.b16 %v1624
    %v1628 = vpack.c.b16 %v1626, %v1626
    %v1629 = vpack.c.b16 %v1627, %v1627
    %1632 = vmatprep.subr.bf16.mxu0 0
    %1633 = vmatpush1.bf16.xpose.msra.mxu0 %v347
    %1634 = vmatprep.subr.bf16.mxu0 0
    %1635 = vmatpush1.bf16.xpose.msra.mxu0 0
    %1636 = vmatprep.subr.bf16.mxu0 0
    %1637 = vmatpush1.bf16.xpose.msra.mxu0 0
    %1638 = vmatprep.subr.bf16.mxu0 0
    %1639 = vmatpush1.bf16.xpose.msra.mxu0 0
    %1640 = vmatprep.subr.bf16.mxu0 0
    %1641 = vmatpush1.bf16.xpose.msra.mxu0 0
    %1642 = vmatprep.subr.bf16.mxu0 0
    %1643 = vmatpush1.bf16.xpose.msra.mxu0 0
    %1644 = vmatprep.subr.bf16.mxu0 0
    %1645 = vmatpush1.bf16.xpose.msra.mxu0 0
    %1646 = vmatprep.subr.bf16.mxu0 0
    %1647 = vmatpush1.bf16.xpose.msra.mxu0 0
    %1648 = vmatprep.subr.bf16.mxu0 0
    %1649 = vmatpush1.bf16.xpose.msra.mxu0 0
    %1650 = vmatprep.subr.bf16.mxu0 0
    %1651 = vmatpush1.bf16.xpose.msra.mxu0 0
    %1652 = vmatprep.subr.bf16.mxu0 0
    %1653 = vmatpush1.bf16.xpose.msra.mxu0 0
    %1654 = vmatprep.subr.bf16.mxu0 0
    %1655 = vmatpush1.bf16.xpose.msra.mxu0 0
    %1656 = vmatprep.subr.bf16.mxu0 0
    %1657 = vmatpush1.bf16.xpose.msra.mxu0 0
    %1658 = vmatprep.subr.bf16.mxu0 0
    %1659 = vmatpush1.bf16.xpose.msra.mxu0 0
    %1660 = vmatprep.subr.bf16.mxu0 0
    %1661 = vmatpush1.bf16.xpose.msra.mxu0 0
    %1662 = vmatprep.subr.bf16.mxu0 0
    %1663 = vmatpush1.bf16.xpose.msra.mxu0 0
    %1664 = vmatprep.mubr.bf16.mxu0 0
    %1665 = vmatmul.mubr.bf16.gmra.mrb[0].mxu0 %v1628
    %v1666 = vpop.f32.mrb[0].mxu0
    %v1667 = vadd.f32 0.0, %v1666
    %v1668 = vpop.f32.mrb[0].mxu0
    %v1669 = vpop.f32.mrb[0].mxu0
    %v1670 = vpop.f32.mrb[0].mxu0
    %1671 = vdwg.mxu0
    %1672 = vmatprep.subr.bf16.mxu0 0
    %1673 = vmatpush1.bf16.xpose.msra.mxu0 %v348
    %1674 = vmatprep.subr.bf16.mxu0 0
    %1675 = vmatpush1.bf16.xpose.msra.mxu0 0
    %1676 = vmatprep.subr.bf16.mxu0 0
    %1677 = vmatpush1.bf16.xpose.msra.mxu0 0
    %1678 = vmatprep.subr.bf16.mxu0 0
    %1679 = vmatpush1.bf16.xpose.msra.mxu0 0
    %1680 = vmatprep.subr.bf16.mxu0 0
    %1681 = vmatpush1.bf16.xpose.msra.mxu0 0
    %1682 = vmatprep.subr.bf16.mxu0 0
    %1683 = vmatpush1.bf16.xpose.msra.mxu0 0
    %1684 = vmatprep.subr.bf16.mxu0 0
    %1685 = vmatpush1.bf16.xpose.msra.mxu0 0
    %1686 = vmatprep.subr.bf16.mxu0 0
    %1687 = vmatpush1.bf16.xpose.msra.mxu0 0
    %1688 = vmatprep.subr.bf16.mxu0 0
    %1689 = vmatpush1.bf16.xpose.msra.mxu0 0
    %1690 = vmatprep.subr.bf16.mxu0 0
    %1691 = vmatpush1.bf16.xpose.msra.mxu0 0
    %1692 = vmatprep.subr.bf16.mxu0 0
    %1693 = vmatpush1.bf16.xpose.msra.mxu0 0
    %1694 = vmatprep.subr.bf16.mxu0 0
    %1695 = vmatpush1.bf16.xpose.msra.mxu0 0
    %1696 = vmatprep.subr.bf16.mxu0 0
    %1697 = vmatpush1.bf16.xpose.msra.mxu0 0
    %1698 = vmatprep.subr.bf16.mxu0 0
    %1699 = vmatpush1.bf16.xpose.msra.mxu0 0
    %1700 = vmatprep.subr.bf16.mxu0 0
    %1701 = vmatpush1.bf16.xpose.msra.mxu0 0
    %1702 = vmatprep.subr.bf16.mxu0 0
    %1703 = vmatpush1.bf16.xpose.msra.mxu0 0
    %1704 = vmatprep.mubr.bf16.mxu0 0
    %1705 = vmatmul.mubr.bf16.gmra.mrb[0].mxu0 %v1629
    %v1706 = vpop.f32.mrb[0].mxu0
    %v1707 = vadd.f32 0.0, %v1706
    %v1708 = vpop.f32.mrb[0].mxu0
    %v1709 = vpop.f32.mrb[0].mxu0
    %v1710 = vpop.f32.mrb[0].mxu0
    %1711 = vdwg.mxu0
    %v1712 = vsel %vm580, %v1667, -inf
    %v1713 = vrot.slane %v1712, 4
    %v1714 = vmax.f32 %v1712, %v1713
    %v1715 = vrot.slane %v1714, 2
    %v1716 = vmax.f32 %v1714, %v1715
    %v1717 = vrot.slane %v1716, 1
    %v1718 = vmax.f32 %v1716, %v1717
    %v1719 = vsel %vm580, %v1707, -inf
    %v1720 = vrot.slane %v1719, 4
    %v1721 = vmax.f32 %v1719, %v1720
    %v1722 = vrot.slane %v1721, 2
    %v1723 = vmax.f32 %v1721, %v1722
    %v1724 = vrot.slane %v1723, 1
    %v1725 = vmax.f32 %v1723, %v1724
    %v1726 = vsub.f32 %v1667, %v1718
    %v1727 = vsub.f32 %v1707, %v1725
    %v1728 = vmul.f32 %v1726, 1.442695
    %v1729 = vpow.pop %v1728
    %v1730 = vmul.f32 %v1727, 1.442695
    %v1731 = vpow.pop %v1730
    %v1732 = vsel %vm580, %v1729, 0.0
    %v1733 = vrot.slane %v1732, 4
    %v1734 = vadd.f32 %v1732, %v1733
    %v1735 = vrot.slane %v1734, 2
    %v1736 = vadd.f32 %v1734, %v1735
    %v1737 = vrot.slane %v1736, 1
    %v1738 = vadd.f32 %v1736, %v1737
    %v1739 = vsel %vm580, %v1731, 0.0
    %v1740 = vrot.slane %v1739, 4
    %v1741 = vadd.f32 %v1739, %v1740
    %v1742 = vrot.slane %v1741, 2
    %v1743 = vadd.f32 %v1741, %v1742
    %v1744 = vrot.slane %v1743, 1
    %v1745 = vadd.f32 %v1743, %v1744
    %v1746 = vrcp.pop %v1738
    %v1747 = vrcp.pop %v1745
    %v1748 = vmul.f32 %v1729, %v1746
    %v1749 = vmul.f32 %v1731, %v1747
    %v1750 = vadd.f32 %v1748, 1e-08
    %v1751 = vadd.f32 %v1749, 1e-08
    %v1752 = vsel %vm580, %v1750, 0.0
    %1753 = vadd.xlane.f32.xlu0 %v1752
    %v1754 = vpop.xlane.xlu0 %1753
    %v1755 = vsel %vm580, %v1751, 0.0
    %1756 = vadd.xlane.f32.xlu0 %v1755
    %v1757 = vpop.xlane.xlu0 %1756
    %v1758 = vrcp.pop %v1754
    %v1759 = vrcp.pop %v1757
    %v1760 = vmul.f32 %v1750, %v1758
    %v1761 = vmul.f32 %v1751, %v1759
    %v1762 = vpack.c.bf16 %v1760, %v1760
    %v1763 = vpack.c.bf16 %v1761, %v1761
    %v1765 = vsel %vm580, %v1762, 0
    %1767 = vmatprep.subr.bf16.mxu0 0
    %1768 = vmatpush1.bf16.msra.mxu0 %v349
    %1769 = vmatprep.subr.bf16.mxu0 0
    %1770 = vmatpush1.bf16.msra.mxu0 0
    %1771 = vmatprep.subr.bf16.mxu0 0
    %1772 = vmatpush1.bf16.msra.mxu0 0
    %1773 = vmatprep.subr.bf16.mxu0 0
    %1774 = vmatpush1.bf16.msra.mxu0 0
    %1775 = vmatprep.subr.bf16.mxu0 0
    %1776 = vmatpush1.bf16.msra.mxu0 0
    %1777 = vmatprep.subr.bf16.mxu0 0
    %1778 = vmatpush1.bf16.msra.mxu0 0
    %1779 = vmatprep.subr.bf16.mxu0 0
    %1780 = vmatpush1.bf16.msra.mxu0 0
    %1781 = vmatprep.subr.bf16.mxu0 0
    %1782 = vmatpush1.bf16.msra.mxu0 0
    %1783 = vmatprep.subr.bf16.mxu0 0
    %1784 = vmatpush1.bf16.msra.mxu0 0
    %1785 = vmatprep.subr.bf16.mxu0 0
    %1786 = vmatpush1.bf16.msra.mxu0 0
    %1787 = vmatprep.subr.bf16.mxu0 0
    %1788 = vmatpush1.bf16.msra.mxu0 0
    %1789 = vmatprep.subr.bf16.mxu0 0
    %1790 = vmatpush1.bf16.msra.mxu0 0
    %1791 = vmatprep.subr.bf16.mxu0 0
    %1792 = vmatpush1.bf16.msra.mxu0 0
    %1793 = vmatprep.subr.bf16.mxu0 0
    %1794 = vmatpush1.bf16.msra.mxu0 0
    %1795 = vmatprep.subr.bf16.mxu0 0
    %1796 = vmatpush1.bf16.msra.mxu0 0
    %1797 = vmatprep.subr.bf16.mxu0 0
    %1798 = vmatpush1.bf16.msra.mxu0 0
    %1799 = vmatprep.mubr.bf16.mxu0 0
    %1800 = vmatmul.mubr.bf16.gmra.mrb[0].mxu0 %v1765
    %v1801 = vpop.f32.mrb[0].mxu0
    %v1802 = vadd.f32 0.0, %v1801
    %v1803 = vpop.f32.mrb[0].mxu0
    %v1804 = vpop.f32.mrb[0].mxu0
    %v1805 = vpop.f32.mrb[0].mxu0
    %1806 = vdwg.mxu0
    %v1808 = vsel %vm580, %v1763, 0
    %1810 = vmatprep.subr.bf16.mxu0 0
    %1811 = vmatpush1.bf16.msra.mxu0 %v350
    %1812 = vmatprep.subr.bf16.mxu0 0
    %1813 = vmatpush1.bf16.msra.mxu0 0
    %1814 = vmatprep.subr.bf16.mxu0 0
    %1815 = vmatpush1.bf16.msra.mxu0 0
    %1816 = vmatprep.subr.bf16.mxu0 0
    %1817 = vmatpush1.bf16.msra.mxu0 0
    %1818 = vmatprep.subr.bf16.mxu0 0
    %1819 = vmatpush1.bf16.msra.mxu0 0
    %1820 = vmatprep.subr.bf16.mxu0 0
    %1821 = vmatpush1.bf16.msra.mxu0 0
    %1822 = vmatprep.subr.bf16.mxu0 0
    %1823 = vmatpush1.bf16.msra.mxu0 0
    %1824 = vmatprep.subr.bf16.mxu0 0
    %1825 = vmatpush1.bf16.msra.mxu0 0
    %1826 = vmatprep.subr.bf16.mxu0 0
    %1827 = vmatpush1.bf16.msra.mxu0 0
    %1828 = vmatprep.subr.bf16.mxu0 0
    %1829 = vmatpush1.bf16.msra.mxu0 0
    %1830 = vmatprep.subr.bf16.mxu0 0
    %1831 = vmatpush1.bf16.msra.mxu0 0
    %1832 = vmatprep.subr.bf16.mxu0 0
    %1833 = vmatpush1.bf16.msra.mxu0 0
    %1834 = vmatprep.subr.bf16.mxu0 0
    %1835 = vmatpush1.bf16.msra.mxu0 0
    %1836 = vmatprep.subr.bf16.mxu0 0
    %1837 = vmatpush1.bf16.msra.mxu0 0
    %1838 = vmatprep.subr.bf16.mxu0 0
    %1839 = vmatpush1.bf16.msra.mxu0 0
    %1840 = vmatprep.subr.bf16.mxu0 0
    %1841 = vmatpush1.bf16.msra.mxu0 0
    %1842 = vmatprep.mubr.bf16.mxu0 0
    %1843 = vmatmul.mubr.bf16.gmra.mrb[0].mxu0 %v1808
    %v1844 = vpop.f32.mrb[0].mxu0
    %v1845 = vadd.f32 0.0, %v1844
    %v1846 = vpop.f32.mrb[0].mxu0
    %v1847 = vpop.f32.mrb[0].mxu0
    %v1848 = vpop.f32.mrb[0].mxu0
    %1849 = vdwg.mxu0
    %v1850 = vpack.c.bf16 %v1845, %v1802
    %v1851 = vpack.c.bf16 %v1491, %v1490
    %v1852 = vld [vmem:[#allocation11] sm:$0xff]
    %v1853 = vld [vmem:[#allocation11 + $0x8] sm:$0xff]
    %v1854 = vld [vmem:[#allocation11 + $0x14] sm:$0xff]
    %v1855 = vld [vmem:[#allocation11 + $0x1c] sm:$0xff]
    %v1856 = vld [vmem:[#allocation11 + $0x28] sm:$0xff]
    %v1857 = vld [vmem:[#allocation11 + $0x30] sm:$0xff]
    %v1858 = vld [vmem:[#allocation11 + $0x3c] sm:$0xff]
    %v1859 = vld [vmem:[#allocation11 + $0x44] sm:$0xff]
    %v1860 = vld [vmem:[#allocation11 + $0x50] sm:$0xff]
    %v1861 = vld [vmem:[#allocation11 + $0x58] sm:$0xff]
    %v1862 = vld [vmem:[#allocation11 + $0x64] sm:$0xff]
    %v1863 = vld [vmem:[#allocation11 + $0x6c] sm:$0xff]
    %v1864 = vld [vmem:[#allocation11 + $0x78] sm:$0xff]
    %v1865 = vld [vmem:[#allocation11 + $0x80] sm:$0xff]
    %v1866 = vld [vmem:[#allocation11 + $0x8c] sm:$0xff]
    %v1867 = vld [vmem:[#allocation11 + $0x94] sm:$0xff]
    %v1868 = vld [vmem:[#allocation11 + $0xa0] sm:$0xff]
    %v1869 = vld [vmem:[#allocation11 + $0xa8] sm:$0xff]
    %v1870 = vld [vmem:[#allocation11 + $0xb4] sm:$0xff]
    %v1871 = vld [vmem:[#allocation11 + $0xbc] sm:$0xff]
    %v1872 = vld [vmem:[#allocation11 + $0xc8] sm:$0xff]
    %v1873 = vld [vmem:[#allocation11 + $0xd0] sm:$0xff]
    %v1874 = vld [vmem:[#allocation11 + $0xdc] sm:$0xff]
    %v1875 = vld [vmem:[#allocation11 + $0xe4] sm:$0xff]
    %v1876 = vld [vmem:[#allocation11 + $0xf0] sm:$0xff]
    %v1877 = vld [vmem:[#allocation11 + $0xf8] sm:$0xff]
    %v1878 = vld [vmem:[#allocation11 + $0x104] sm:$0xff]
    %v1879 = vld [vmem:[#allocation11 + $0x10c] sm:$0xff]
    %v1880 = vld [vmem:[#allocation11 + $0x118] sm:$0xff]
    %v1881 = vld [vmem:[#allocation11 + $0x120] sm:$0xff]
    %v1882 = vld [vmem:[#allocation11 + $0x12c] sm:$0xff]
    %v1883 = vld [vmem:[#allocation11 + $0x134] sm:$0xff]
    %v1884 = vld [vmem:[#allocation11 + $0x140] sm:$0xff]
    %v1885 = vld [vmem:[#allocation11 + $0x148] sm:$0xff]
    %v1886 = vld [vmem:[#allocation11 + $0x154] sm:$0xff]
    %v1887 = vld [vmem:[#allocation11 + $0x15c] sm:$0xff]
    %v1888 = vld [vmem:[#allocation11 + $0x168] sm:$0xff]
    %v1889 = vld [vmem:[#allocation11 + $0x170] sm:$0xff]
    %v1890 = vld [vmem:[#allocation11 + $0x17c] sm:$0xff]
    %v1891 = vld [vmem:[#allocation11 + $0x184] sm:$0xff]
    %v1892 = vld [vmem:[#allocation11 + $0x190] sm:$0xff]
    %v1893 = vld [vmem:[#allocation11 + $0x198] sm:$0xff]
    %v1894 = vld [vmem:[#allocation11 + $0x1a4] sm:$0xff]
    %v1895 = vld [vmem:[#allocation11 + $0x1ac] sm:$0xff]
    %v1896 = vld [vmem:[#allocation11 + $0x1b8] sm:$0xff]
    %v1897 = vld [vmem:[#allocation11 + $0x1c0] sm:$0xff]
    %v1898 = vld [vmem:[#allocation11 + $0x1cc] sm:$0xff]
    %v1899 = vld [vmem:[#allocation11 + $0x1d4] sm:$0xff]
    %v1900 = vld [vmem:[#allocation11 + $0x1e0] sm:$0xff]
    %v1901 = vld [vmem:[#allocation11 + $0x1e8] sm:$0xff]
    %v1902 = vld [vmem:[#allocation11 + $0x1f4] sm:$0xff]
    %v1903 = vld [vmem:[#allocation11 + $0x1fc] sm:$0xff]
    %v1904 = vld [vmem:[#allocation11 + $0x208] sm:$0xff]
    %v1905 = vld [vmem:[#allocation11 + $0x210] sm:$0xff]
    %v1906 = vld [vmem:[#allocation11 + $0x21c] sm:$0xff]
    %v1907 = vld [vmem:[#allocation11 + $0x224] sm:$0xff]
    %v1908 = vld [vmem:[#allocation11 + $0x230] sm:$0xff]
    %v1909 = vld [vmem:[#allocation11 + $0x238] sm:$0xff]
    %v1910 = vld [vmem:[#allocation11 + $0x244] sm:$0xff]
    %v1911 = vld [vmem:[#allocation11 + $0x24c] sm:$0xff]
    %v1912 = vld [vmem:[#allocation11 + $0x258] sm:$0xff]
    %v1913 = vld [vmem:[#allocation11 + $0x260] sm:$0xff]
    %v1914 = vld [vmem:[#allocation11 + $0x26c] sm:$0xff]
    %v1915 = vld [vmem:[#allocation11 + $0x274] sm:$0xff]
    %v1980 = vunpack.c.l.b16 %v1852
    %v1981 = vunpack.c.h.b16 %v1852
    %v1982 = vunpack.c.l.b16 %v1853
    %v1983 = vunpack.c.h.b16 %v1853
    %v1984 = vunpack.c.l.b16 %v1854
    %v1985 = vunpack.c.h.b16 %v1854
    %v1986 = vunpack.c.l.b16 %v1855
    %v1987 = vunpack.c.h.b16 %v1855
    %v1988 = vunpack.c.l.b16 %v1856
    %v1989 = vunpack.c.h.b16 %v1856
    %v1990 = vunpack.c.l.b16 %v1857
    %v1991 = vunpack.c.h.b16 %v1857
    %v1992 = vunpack.c.l.b16 %v1858
    %v1993 = vunpack.c.h.b16 %v1858
    %v1994 = vunpack.c.l.b16 %v1859
    %v1995 = vunpack.c.h.b16 %v1859
    %v1996 = vunpack.c.l.b16 %v1860
    %v1997 = vunpack.c.h.b16 %v1860
    %v1998 = vunpack.c.l.b16 %v1861
    %v1999 = vunpack.c.h.b16 %v1861
    %v2000 = vunpack.c.l.b16 %v1862
    %v2001 = vunpack.c.h.b16 %v1862
    %v2002 = vunpack.c.l.b16 %v1863
    %v2003 = vunpack.c.h.b16 %v1863
    %v2004 = vunpack.c.l.b16 %v1864
    %v2005 = vunpack.c.h.b16 %v1864
    %v2006 = vunpack.c.l.b16 %v1865
    %v2007 = vunpack.c.h.b16 %v1865
    %v2008 = vunpack.c.l.b16 %v1866
    %v2009 = vunpack.c.h.b16 %v1866
    %v2010 = vunpack.c.l.b16 %v1867
    %v2011 = vunpack.c.h.b16 %v1867
    %v2012 = vunpack.c.l.b16 %v1868
    %v2013 = vunpack.c.h.b16 %v1868
    %v2014 = vunpack.c.l.b16 %v1869
    %v2015 = vunpack.c.h.b16 %v1869
    %v2016 = vunpack.c.l.b16 %v1870
    %v2017 = vunpack.c.h.b16 %v1870
    %v2018 = vunpack.c.l.b16 %v1871
    %v2019 = vunpack.c.h.b16 %v1871
    %v2020 = vunpack.c.l.b16 %v1872
    %v2021 = vunpack.c.h.b16 %v1872
    %v2022 = vunpack.c.l.b16 %v1873
    %v2023 = vunpack.c.h.b16 %v1873
    %v2024 = vunpack.c.l.b16 %v1874
    %v2025 = vunpack.c.h.b16 %v1874
    %v2026 = vunpack.c.l.b16 %v1875
    %v2027 = vunpack.c.h.b16 %v1875
    %v2028 = vunpack.c.l.b16 %v1876
    %v2029 = vunpack.c.h.b16 %v1876
    %v2030 = vunpack.c.l.b16 %v1877
    %v2031 = vunpack.c.h.b16 %v1877
    %v2032 = vunpack.c.l.b16 %v1878
    %v2033 = vunpack.c.h.b16 %v1878
    %v2034 = vunpack.c.l.b16 %v1879
    %v2035 = vunpack.c.h.b16 %v1879
    %v2036 = vunpack.c.l.b16 %v1880
    %v2037 = vunpack.c.h.b16 %v1880
    %v2038 = vunpack.c.l.b16 %v1881
    %v2039 = vunpack.c.h.b16 %v1881
    %v2040 = vunpack.c.l.b16 %v1882
    %v2041 = vunpack.c.h.b16 %v1882
    %v2042 = vunpack.c.l.b16 %v1883
    %v2043 = vunpack.c.h.b16 %v1883
    %v2044 = vunpack.c.l.b16 %v1884
    %v2045 = vunpack.c.h.b16 %v1884
    %v2046 = vunpack.c.l.b16 %v1885
    %v2047 = vunpack.c.h.b16 %v1885
    %v2048 = vunpack.c.l.b16 %v1886
    %v2049 = vunpack.c.h.b16 %v1886
    %v2050 = vunpack.c.l.b16 %v1887
    %v2051 = vunpack.c.h.b16 %v1887
    %v2052 = vunpack.c.l.b16 %v1888
    %v2053 = vunpack.c.h.b16 %v1888
    %v2054 = vunpack.c.l.b16 %v1889
    %v2055 = vunpack.c.h.b16 %v1889
    %v2056 = vunpack.c.l.b16 %v1890
    %v2057 = vunpack.c.h.b16 %v1890
    %v2058 = vunpack.c.l.b16 %v1891
    %v2059 = vunpack.c.h.b16 %v1891
    %v2060 = vunpack.c.l.b16 %v1892
    %v2061 = vunpack.c.h.b16 %v1892
    %v2062 = vunpack.c.l.b16 %v1893
    %v2063 = vunpack.c.h.b16 %v1893
    %v2064 = vunpack.c.l.b16 %v1894
    %v2065 = vunpack.c.h.b16 %v1894
    %v2066 = vunpack.c.l.b16 %v1895
    %v2067 = vunpack.c.h.b16 %v1895
    %v2068 = vunpack.c.l.b16 %v1896
    %v2069 = vunpack.c.h.b16 %v1896
    %v2070 = vunpack.c.l.b16 %v1897
    %v2071 = vunpack.c.h.b16 %v1897
    %v2072 = vunpack.c.l.b16 %v1898
    %v2073 = vunpack.c.h.b16 %v1898
    %v2074 = vunpack.c.l.b16 %v1899
    %v2075 = vunpack.c.h.b16 %v1899
    %v2076 = vunpack.c.l.b16 %v1900
    %v2077 = vunpack.c.h.b16 %v1900
    %v2078 = vunpack.c.l.b16 %v1901
    %v2079 = vunpack.c.h.b16 %v1901
    %v2080 = vunpack.c.l.b16 %v1902
    %v2081 = vunpack.c.h.b16 %v1902
    %v2082 = vunpack.c.l.b16 %v1903
    %v2083 = vunpack.c.h.b16 %v1903
    %v2084 = vunpack.c.l.b16 %v1904
    %v2085 = vunpack.c.h.b16 %v1904
    %v2086 = vunpack.c.l.b16 %v1905
    %v2087 = vunpack.c.h.b16 %v1905
    %v2088 = vunpack.c.l.b16 %v1906
    %v2089 = vunpack.c.h.b16 %v1906
    %v2090 = vunpack.c.l.b16 %v1907
    %v2091 = vunpack.c.h.b16 %v1907
    %v2092 = vunpack.c.l.b16 %v1908
    %v2093 = vunpack.c.h.b16 %v1908
    %v2094 = vunpack.c.l.b16 %v1909
    %v2095 = vunpack.c.h.b16 %v1909
    %v2096 = vunpack.c.l.b16 %v1910
    %v2097 = vunpack.c.h.b16 %v1910
    %v2098 = vunpack.c.l.b16 %v1911
    %v2099 = vunpack.c.h.b16 %v1911
    %v2100 = vunpack.c.l.b16 %v1912
    %v2101 = vunpack.c.h.b16 %v1912
    %v2102 = vunpack.c.l.b16 %v1913
    %v2103 = vunpack.c.h.b16 %v1913
    %v2104 = vunpack.c.l.b16 %v1914
    %v2105 = vunpack.c.h.b16 %v1914
    %v2106 = vunpack.c.l.b16 %v1915
    %v2107 = vunpack.c.h.b16 %v1915
    %v2108 = vpack.c.b16 %v1984, %v1980
    %v2109 = vpack.c.b16 %v1985, %v1981
    %v2110 = vpack.c.b16 %v1986, %v1982
    %v2111 = vpack.c.b16 %v1987, %v1983
    %v2112 = vpack.c.b16 %v1992, %v1988
    %v2113 = vpack.c.b16 %v1993, %v1989
    %v2114 = vpack.c.b16 %v1994, %v1990
    %v2115 = vpack.c.b16 %v1995, %v1991
    %v2116 = vpack.c.b16 %v2000, %v1996
    %v2117 = vpack.c.b16 %v2001, %v1997
    %v2118 = vpack.c.b16 %v2002, %v1998
    %v2119 = vpack.c.b16 %v2003, %v1999
    %v2120 = vpack.c.b16 %v2008, %v2004
    %v2121 = vpack.c.b16 %v2009, %v2005
    %v2122 = vpack.c.b16 %v2010, %v2006
    %v2123 = vpack.c.b16 %v2011, %v2007
    %v2124 = vpack.c.b16 %v2016, %v2012
    %v2125 = vpack.c.b16 %v2017, %v2013
    %v2126 = vpack.c.b16 %v2018, %v2014
    %v2127 = vpack.c.b16 %v2019, %v2015
    %v2128 = vpack.c.b16 %v2024, %v2020
    %v2129 = vpack.c.b16 %v2025, %v2021
    %v2130 = vpack.c.b16 %v2026, %v2022
    %v2131 = vpack.c.b16 %v2027, %v2023
    %v2132 = vpack.c.b16 %v2032, %v2028
    %v2133 = vpack.c.b16 %v2033, %v2029
    %v2134 = vpack.c.b16 %v2034, %v2030
    %v2135 = vpack.c.b16 %v2035, %v2031
    %v2136 = vpack.c.b16 %v2040, %v2036
    %v2137 = vpack.c.b16 %v2041, %v2037
    %v2138 = vpack.c.b16 %v2042, %v2038
    %v2139 = vpack.c.b16 %v2043, %v2039
    %v2140 = vpack.c.b16 %v2048, %v2044
    %v2141 = vpack.c.b16 %v2049, %v2045
    %v2142 = vpack.c.b16 %v2050, %v2046
    %v2143 = vpack.c.b16 %v2051, %v2047
    %v2144 = vpack.c.b16 %v2056, %v2052
    %v2145 = vpack.c.b16 %v2057, %v2053
    %v2146 = vpack.c.b16 %v2058, %v2054
    %v2147 = vpack.c.b16 %v2059, %v2055
    %v2148 = vpack.c.b16 %v2064, %v2060
    %v2149 = vpack.c.b16 %v2065, %v2061
    %v2150 = vpack.c.b16 %v2066, %v2062
    %v2151 = vpack.c.b16 %v2067, %v2063
    %v2152 = vpack.c.b16 %v2072, %v2068
    %v2153 = vpack.c.b16 %v2073, %v2069
    %v2154 = vpack.c.b16 %v2074, %v2070
    %v2155 = vpack.c.b16 %v2075, %v2071
    %v2156 = vpack.c.b16 %v2080, %v2076
    %v2157 = vpack.c.b16 %v2081, %v2077
    %v2158 = vpack.c.b16 %v2082, %v2078
    %v2159 = vpack.c.b16 %v2083, %v2079
    %v2160 = vpack.c.b16 %v2088, %v2084
    %v2161 = vpack.c.b16 %v2089, %v2085
    %v2162 = vpack.c.b16 %v2090, %v2086
    %v2163 = vpack.c.b16 %v2091, %v2087
    %v2164 = vpack.c.b16 %v2096, %v2092
    %v2165 = vpack.c.b16 %v2097, %v2093
    %v2166 = vpack.c.b16 %v2098, %v2094
    %v2167 = vpack.c.b16 %v2099, %v2095
    %v2168 = vpack.c.b16 %v2104, %v2100
    %v2169 = vpack.c.b16 %v2105, %v2101
    %v2170 = vpack.c.b16 %v2106, %v2102
    %v2171 = vpack.c.b16 %v2107, %v2103
    %2236 = vmatprep.subr.bf16.mxu0 %v2109
    %2237 = vmatpush1.bf16.msra.mxu0 %v2108
    %2238 = vmatprep.subr.bf16.mxu0 %v2113
    %2239 = vmatpush1.bf16.msra.mxu0 %v2112
    %2240 = vmatprep.subr.bf16.mxu0 %v2117
    %2241 = vmatpush1.bf16.msra.mxu0 %v2116
    %2242 = vmatprep.subr.bf16.mxu0 %v2121
    %2243 = vmatpush1.bf16.msra.mxu0 %v2120
    %2244 = vmatprep.subr.bf16.mxu0 %v2125
    %2245 = vmatpush1.bf16.msra.mxu0 %v2124
    %2246 = vmatprep.subr.bf16.mxu0 %v2129
    %2247 = vmatpush1.bf16.msra.mxu0 %v2128
    %2248 = vmatprep.subr.bf16.mxu0 %v2133
    %2249 = vmatpush1.bf16.msra.mxu0 %v2132
    %2250 = vmatprep.subr.bf16.mxu0 %v2137
    %2251 = vmatpush1.bf16.msra.mxu0 %v2136
    %2252 = vmatprep.subr.bf16.mxu0 %v2141
    %2253 = vmatpush1.bf16.msra.mxu0 %v2140
    %2254 = vmatprep.subr.bf16.mxu0 %v2145
    %2255 = vmatpush1.bf16.msra.mxu0 %v2144
    %2256 = vmatprep.subr.bf16.mxu0 %v2149
    %2257 = vmatpush1.bf16.msra.mxu0 %v2148
    %2258 = vmatprep.subr.bf16.mxu0 %v2153
    %2259 = vmatpush1.bf16.msra.mxu0 %v2152
    %2260 = vmatprep.subr.bf16.mxu0 %v2157
    %2261 = vmatpush1.bf16.msra.mxu0 %v2156
    %2262 = vmatprep.subr.bf16.mxu0 %v2161
    %2263 = vmatpush1.bf16.msra.mxu0 %v2160
    %2264 = vmatprep.subr.bf16.mxu0 %v2165
    %2265 = vmatpush1.bf16.msra.mxu0 %v2164
    %2266 = vmatprep.subr.bf16.mxu0 %v2169
    %2267 = vmatpush1.bf16.msra.mxu0 %v2168
    %2268 = vmatprep.mubr.bf16.mxu0 %v1851
    %2269 = vmatmul.mubr.bf16.gmra.mrb[0].mxu0 %v1850
    %v2270 = vpop.f32.mrb[0].mxu0
    %v2271 = vadd.f32 0.0, %v2270
    %v2272 = vpop.f32.mrb[0].mxu0
    %v2273 = vadd.f32 0.0, %v2272
    %v2274 = vpop.f32.mrb[0].mxu0
    %v2275 = vadd.f32 0.0, %v2274
    %v2276 = vpop.f32.mrb[0].mxu0
    %v2277 = vadd.f32 0.0, %v2276
    %2278 = vdwg.mxu0
    %2279 = vmatprep.subr.bf16.mxu0 %v2111
    %2280 = vmatpush1.bf16.msra.mxu0 %v2110
    %2281 = vmatprep.subr.bf16.mxu0 %v2115
    %2282 = vmatpush1.bf16.msra.mxu0 %v2114
    %2283 = vmatprep.subr.bf16.mxu0 %v2119
    %2284 = vmatpush1.bf16.msra.mxu0 %v2118
    %2285 = vmatprep.subr.bf16.mxu0 %v2123
    %2286 = vmatpush1.bf16.msra.mxu0 %v2122
    %2287 = vmatprep.subr.bf16.mxu0 %v2127
    %2288 = vmatpush1.bf16.msra.mxu0 %v2126
    %2289 = vmatprep.subr.bf16.mxu0 %v2131
    %2290 = vmatpush1.bf16.msra.mxu0 %v2130
    %2291 = vmatprep.subr.bf16.mxu0 %v2135
    %2292 = vmatpush1.bf16.msra.mxu0 %v2134
    %2293 = vmatprep.subr.bf16.mxu0 %v2139
    %2294 = vmatpush1.bf16.msra.mxu0 %v2138
    %2295 = vmatprep.subr.bf16.mxu0 %v2143
    %2296 = vmatpush1.bf16.msra.mxu0 %v2142
    %2297 = vmatprep.subr.bf16.mxu0 %v2147
    %2298 = vmatpush1.bf16.msra.mxu0 %v2146
    %2299 = vmatprep.subr.bf16.mxu0 %v2151
    %2300 = vmatpush1.bf16.msra.mxu0 %v2150
    %2301 = vmatprep.subr.bf16.mxu0 %v2155
    %2302 = vmatpush1.bf16.msra.mxu0 %v2154
    %2303 = vmatprep.subr.bf16.mxu0 %v2159
    %2304 = vmatpush1.bf16.msra.mxu0 %v2158
    %2305 = vmatprep.subr.bf16.mxu0 %v2163
    %2306 = vmatpush1.bf16.msra.mxu0 %v2162
    %2307 = vmatprep.subr.bf16.mxu0 %v2167
    %2308 = vmatpush1.bf16.msra.mxu0 %v2166
    %2309 = vmatprep.subr.bf16.mxu0 %v2171
    %2310 = vmatpush1.bf16.msra.mxu0 %v2170
    %2311 = vmatprep.mubr.bf16.mxu0 %v1851
    %2312 = vmatmul.mubr.bf16.gmra.mrb[0].mxu0 %v1850
    %v2313 = vpop.f32.mrb[0].mxu0
    %v2314 = vadd.f32 0.0, %v2313
    %v2315 = vpop.f32.mrb[0].mxu0
    %v2316 = vadd.f32 0.0, %v2315
    %v2317 = vpop.f32.mrb[0].mxu0
    %v2318 = vadd.f32 0.0, %v2317
    %v2319 = vpop.f32.mrb[0].mxu0
    %v2320 = vadd.f32 0.0, %v2319
    %2321 = vdwg.mxu0
    %v2322 = vadd.f32 %v2271, %v1195
    %v2323 = vadd.f32 %v2273, %v1199
    %v2324 = vadd.f32 %v2275, %v1195
    %v2325 = vadd.f32 %v2277, %v1199
    %v2326 = vxor.u32 %v2322, 2147483648
    %v2327 = vxor.u32 %v2323, 2147483648
    %v2328 = vxor.u32 %v2324, 2147483648
    %v2329 = vxor.u32 %v2325, 2147483648
    %v2330 = vmul.f32 %v2326, 1.442695
    %v2331 = vpow.pop %v2330
    %v2332 = vmul.f32 %v2327, 1.442695
    %v2333 = vpow.pop %v2332
    %v2334 = vmul.f32 %v2328, 1.442695
    %v2335 = vpow.pop %v2334
    %v2336 = vmul.f32 %v2329, 1.442695
    %v2337 = vpow.pop %v2336
    %v2338 = vadd.f32 %v2331, 1.0
    %v2339 = vadd.f32 %v2333, 1.0
    %v2340 = vadd.f32 %v2335, 1.0
    %v2341 = vadd.f32 %v2337, 1.0
    %v2342 = vrcp.pop %v2338
    %v2343 = vmul.f32 1.0, %v2342
    %v2344 = vrcp.pop %v2339
    %v2345 = vmul.f32 1.0, %v2344
    %v2346 = vrcp.pop %v2340
    %v2347 = vmul.f32 1.0, %v2346
    %v2348 = vrcp.pop %v2341
    %v2349 = vmul.f32 1.0, %v2348
    %v2350 = vadd.f32 %v2314, %v123
    %v2351 = vadd.f32 %v2318, %v123
    %v2352 = vadd.f32 %v2316, %v124
    %v2353 = vadd.f32 %v2320, %v124
    %v2354 = vmul.f32 %v2343, %v2352
    %v2355 = vmul.f32 %v2347, %v2353
    %v2356 = vadd.f32 %v2350, %v2354
    %v2357 = vadd.f32 %v2351, %v2355
    %v2358 = vtanh.pop %v2356
    %v2359 = vtanh.pop %v2357
    %v2360 = vsub.f32 1.0, %v2345
    %v2361 = vsub.f32 1.0, %v2349
    %v2362 = vmul.f32 %v2360, %v2358
    %v2363 = vmul.f32 %v2361, %v2359
    %v2364 = vmul.f32 %v2345, %v1490
    %v2365 = vmul.f32 %v2349, %v1491
    %v2366 = vadd.f32 %v2362, %v2364
    %v2367 = vadd.f32 %v2363, %v2365
    %2368 = vadd.xlane.f32.xlu0 %v2366
    %v2369 = vpop.xlane.xlu0 %2368
    %2370 = vadd.xlane.f32.xlu0 %v2367
    %v2371 = vpop.xlane.xlu0 %2370
    %v2372 = vmul.f32 %v2369, %v363
    %v2373 = vmul.f32 %v2371, %v363
    %v2374 = vsub.f32 %v2366, %v2372
    %v2375 = vsub.f32 %v2367, %v2373
    %v2376 = vmul.f32 %v2374, %v2374
    %v2377 = vmul.f32 %v2375, %v2375
    %2378 = vadd.xlane.f32.xlu0 %v2376
    %v2379 = vpop.xlane.xlu0 %2378
    %2380 = vadd.xlane.f32.xlu0 %v2377
    %v2381 = vpop.xlane.xlu0 %2380
    %v2382 = vmul.f32 %v2379, %v363
    %v2383 = vmul.f32 %v2381, %v363
    %v2384 = vadd.f32 %v2382, 1e-05
    %v2385 = vadd.f32 %v2383, 1e-05
    %v2386 = vrsqrt.pop %v2384
    %v2387 = vrsqrt.pop %v2385
    %v2388 = vmul.f32 %v2374, %v2386
    %v2389 = vmul.f32 %v2375, %v2387
    %v2390 = vmul.f32 %v2388, %v115
    %v2391 = vmul.f32 %v2389, %v115
    %v2392 = vadd.f32 %v2390, %v116
    %v2393 = vadd.f32 %v2391, %v116
    %v2394 = vpack.c.bf16 %v2393, %v2392
    %v2395 = vld [vmem:[#allocation8 + $0x4] sm:$0xf]
    %v2396 = vld [vmem:[#allocation8 + $0x18] sm:$0xf]
    %v2397 = vld [vmem:[#allocation8 + $0x2c] sm:$0xf]
    %v2398 = vld [vmem:[#allocation8 + $0x40] sm:$0xf]
    %v2399 = vld [vmem:[#allocation8 + $0x54] sm:$0xf]
    %v2400 = vld [vmem:[#allocation8 + $0x68] sm:$0xf]
    %v2401 = vld [vmem:[#allocation8 + $0x7c] sm:$0xf]
    %v2402 = vld [vmem:[#allocation8 + $0x90] sm:$0xf]
    %v2403 = vld [vmem:[#allocation8 + $0xa4] sm:$0xf]
    %v2404 = vld [vmem:[#allocation8 + $0xb8] sm:$0xf]
    %v2405 = vld [vmem:[#allocation8 + $0xcc] sm:$0xf]
    %v2406 = vld [vmem:[#allocation8 + $0xe0] sm:$0xf]
    %v2407 = vld [vmem:[#allocation8 + $0xf4] sm:$0xf]
    %v2408 = vld [vmem:[#allocation8 + $0x108] sm:$0xf]
    %v2409 = vld [vmem:[#allocation8 + $0x11c] sm:$0xf]
    %v2410 = vld [vmem:[#allocation8 + $0x130] sm:$0xf]
    %v2427 = vunpack.c.l.b16 %v2395
    %v2428 = vunpack.c.l.b16 %v2396
    %v2429 = vunpack.c.l.b16 %v2397
    %v2430 = vunpack.c.l.b16 %v2398
    %v2431 = vunpack.c.l.b16 %v2399
    %v2432 = vunpack.c.l.b16 %v2400
    %v2433 = vunpack.c.l.b16 %v2401
    %v2434 = vunpack.c.l.b16 %v2402
    %v2435 = vunpack.c.l.b16 %v2403
    %v2436 = vunpack.c.l.b16 %v2404
    %v2437 = vunpack.c.l.b16 %v2405
    %v2438 = vunpack.c.l.b16 %v2406
    %v2439 = vunpack.c.l.b16 %v2407
    %v2440 = vunpack.c.l.b16 %v2408
    %v2441 = vunpack.c.l.b16 %v2409
    %v2442 = vunpack.c.l.b16 %v2410
    %v2443 = vpack.c.b16 %v2428, %v2427
    %v2444 = vpack.c.b16 %v2430, %v2429
    %v2445 = vpack.c.b16 %v2432, %v2431
    %v2446 = vpack.c.b16 %v2434, %v2433
    %v2447 = vpack.c.b16 %v2436, %v2435
    %v2448 = vpack.c.b16 %v2438, %v2437
    %v2449 = vpack.c.b16 %v2440, %v2439
    %v2450 = vpack.c.b16 %v2442, %v2441
    %2459 = vmatprep.subr.bf16.mxu0 0
    %2460 = vmatpush1.bf16.msra.mxu0 %v2443
    %2461 = vmatprep.subr.bf16.mxu0 0
    %2462 = vmatpush1.bf16.msra.mxu0 %v2444
    %2463 = vmatprep.subr.bf16.mxu0 0
    %2464 = vmatpush1.bf16.msra.mxu0 %v2445
    %2465 = vmatprep.subr.bf16.mxu0 0
    %2466 = vmatpush1.bf16.msra.mxu0 %v2446
    %2467 = vmatprep.subr.bf16.mxu0 0
    %2468 = vmatpush1.bf16.msra.mxu0 %v2447
    %2469 = vmatprep.subr.bf16.mxu0 0
    %2470 = vmatpush1.bf16.msra.mxu0 %v2448
    %2471 = vmatprep.subr.bf16.mxu0 0
    %2472 = vmatpush1.bf16.msra.mxu0 %v2449
    %2473 = vmatprep.subr.bf16.mxu0 0
    %2474 = vmatpush1.bf16.msra.mxu0 %v2450
    %2475 = vmatprep.subr.bf16.mxu0 0
    %2476 = vmatpush1.bf16.msra.mxu0 0
    %2477 = vmatprep.subr.bf16.mxu0 0
    %2478 = vmatpush1.bf16.msra.mxu0 0
    %2479 = vmatprep.subr.bf16.mxu0 0
    %2480 = vmatpush1.bf16.msra.mxu0 0
    %2481 = vmatprep.subr.bf16.mxu0 0
    %2482 = vmatpush1.bf16.msra.mxu0 0
    %2483 = vmatprep.subr.bf16.mxu0 0
    %2484 = vmatpush1.bf16.msra.mxu0 0
    %2485 = vmatprep.subr.bf16.mxu0 0
    %2486 = vmatpush1.bf16.msra.mxu0 0
    %2487 = vmatprep.subr.bf16.mxu0 0
    %2488 = vmatpush1.bf16.msra.mxu0 0
    %2489 = vmatprep.subr.bf16.mxu0 0
    %2490 = vmatpush1.bf16.msra.mxu0 0
    %2491 = vmatprep.mubr.bf16.mxu0 0
    %2492 = vmatmul.mubr.bf16.gmra.mrb[0].mxu0 %v2394
    %v2493 = vpop.f32.mrb[0].mxu0
    %v2494 = vadd.f32 %v125, %v2493
    %v2495 = vpop.f32.mrb[0].mxu0
    %v2496 = vpop.f32.mrb[0].mxu0
    %v2497 = vadd.f32 %v125, %v2496
    %v2498 = vpop.f32.mrb[0].mxu0
    %2499 = vdwg.mxu0
    %v2500 = vmax.f32 %v2494, 0.0
    %v2501 = vmax.f32 %v2497, 0.0
    %v2502 = vpack.c.bf16 %v2501, %v2500
    %v2503 = vld [vmem:[#allocation8 + $0x8] sm:$0xf]
    %v2504 = vld [vmem:[#allocation8 + $0x1c] sm:$0xf]
    %v2505 = vld [vmem:[#allocation8 + $0x30] sm:$0xf]
    %v2506 = vld [vmem:[#allocation8 + $0x44] sm:$0xf]
    %v2507 = vld [vmem:[#allocation8 + $0x58] sm:$0xf]
    %v2508 = vld [vmem:[#allocation8 + $0x6c] sm:$0xf]
    %v2509 = vld [vmem:[#allocation8 + $0x80] sm:$0xf]
    %v2510 = vld [vmem:[#allocation8 + $0x94] sm:$0xf]
    %v2511 = vld [vmem:[#allocation8 + $0xa8] sm:$0xf]
    %v2512 = vld [vmem:[#allocation8 + $0xbc] sm:$0xf]
    %v2513 = vld [vmem:[#allocation8 + $0xd0] sm:$0xf]
    %v2514 = vld [vmem:[#allocation8 + $0xe4] sm:$0xf]
    %v2515 = vld [vmem:[#allocation8 + $0xf8] sm:$0xf]
    %v2516 = vld [vmem:[#allocation8 + $0x10c] sm:$0xf]
    %v2517 = vld [vmem:[#allocation8 + $0x120] sm:$0xf]
    %v2518 = vld [vmem:[#allocation8 + $0x134] sm:$0xf]
    %v2535 = vunpack.c.l.b16 %v2503
    %v2536 = vunpack.c.l.b16 %v2504
    %v2537 = vunpack.c.l.b16 %v2505
    %v2538 = vunpack.c.l.b16 %v2506
    %v2539 = vunpack.c.l.b16 %v2507
    %v2540 = vunpack.c.l.b16 %v2508
    %v2541 = vunpack.c.l.b16 %v2509
    %v2542 = vunpack.c.l.b16 %v2510
    %v2543 = vunpack.c.l.b16 %v2511
    %v2544 = vunpack.c.l.b16 %v2512
    %v2545 = vunpack.c.l.b16 %v2513
    %v2546 = vunpack.c.l.b16 %v2514
    %v2547 = vunpack.c.l.b16 %v2515
    %v2548 = vunpack.c.l.b16 %v2516
    %v2549 = vunpack.c.l.b16 %v2517
    %v2550 = vunpack.c.l.b16 %v2518
    %v2551 = vpack.c.b16 %v2536, %v2535
    %v2552 = vpack.c.b16 %v2538, %v2537
    %v2553 = vpack.c.b16 %v2540, %v2539
    %v2554 = vpack.c.b16 %v2542, %v2541
    %v2555 = vpack.c.b16 %v2544, %v2543
    %v2556 = vpack.c.b16 %v2546, %v2545
    %v2557 = vpack.c.b16 %v2548, %v2547
    %v2558 = vpack.c.b16 %v2550, %v2549
    %2567 = vmatprep.subr.bf16.mxu0 0
    %2568 = vmatpush1.bf16.msra.mxu0 %v2551
    %2569 = vmatprep.subr.bf16.mxu0 0
    %2570 = vmatpush1.bf16.msra.mxu0 %v2552
    %2571 = vmatprep.subr.bf16.mxu0 0
    %2572 = vmatpush1.bf16.msra.mxu0 %v2553
    %2573 = vmatprep.subr.bf16.mxu0 0
    %2574 = vmatpush1.bf16.msra.mxu0 %v2554
    %2575 = vmatprep.subr.bf16.mxu0 0
    %2576 = vmatpush1.bf16.msra.mxu0 %v2555
    %2577 = vmatprep.subr.bf16.mxu0 0
    %2578 = vmatpush1.bf16.msra.mxu0 %v2556
    %2579 = vmatprep.subr.bf16.mxu0 0
    %2580 = vmatpush1.bf16.msra.mxu0 %v2557
    %2581 = vmatprep.subr.bf16.mxu0 0
    %2582 = vmatpush1.bf16.msra.mxu0 %v2558
    %2583 = vmatprep.subr.bf16.mxu0 0
    %2584 = vmatpush1.bf16.msra.mxu0 0
    %2585 = vmatprep.subr.bf16.mxu0 0
    %2586 = vmatpush1.bf16.msra.mxu0 0
    %2587 = vmatprep.subr.bf16.mxu0 0
    %2588 = vmatpush1.bf16.msra.mxu0 0
    %2589 = vmatprep.subr.bf16.mxu0 0
    %2590 = vmatpush1.bf16.msra.mxu0 0
    %2591 = vmatprep.subr.bf16.mxu0 0
    %2592 = vmatpush1.bf16.msra.mxu0 0
    %2593 = vmatprep.subr.bf16.mxu0 0
    %2594 = vmatpush1.bf16.msra.mxu0 0
    %2595 = vmatprep.subr.bf16.mxu0 0
    %2596 = vmatpush1.bf16.msra.mxu0 0
    %2597 = vmatprep.subr.bf16.mxu0 0
    %2598 = vmatpush1.bf16.msra.mxu0 0
    %2599 = vmatprep.mubr.bf16.mxu0 0
    %2600 = vmatmul.mubr.bf16.gmra.mrb[0].mxu0 %v2502
    %v2601 = vpop.f32.mrb[0].mxu0
    %v2602 = vadd.f32 0.0, %v2601
    %v2603 = vpop.f32.mrb[0].mxu0
    %v2604 = vpop.f32.mrb[0].mxu0
    %v2605 = vadd.f32 0.0, %v2604
    %v2606 = vpop.f32.mrb[0].mxu0
    %2607 = vdwg.mxu0
    %v2608 = vadd.f32 %v2366, %v2602
    %v2609 = vadd.f32 %v2367, %v2605
    %v2610 = vadd.f32 %v2608, %v126
    %v2611 = vadd.f32 %v2609, %v126
    %2612 = vadd.xlane.f32.xlu0 %v2610
    %v2613 = vpop.xlane.xlu0 %2612
    %2614 = vadd.xlane.f32.xlu0 %v2611
    %v2615 = vpop.xlane.xlu0 %2614
    %v2616 = vmul.f32 %v2613, %v363
    %v2617 = vmul.f32 %v2615, %v363
    %v2618 = vsub.f32 %v2610, %v2616
    %v2619 = vsub.f32 %v2611, %v2617
    %v2620 = vmul.f32 %v2618, %v2618
    %v2621 = vmul.f32 %v2619, %v2619
    %2622 = vadd.xlane.f32.xlu0 %v2620
    %v2623 = vpop.xlane.xlu0 %2622
    %2624 = vadd.xlane.f32.xlu0 %v2621
    %v2625 = vpop.xlane.xlu0 %2624
    %v2626 = vmul.f32 %v2623, %v363
    %v2627 = vmul.f32 %v2625, %v363
    %v2628 = vadd.f32 %v2626, 1e-05
    %v2629 = vadd.f32 %v2627, 1e-05
    %v2630 = vrsqrt.pop %v2628
    %v2631 = vrsqrt.pop %v2629
    %v2632 = vmul.f32 %v2618, %v2630
    %v2633 = vmul.f32 %v2619, %v2631
    %v2634 = vmul.f32 %v2632, %v113
    %v2635 = vmul.f32 %v2633, %v113
    %v2636 = vadd.f32 %v2634, %v114
    %v2637 = vadd.f32 %v2635, %v114
    %v2638 = vpack.c.bf16 %v2637, %v2636
    %v2639 = vld [vmem:[#allocation8] sm:$0xf]
    %v2640 = vld [vmem:[#allocation8 + $0x14] sm:$0xf]
    %v2641 = vld [vmem:[#allocation8 + $0x28] sm:$0xf]
    %v2642 = vld [vmem:[#allocation8 + $0x3c] sm:$0xf]
    %v2643 = vld [vmem:[#allocation8 + $0x50] sm:$0xf]
    %v2644 = vld [vmem:[#allocation8 + $0x64] sm:$0xf]
    %v2645 = vld [vmem:[#allocation8 + $0x78] sm:$0xf]
    %v2646 = vld [vmem:[#allocation8 + $0x8c] sm:$0xf]
    %v2647 = vld [vmem:[#allocation8 + $0xa0] sm:$0xf]
    %v2648 = vld [vmem:[#allocation8 + $0xb4] sm:$0xf]
    %v2649 = vld [vmem:[#allocation8 + $0xc8] sm:$0xf]
    %v2650 = vld [vmem:[#allocation8 + $0xdc] sm:$0xf]
    %v2651 = vld [vmem:[#allocation8 + $0xf0] sm:$0xf]
    %v2652 = vld [vmem:[#allocation8 + $0x104] sm:$0xf]
    %v2653 = vld [vmem:[#allocation8 + $0x118] sm:$0xf]
    %v2654 = vld [vmem:[#allocation8 + $0x12c] sm:$0xf]
    %v2671 = vunpack.c.l.b16 %v2639
    %v2672 = vunpack.c.l.b16 %v2640
    %v2673 = vunpack.c.l.b16 %v2641
    %v2674 = vunpack.c.l.b16 %v2642
    %v2675 = vunpack.c.l.b16 %v2643
    %v2676 = vunpack.c.l.b16 %v2644
    %v2677 = vunpack.c.l.b16 %v2645
    %v2678 = vunpack.c.l.b16 %v2646
    %v2679 = vunpack.c.l.b16 %v2647
    %v2680 = vunpack.c.l.b16 %v2648
    %v2681 = vunpack.c.l.b16 %v2649
    %v2682 = vunpack.c.l.b16 %v2650
    %v2683 = vunpack.c.l.b16 %v2651
    %v2684 = vunpack.c.l.b16 %v2652
    %v2685 = vunpack.c.l.b16 %v2653
    %v2686 = vunpack.c.l.b16 %v2654
    %v2687 = vpack.c.b16 %v2672, %v2671
    %v2688 = vpack.c.b16 %v2674, %v2673
    %v2689 = vpack.c.b16 %v2676, %v2675
    %v2690 = vpack.c.b16 %v2678, %v2677
    %v2691 = vpack.c.b16 %v2680, %v2679
    %v2692 = vpack.c.b16 %v2682, %v2681
    %v2693 = vpack.c.b16 %v2684, %v2683
    %v2694 = vpack.c.b16 %v2686, %v2685
    %2703 = vmatprep.subr.bf16.mxu0 0
    %2704 = vmatpush1.bf16.msra.mxu0 %v2687
    %2705 = vmatprep.subr.bf16.mxu0 0
    %2706 = vmatpush1.bf16.msra.mxu0 %v2688
    %2707 = vmatprep.subr.bf16.mxu0 0
    %2708 = vmatpush1.bf16.msra.mxu0 %v2689
    %2709 = vmatprep.subr.bf16.mxu0 0
    %2710 = vmatpush1.bf16.msra.mxu0 %v2690
    %2711 = vmatprep.subr.bf16.mxu0 0
    %2712 = vmatpush1.bf16.msra.mxu0 %v2691
    %2713 = vmatprep.subr.bf16.mxu0 0
    %2714 = vmatpush1.bf16.msra.mxu0 %v2692
    %2715 = vmatprep.subr.bf16.mxu0 0
    %2716 = vmatpush1.bf16.msra.mxu0 %v2693
    %2717 = vmatprep.subr.bf16.mxu0 0
    %2718 = vmatpush1.bf16.msra.mxu0 %v2694
    %2719 = vmatprep.subr.bf16.mxu0 0
    %2720 = vmatpush1.bf16.msra.mxu0 0
    %2721 = vmatprep.subr.bf16.mxu0 0
    %2722 = vmatpush1.bf16.msra.mxu0 0
    %2723 = vmatprep.subr.bf16.mxu0 0
    %2724 = vmatpush1.bf16.msra.mxu0 0
    %2725 = vmatprep.subr.bf16.mxu0 0
    %2726 = vmatpush1.bf16.msra.mxu0 0
    %2727 = vmatprep.subr.bf16.mxu0 0
    %2728 = vmatpush1.bf16.msra.mxu0 0
    %2729 = vmatprep.subr.bf16.mxu0 0
    %2730 = vmatpush1.bf16.msra.mxu0 0
    %2731 = vmatprep.subr.bf16.mxu0 0
    %2732 = vmatpush1.bf16.msra.mxu0 0
    %2733 = vmatprep.subr.bf16.mxu0 0
    %2734 = vmatpush1.bf16.msra.mxu0 0
    %2735 = vmatprep.mubr.bf16.mxu0 0
    %2736 = vmatmul.mubr.bf16.gmra.mrb[0].mxu0 %v2638
    %v2737 = vpop.f32.mrb[0].mxu0
    %v2738 = vadd.f32 0.0, %v2737
    %v2739 = vpop.f32.mrb[0].mxu0
    %v2740 = vpop.f32.mrb[0].mxu0
    %v2741 = vadd.f32 0.0, %v2740
    %v2742 = vpop.f32.mrb[0].mxu0
    %2743 = vdwg.mxu0
    %v2744 = vpack.c.bf16 %v2741, %v2738
    %v2746 = vunpack.c.l.b16 %v2744
    %v2747 = vunpack.c.h.b16 %v2744
    %v2748 = vpack.c.b16 %v2746, %v2746
    %v2749 = vpack.c.b16 %v2747, %v2747
    %2752 = vmatprep.subr.bf16.mxu0 0
    %2753 = vmatpush1.bf16.xpose.msra.mxu0 %v347
    %2754 = vmatprep.subr.bf16.mxu0 0
    %2755 = vmatpush1.bf16.xpose.msra.mxu0 0
    %2756 = vmatprep.subr.bf16.mxu0 0
    %2757 = vmatpush1.bf16.xpose.msra.mxu0 0
    %2758 = vmatprep.subr.bf16.mxu0 0
    %2759 = vmatpush1.bf16.xpose.msra.mxu0 0
    %2760 = vmatprep.subr.bf16.mxu0 0
    %2761 = vmatpush1.bf16.xpose.msra.mxu0 0
    %2762 = vmatprep.subr.bf16.mxu0 0
    %2763 = vmatpush1.bf16.xpose.msra.mxu0 0
    %2764 = vmatprep.subr.bf16.mxu0 0
    %2765 = vmatpush1.bf16.xpose.msra.mxu0 0
    %2766 = vmatprep.subr.bf16.mxu0 0
    %2767 = vmatpush1.bf16.xpose.msra.mxu0 0
    %2768 = vmatprep.subr.bf16.mxu0 0
    %2769 = vmatpush1.bf16.xpose.msra.mxu0 0
    %2770 = vmatprep.subr.bf16.mxu0 0
    %2771 = vmatpush1.bf16.xpose.msra.mxu0 0
    %2772 = vmatprep.subr.bf16.mxu0 0
    %2773 = vmatpush1.bf16.xpose.msra.mxu0 0
    %2774 = vmatprep.subr.bf16.mxu0 0
    %2775 = vmatpush1.bf16.xpose.msra.mxu0 0
    %2776 = vmatprep.subr.bf16.mxu0 0
    %2777 = vmatpush1.bf16.xpose.msra.mxu0 0
    %2778 = vmatprep.subr.bf16.mxu0 0
    %2779 = vmatpush1.bf16.xpose.msra.mxu0 0
    %2780 = vmatprep.subr.bf16.mxu0 0
    %2781 = vmatpush1.bf16.xpose.msra.mxu0 0
    %2782 = vmatprep.subr.bf16.mxu0 0
    %2783 = vmatpush1.bf16.xpose.msra.mxu0 0
    %2784 = vmatprep.mubr.bf16.mxu0 0
    %2785 = vmatmul.mubr.bf16.gmra.mrb[0].mxu0 %v2748
    %v2786 = vpop.f32.mrb[0].mxu0
    %v2787 = vadd.f32 0.0, %v2786
    %v2788 = vpop.f32.mrb[0].mxu0
    %v2789 = vpop.f32.mrb[0].mxu0
    %v2790 = vpop.f32.mrb[0].mxu0
    %2791 = vdwg.mxu0
    %2792 = vmatprep.subr.bf16.mxu0 0
    %2793 = vmatpush1.bf16.xpose.msra.mxu0 %v348
    %2794 = vmatprep.subr.bf16.mxu0 0
    %2795 = vmatpush1.bf16.xpose.msra.mxu0 0
    %2796 = vmatprep.subr.bf16.mxu0 0
    %2797 = vmatpush1.bf16.xpose.msra.mxu0 0
    %2798 = vmatprep.subr.bf16.mxu0 0
    %2799 = vmatpush1.bf16.xpose.msra.mxu0 0
    %2800 = vmatprep.subr.bf16.mxu0 0
    %2801 = vmatpush1.bf16.xpose.msra.mxu0 0
    %2802 = vmatprep.subr.bf16.mxu0 0
    %2803 = vmatpush1.bf16.xpose.msra.mxu0 0
    %2804 = vmatprep.subr.bf16.mxu0 0
    %2805 = vmatpush1.bf16.xpose.msra.mxu0 0
    %2806 = vmatprep.subr.bf16.mxu0 0
    %2807 = vmatpush1.bf16.xpose.msra.mxu0 0
    %2808 = vmatprep.subr.bf16.mxu0 0
    %2809 = vmatpush1.bf16.xpose.msra.mxu0 0
    %2810 = vmatprep.subr.bf16.mxu0 0
    %2811 = vmatpush1.bf16.xpose.msra.mxu0 0
    %2812 = vmatprep.subr.bf16.mxu0 0
    %2813 = vmatpush1.bf16.xpose.msra.mxu0 0
    %2814 = vmatprep.subr.bf16.mxu0 0
    %2815 = vmatpush1.bf16.xpose.msra.mxu0 0
    %2816 = vmatprep.subr.bf16.mxu0 0
    %2817 = vmatpush1.bf16.xpose.msra.mxu0 0
    %2818 = vmatprep.subr.bf16.mxu0 0
    %2819 = vmatpush1.bf16.xpose.msra.mxu0 0
    %2820 = vmatprep.subr.bf16.mxu0 0
    %2821 = vmatpush1.bf16.xpose.msra.mxu0 0
    %2822 = vmatprep.subr.bf16.mxu0 0
    %2823 = vmatpush1.bf16.xpose.msra.mxu0 0
    %2824 = vmatprep.mubr.bf16.mxu0 0
    %2825 = vmatmul.mubr.bf16.gmra.mrb[0].mxu0 %v2749
    %v2826 = vpop.f32.mrb[0].mxu0
    %v2827 = vadd.f32 0.0, %v2826
    %v2828 = vpop.f32.mrb[0].mxu0
    %v2829 = vpop.f32.mrb[0].mxu0
    %v2830 = vpop.f32.mrb[0].mxu0
    %2831 = vdwg.mxu0
    %v2832 = vsel %vm580, %v2787, -inf
    %v2833 = vrot.slane %v2832, 4
    %v2834 = vmax.f32 %v2832, %v2833
    %v2835 = vrot.slane %v2834, 2
    %v2836 = vmax.f32 %v2834, %v2835
    %v2837 = vrot.slane %v2836, 1
    %v2838 = vmax.f32 %v2836, %v2837
    %v2839 = vsel %vm580, %v2827, -inf
    %v2840 = vrot.slane %v2839, 4
    %v2841 = vmax.f32 %v2839, %v2840
    %v2842 = vrot.slane %v2841, 2
    %v2843 = vmax.f32 %v2841, %v2842
    %v2844 = vrot.slane %v2843, 1
    %v2845 = vmax.f32 %v2843, %v2844
    %v2846 = vsub.f32 %v2787, %v2838
    %v2847 = vsub.f32 %v2827, %v2845
    %v2848 = vmul.f32 %v2846, 1.442695
    %v2849 = vpow.pop %v2848
    %v2850 = vmul.f32 %v2847, 1.442695
    %v2851 = vpow.pop %v2850
    %v2852 = vsel %vm580, %v2849, 0.0
    %v2853 = vrot.slane %v2852, 4
    %v2854 = vadd.f32 %v2852, %v2853
    %v2855 = vrot.slane %v2854, 2
    %v2856 = vadd.f32 %v2854, %v2855
    %v2857 = vrot.slane %v2856, 1
    %v2858 = vadd.f32 %v2856, %v2857
    %v2859 = vsel %vm580, %v2851, 0.0
    %v2860 = vrot.slane %v2859, 4
    %v2861 = vadd.f32 %v2859, %v2860
    %v2862 = vrot.slane %v2861, 2
    %v2863 = vadd.f32 %v2861, %v2862
    %v2864 = vrot.slane %v2863, 1
    %v2865 = vadd.f32 %v2863, %v2864
    %v2866 = vrcp.pop %v2858
    %v2867 = vrcp.pop %v2865
    %v2868 = vmul.f32 %v2849, %v2866
    %v2869 = vmul.f32 %v2851, %v2867
    %v2870 = vadd.f32 %v2868, 1e-08
    %v2871 = vadd.f32 %v2869, 1e-08
    %v2872 = vsel %vm580, %v2870, 0.0
    %2873 = vadd.xlane.f32.xlu0 %v2872
    %v2874 = vpop.xlane.xlu0 %2873
    %v2875 = vsel %vm580, %v2871, 0.0
    %2876 = vadd.xlane.f32.xlu0 %v2875
    %v2877 = vpop.xlane.xlu0 %2876
    %v2878 = vrcp.pop %v2874
    %v2879 = vrcp.pop %v2877
    %v2880 = vmul.f32 %v2870, %v2878
    %v2881 = vmul.f32 %v2871, %v2879
    %v2882 = vpack.c.bf16 %v2880, %v2880
    %v2883 = vpack.c.bf16 %v2881, %v2881
    %v2885 = vsel %vm580, %v2882, 0
    %2887 = vmatprep.subr.bf16.mxu0 0
    %2888 = vmatpush1.bf16.msra.mxu0 %v349
    %2889 = vmatprep.subr.bf16.mxu0 0
    %2890 = vmatpush1.bf16.msra.mxu0 0
    %2891 = vmatprep.subr.bf16.mxu0 0
    %2892 = vmatpush1.bf16.msra.mxu0 0
    %2893 = vmatprep.subr.bf16.mxu0 0
    %2894 = vmatpush1.bf16.msra.mxu0 0
    %2895 = vmatprep.subr.bf16.mxu0 0
    %2896 = vmatpush1.bf16.msra.mxu0 0
    %2897 = vmatprep.subr.bf16.mxu0 0
    %2898 = vmatpush1.bf16.msra.mxu0 0
    %2899 = vmatprep.subr.bf16.mxu0 0
    %2900 = vmatpush1.bf16.msra.mxu0 0
    %2901 = vmatprep.subr.bf16.mxu0 0
    %2902 = vmatpush1.bf16.msra.mxu0 0
    %2903 = vmatprep.subr.bf16.mxu0 0
    %2904 = vmatpush1.bf16.msra.mxu0 0
    %2905 = vmatprep.subr.bf16.mxu0 0
    %2906 = vmatpush1.bf16.msra.mxu0 0
    %2907 = vmatprep.subr.bf16.mxu0 0
    %2908 = vmatpush1.bf16.msra.mxu0 0
    %2909 = vmatprep.subr.bf16.mxu0 0
    %2910 = vmatpush1.bf16.msra.mxu0 0
    %2911 = vmatprep.subr.bf16.mxu0 0
    %2912 = vmatpush1.bf16.msra.mxu0 0
    %2913 = vmatprep.subr.bf16.mxu0 0
    %2914 = vmatpush1.bf16.msra.mxu0 0
    %2915 = vmatprep.subr.bf16.mxu0 0
    %2916 = vmatpush1.bf16.msra.mxu0 0
    %2917 = vmatprep.subr.bf16.mxu0 0
    %2918 = vmatpush1.bf16.msra.mxu0 0
    %2919 = vmatprep.mubr.bf16.mxu0 0
    %2920 = vmatmul.mubr.bf16.gmra.mrb[0].mxu0 %v2885
    %v2921 = vpop.f32.mrb[0].mxu0
    %v2922 = vadd.f32 0.0, %v2921
    %v2923 = vpop.f32.mrb[0].mxu0
    %v2924 = vpop.f32.mrb[0].mxu0
    %v2925 = vpop.f32.mrb[0].mxu0
    %2926 = vdwg.mxu0
    %v2928 = vsel %vm580, %v2883, 0
    %2930 = vmatprep.subr.bf16.mxu0 0
    %2931 = vmatpush1.bf16.msra.mxu0 %v350
    %2932 = vmatprep.subr.bf16.mxu0 0
    %2933 = vmatpush1.bf16.msra.mxu0 0
    %2934 = vmatprep.subr.bf16.mxu0 0
    %2935 = vmatpush1.bf16.msra.mxu0 0
    %2936 = vmatprep.subr.bf16.mxu0 0
    %2937 = vmatpush1.bf16.msra.mxu0 0
    %2938 = vmatprep.subr.bf16.mxu0 0
    %2939 = vmatpush1.bf16.msra.mxu0 0
    %2940 = vmatprep.subr.bf16.mxu0 0
    %2941 = vmatpush1.bf16.msra.mxu0 0
    %2942 = vmatprep.subr.bf16.mxu0 0
    %2943 = vmatpush1.bf16.msra.mxu0 0
    %2944 = vmatprep.subr.bf16.mxu0 0
    %2945 = vmatpush1.bf16.msra.mxu0 0
    %2946 = vmatprep.subr.bf16.mxu0 0
    %2947 = vmatpush1.bf16.msra.mxu0 0
    %2948 = vmatprep.subr.bf16.mxu0 0
    %2949 = vmatpush1.bf16.msra.mxu0 0
    %2950 = vmatprep.subr.bf16.mxu0 0
    %2951 = vmatpush1.bf16.msra.mxu0 0
    %2952 = vmatprep.subr.bf16.mxu0 0
    %2953 = vmatpush1.bf16.msra.mxu0 0
    %2954 = vmatprep.subr.bf16.mxu0 0
    %2955 = vmatpush1.bf16.msra.mxu0 0
    %2956 = vmatprep.subr.bf16.mxu0 0
    %2957 = vmatpush1.bf16.msra.mxu0 0
    %2958 = vmatprep.subr.bf16.mxu0 0
    %2959 = vmatpush1.bf16.msra.mxu0 0
    %2960 = vmatprep.subr.bf16.mxu0 0
    %2961 = vmatpush1.bf16.msra.mxu0 0
    %2962 = vmatprep.mubr.bf16.mxu0 0
    %2963 = vmatmul.mubr.bf16.gmra.mrb[0].mxu0 %v2928
    %v2964 = vpop.f32.mrb[0].mxu0
    %v2965 = vadd.f32 0.0, %v2964
    %v2966 = vpop.f32.mrb[0].mxu0
    %v2967 = vpop.f32.mrb[0].mxu0
    %v2968 = vpop.f32.mrb[0].mxu0
    %2969 = vdwg.mxu0
    %v2970 = vpack.c.bf16 %v2965, %v2922
    %v2971 = vpack.c.bf16 %v2611, %v2610
    %v2972 = vld [vmem:[#allocation11] sm:$0xff]
    %v2973 = vld [vmem:[#allocation11 + $0x8] sm:$0xff]
    %v2974 = vld [vmem:[#allocation11 + $0x14] sm:$0xff]
    %v2975 = vld [vmem:[#allocation11 + $0x1c] sm:$0xff]
    %v2976 = vld [vmem:[#allocation11 + $0x28] sm:$0xff]
    %v2977 = vld [vmem:[#allocation11 + $0x30] sm:$0xff]
    %v2978 = vld [vmem:[#allocation11 + $0x3c] sm:$0xff]
    %v2979 = vld [vmem:[#allocation11 + $0x44] sm:$0xff]
    %v2980 = vld [vmem:[#allocation11 + $0x50] sm:$0xff]
    %v2981 = vld [vmem:[#allocation11 + $0x58] sm:$0xff]
    %v2982 = vld [vmem:[#allocation11 + $0x64] sm:$0xff]
    %v2983 = vld [vmem:[#allocation11 + $0x6c] sm:$0xff]
    %v2984 = vld [vmem:[#allocation11 + $0x78] sm:$0xff]
    %v2985 = vld [vmem:[#allocation11 + $0x80] sm:$0xff]
    %v2986 = vld [vmem:[#allocation11 + $0x8c] sm:$0xff]
    %v2987 = vld [vmem:[#allocation11 + $0x94] sm:$0xff]
    %v2988 = vld [vmem:[#allocation11 + $0xa0] sm:$0xff]
    %v2989 = vld [vmem:[#allocation11 + $0xa8] sm:$0xff]
    %v2990 = vld [vmem:[#allocation11 + $0xb4] sm:$0xff]
    %v2991 = vld [vmem:[#allocation11 + $0xbc] sm:$0xff]
    %v2992 = vld [vmem:[#allocation11 + $0xc8] sm:$0xff]
    %v2993 = vld [vmem:[#allocation11 + $0xd0] sm:$0xff]
    %v2994 = vld [vmem:[#allocation11 + $0xdc] sm:$0xff]
    %v2995 = vld [vmem:[#allocation11 + $0xe4] sm:$0xff]
    %v2996 = vld [vmem:[#allocation11 + $0xf0] sm:$0xff]
    %v2997 = vld [vmem:[#allocation11 + $0xf8] sm:$0xff]
    %v2998 = vld [vmem:[#allocation11 + $0x104] sm:$0xff]
    %v2999 = vld [vmem:[#allocation11 + $0x10c] sm:$0xff]
    %v3000 = vld [vmem:[#allocation11 + $0x118] sm:$0xff]
    %v3001 = vld [vmem:[#allocation11 + $0x120] sm:$0xff]
    %v3002 = vld [vmem:[#allocation11 + $0x12c] sm:$0xff]
    %v3003 = vld [vmem:[#allocation11 + $0x134] sm:$0xff]
    %v3004 = vld [vmem:[#allocation11 + $0x140] sm:$0xff]
    %v3005 = vld [vmem:[#allocation11 + $0x148] sm:$0xff]
    %v3006 = vld [vmem:[#allocation11 + $0x154] sm:$0xff]
    %v3007 = vld [vmem:[#allocation11 + $0x15c] sm:$0xff]
    %v3008 = vld [vmem:[#allocation11 + $0x168] sm:$0xff]
    %v3009 = vld [vmem:[#allocation11 + $0x170] sm:$0xff]
    %v3010 = vld [vmem:[#allocation11 + $0x17c] sm:$0xff]
    %v3011 = vld [vmem:[#allocation11 + $0x184] sm:$0xff]
    %v3012 = vld [vmem:[#allocation11 + $0x190] sm:$0xff]
    %v3013 = vld [vmem:[#allocation11 + $0x198] sm:$0xff]
    %v3014 = vld [vmem:[#allocation11 + $0x1a4] sm:$0xff]
    %v3015 = vld [vmem:[#allocation11 + $0x1ac] sm:$0xff]
    %v3016 = vld [vmem:[#allocation11 + $0x1b8] sm:$0xff]
    %v3017 = vld [vmem:[#allocation11 + $0x1c0] sm:$0xff]
    %v3018 = vld [vmem:[#allocation11 + $0x1cc] sm:$0xff]
    %v3019 = vld [vmem:[#allocation11 + $0x1d4] sm:$0xff]
    %v3020 = vld [vmem:[#allocation11 + $0x1e0] sm:$0xff]
    %v3021 = vld [vmem:[#allocation11 + $0x1e8] sm:$0xff]
    %v3022 = vld [vmem:[#allocation11 + $0x1f4] sm:$0xff]
    %v3023 = vld [vmem:[#allocation11 + $0x1fc] sm:$0xff]
    %v3024 = vld [vmem:[#allocation11 + $0x208] sm:$0xff]
    %v3025 = vld [vmem:[#allocation11 + $0x210] sm:$0xff]
    %v3026 = vld [vmem:[#allocation11 + $0x21c] sm:$0xff]
    %v3027 = vld [vmem:[#allocation11 + $0x224] sm:$0xff]
    %v3028 = vld [vmem:[#allocation11 + $0x230] sm:$0xff]
    %v3029 = vld [vmem:[#allocation11 + $0x238] sm:$0xff]
    %v3030 = vld [vmem:[#allocation11 + $0x244] sm:$0xff]
    %v3031 = vld [vmem:[#allocation11 + $0x24c] sm:$0xff]
    %v3032 = vld [vmem:[#allocation11 + $0x258] sm:$0xff]
    %v3033 = vld [vmem:[#allocation11 + $0x260] sm:$0xff]
    %v3034 = vld [vmem:[#allocation11 + $0x26c] sm:$0xff]
    %v3035 = vld [vmem:[#allocation11 + $0x274] sm:$0xff]
    %v3100 = vunpack.c.l.b16 %v2972
    %v3101 = vunpack.c.h.b16 %v2972
    %v3102 = vunpack.c.l.b16 %v2973
    %v3103 = vunpack.c.h.b16 %v2973
    %v3104 = vunpack.c.l.b16 %v2974
    %v3105 = vunpack.c.h.b16 %v2974
    %v3106 = vunpack.c.l.b16 %v2975
    %v3107 = vunpack.c.h.b16 %v2975
    %v3108 = vunpack.c.l.b16 %v2976
    %v3109 = vunpack.c.h.b16 %v2976
    %v3110 = vunpack.c.l.b16 %v2977
    %v3111 = vunpack.c.h.b16 %v2977
    %v3112 = vunpack.c.l.b16 %v2978
    %v3113 = vunpack.c.h.b16 %v2978
    %v3114 = vunpack.c.l.b16 %v2979
    %v3115 = vunpack.c.h.b16 %v2979
    %v3116 = vunpack.c.l.b16 %v2980
    %v3117 = vunpack.c.h.b16 %v2980
    %v3118 = vunpack.c.l.b16 %v2981
    %v3119 = vunpack.c.h.b16 %v2981
    %v3120 = vunpack.c.l.b16 %v2982
    %v3121 = vunpack.c.h.b16 %v2982
    %v3122 = vunpack.c.l.b16 %v2983
    %v3123 = vunpack.c.h.b16 %v2983
    %v3124 = vunpack.c.l.b16 %v2984
    %v3125 = vunpack.c.h.b16 %v2984
    %v3126 = vunpack.c.l.b16 %v2985
    %v3127 = vunpack.c.h.b16 %v2985
    %v3128 = vunpack.c.l.b16 %v2986
    %v3129 = vunpack.c.h.b16 %v2986
    %v3130 = vunpack.c.l.b16 %v2987
    %v3131 = vunpack.c.h.b16 %v2987
    %v3132 = vunpack.c.l.b16 %v2988
    %v3133 = vunpack.c.h.b16 %v2988
    %v3134 = vunpack.c.l.b16 %v2989
    %v3135 = vunpack.c.h.b16 %v2989
    %v3136 = vunpack.c.l.b16 %v2990
    %v3137 = vunpack.c.h.b16 %v2990
    %v3138 = vunpack.c.l.b16 %v2991
    %v3139 = vunpack.c.h.b16 %v2991
    %v3140 = vunpack.c.l.b16 %v2992
    %v3141 = vunpack.c.h.b16 %v2992
    %v3142 = vunpack.c.l.b16 %v2993
    %v3143 = vunpack.c.h.b16 %v2993
    %v3144 = vunpack.c.l.b16 %v2994
    %v3145 = vunpack.c.h.b16 %v2994
    %v3146 = vunpack.c.l.b16 %v2995
    %v3147 = vunpack.c.h.b16 %v2995
    %v3148 = vunpack.c.l.b16 %v2996
    %v3149 = vunpack.c.h.b16 %v2996
    %v3150 = vunpack.c.l.b16 %v2997
    %v3151 = vunpack.c.h.b16 %v2997
    %v3152 = vunpack.c.l.b16 %v2998
    %v3153 = vunpack.c.h.b16 %v2998
    %v3154 = vunpack.c.l.b16 %v2999
    %v3155 = vunpack.c.h.b16 %v2999
    %v3156 = vunpack.c.l.b16 %v3000
    %v3157 = vunpack.c.h.b16 %v3000
    %v3158 = vunpack.c.l.b16 %v3001
    %v3159 = vunpack.c.h.b16 %v3001
    %v3160 = vunpack.c.l.b16 %v3002
    %v3161 = vunpack.c.h.b16 %v3002
    %v3162 = vunpack.c.l.b16 %v3003
    %v3163 = vunpack.c.h.b16 %v3003
    %v3164 = vunpack.c.l.b16 %v3004
    %v3165 = vunpack.c.h.b16 %v3004
    %v3166 = vunpack.c.l.b16 %v3005
    %v3167 = vunpack.c.h.b16 %v3005
    %v3168 = vunpack.c.l.b16 %v3006
    %v3169 = vunpack.c.h.b16 %v3006
    %v3170 = vunpack.c.l.b16 %v3007
    %v3171 = vunpack.c.h.b16 %v3007
    %v3172 = vunpack.c.l.b16 %v3008
    %v3173 = vunpack.c.h.b16 %v3008
    %v3174 = vunpack.c.l.b16 %v3009
    %v3175 = vunpack.c.h.b16 %v3009
    %v3176 = vunpack.c.l.b16 %v3010
    %v3177 = vunpack.c.h.b16 %v3010
    %v3178 = vunpack.c.l.b16 %v3011
    %v3179 = vunpack.c.h.b16 %v3011
    %v3180 = vunpack.c.l.b16 %v3012
    %v3181 = vunpack.c.h.b16 %v3012
    %v3182 = vunpack.c.l.b16 %v3013
    %v3183 = vunpack.c.h.b16 %v3013
    %v3184 = vunpack.c.l.b16 %v3014
    %v3185 = vunpack.c.h.b16 %v3014
    %v3186 = vunpack.c.l.b16 %v3015
    %v3187 = vunpack.c.h.b16 %v3015
    %v3188 = vunpack.c.l.b16 %v3016
    %v3189 = vunpack.c.h.b16 %v3016
    %v3190 = vunpack.c.l.b16 %v3017
    %v3191 = vunpack.c.h.b16 %v3017
    %v3192 = vunpack.c.l.b16 %v3018
    %v3193 = vunpack.c.h.b16 %v3018
    %v3194 = vunpack.c.l.b16 %v3019
    %v3195 = vunpack.c.h.b16 %v3019
    %v3196 = vunpack.c.l.b16 %v3020
    %v3197 = vunpack.c.h.b16 %v3020
    %v3198 = vunpack.c.l.b16 %v3021
    %v3199 = vunpack.c.h.b16 %v3021
    %v3200 = vunpack.c.l.b16 %v3022
    %v3201 = vunpack.c.h.b16 %v3022
    %v3202 = vunpack.c.l.b16 %v3023
    %v3203 = vunpack.c.h.b16 %v3023
    %v3204 = vunpack.c.l.b16 %v3024
    %v3205 = vunpack.c.h.b16 %v3024
    %v3206 = vunpack.c.l.b16 %v3025
    %v3207 = vunpack.c.h.b16 %v3025
    %v3208 = vunpack.c.l.b16 %v3026
    %v3209 = vunpack.c.h.b16 %v3026
    %v3210 = vunpack.c.l.b16 %v3027
    %v3211 = vunpack.c.h.b16 %v3027
    %v3212 = vunpack.c.l.b16 %v3028
    %v3213 = vunpack.c.h.b16 %v3028
    %v3214 = vunpack.c.l.b16 %v3029
    %v3215 = vunpack.c.h.b16 %v3029
    %v3216 = vunpack.c.l.b16 %v3030
    %v3217 = vunpack.c.h.b16 %v3030
    %v3218 = vunpack.c.l.b16 %v3031
    %v3219 = vunpack.c.h.b16 %v3031
    %v3220 = vunpack.c.l.b16 %v3032
    %v3221 = vunpack.c.h.b16 %v3032
    %v3222 = vunpack.c.l.b16 %v3033
    %v3223 = vunpack.c.h.b16 %v3033
    %v3224 = vunpack.c.l.b16 %v3034
    %v3225 = vunpack.c.h.b16 %v3034
    %v3226 = vunpack.c.l.b16 %v3035
    %v3227 = vunpack.c.h.b16 %v3035
    %v3228 = vpack.c.b16 %v3104, %v3100
    %v3229 = vpack.c.b16 %v3105, %v3101
    %v3230 = vpack.c.b16 %v3106, %v3102
    %v3231 = vpack.c.b16 %v3107, %v3103
    %v3232 = vpack.c.b16 %v3112, %v3108
    %v3233 = vpack.c.b16 %v3113, %v3109
    %v3234 = vpack.c.b16 %v3114, %v3110
    %v3235 = vpack.c.b16 %v3115, %v3111
    %v3236 = vpack.c.b16 %v3120, %v3116
    %v3237 = vpack.c.b16 %v3121, %v3117
    %v3238 = vpack.c.b16 %v3122, %v3118
    %v3239 = vpack.c.b16 %v3123, %v3119
    %v3240 = vpack.c.b16 %v3128, %v3124
    %v3241 = vpack.c.b16 %v3129, %v3125
    %v3242 = vpack.c.b16 %v3130, %v3126
    %v3243 = vpack.c.b16 %v3131, %v3127
    %v3244 = vpack.c.b16 %v3136, %v3132
    %v3245 = vpack.c.b16 %v3137, %v3133
    %v3246 = vpack.c.b16 %v3138, %v3134
    %v3247 = vpack.c.b16 %v3139, %v3135
    %v3248 = vpack.c.b16 %v3144, %v3140
    %v3249 = vpack.c.b16 %v3145, %v3141
    %v3250 = vpack.c.b16 %v3146, %v3142
    %v3251 = vpack.c.b16 %v3147, %v3143
    %v3252 = vpack.c.b16 %v3152, %v3148
    %v3253 = vpack.c.b16 %v3153, %v3149
    %v3254 = vpack.c.b16 %v3154, %v3150
    %v3255 = vpack.c.b16 %v3155, %v3151
    %v3256 = vpack.c.b16 %v3160, %v3156
    %v3257 = vpack.c.b16 %v3161, %v3157
    %v3258 = vpack.c.b16 %v3162, %v3158
    %v3259 = vpack.c.b16 %v3163, %v3159
    %v3260 = vpack.c.b16 %v3168, %v3164
    %v3261 = vpack.c.b16 %v3169, %v3165
    %v3262 = vpack.c.b16 %v3170, %v3166
    %v3263 = vpack.c.b16 %v3171, %v3167
    %v3264 = vpack.c.b16 %v3176, %v3172
    %v3265 = vpack.c.b16 %v3177, %v3173
    %v3266 = vpack.c.b16 %v3178, %v3174
    %v3267 = vpack.c.b16 %v3179, %v3175
    %v3268 = vpack.c.b16 %v3184, %v3180
    %v3269 = vpack.c.b16 %v3185, %v3181
    %v3270 = vpack.c.b16 %v3186, %v3182
    %v3271 = vpack.c.b16 %v3187, %v3183
    %v3272 = vpack.c.b16 %v3192, %v3188
    %v3273 = vpack.c.b16 %v3193, %v3189
    %v3274 = vpack.c.b16 %v3194, %v3190
    %v3275 = vpack.c.b16 %v3195, %v3191
    %v3276 = vpack.c.b16 %v3200, %v3196
    %v3277 = vpack.c.b16 %v3201, %v3197
    %v3278 = vpack.c.b16 %v3202, %v3198
    %v3279 = vpack.c.b16 %v3203, %v3199
    %v3280 = vpack.c.b16 %v3208, %v3204
    %v3281 = vpack.c.b16 %v3209, %v3205
    %v3282 = vpack.c.b16 %v3210, %v3206
    %v3283 = vpack.c.b16 %v3211, %v3207
    %v3284 = vpack.c.b16 %v3216, %v3212
    %v3285 = vpack.c.b16 %v3217, %v3213
    %v3286 = vpack.c.b16 %v3218, %v3214
    %v3287 = vpack.c.b16 %v3219, %v3215
    %v3288 = vpack.c.b16 %v3224, %v3220
    %v3289 = vpack.c.b16 %v3225, %v3221
    %v3290 = vpack.c.b16 %v3226, %v3222
    %v3291 = vpack.c.b16 %v3227, %v3223
    %3356 = vmatprep.subr.bf16.mxu0 %v3229
    %3357 = vmatpush1.bf16.msra.mxu0 %v3228
    %3358 = vmatprep.subr.bf16.mxu0 %v3233
    %3359 = vmatpush1.bf16.msra.mxu0 %v3232
    %3360 = vmatprep.subr.bf16.mxu0 %v3237
    %3361 = vmatpush1.bf16.msra.mxu0 %v3236
    %3362 = vmatprep.subr.bf16.mxu0 %v3241
    %3363 = vmatpush1.bf16.msra.mxu0 %v3240
    %3364 = vmatprep.subr.bf16.mxu0 %v3245
    %3365 = vmatpush1.bf16.msra.mxu0 %v3244
    %3366 = vmatprep.subr.bf16.mxu0 %v3249
    %3367 = vmatpush1.bf16.msra.mxu0 %v3248
    %3368 = vmatprep.subr.bf16.mxu0 %v3253
    %3369 = vmatpush1.bf16.msra.mxu0 %v3252
    %3370 = vmatprep.subr.bf16.mxu0 %v3257
    %3371 = vmatpush1.bf16.msra.mxu0 %v3256
    %3372 = vmatprep.subr.bf16.mxu0 %v3261
    %3373 = vmatpush1.bf16.msra.mxu0 %v3260
    %3374 = vmatprep.subr.bf16.mxu0 %v3265
    %3375 = vmatpush1.bf16.msra.mxu0 %v3264
    %3376 = vmatprep.subr.bf16.mxu0 %v3269
    %3377 = vmatpush1.bf16.msra.mxu0 %v3268
    %3378 = vmatprep.subr.bf16.mxu0 %v3273
    %3379 = vmatpush1.bf16.msra.mxu0 %v3272
    %3380 = vmatprep.subr.bf16.mxu0 %v3277
    %3381 = vmatpush1.bf16.msra.mxu0 %v3276
    %3382 = vmatprep.subr.bf16.mxu0 %v3281
    %3383 = vmatpush1.bf16.msra.mxu0 %v3280
    %3384 = vmatprep.subr.bf16.mxu0 %v3285
    %3385 = vmatpush1.bf16.msra.mxu0 %v3284
    %3386 = vmatprep.subr.bf16.mxu0 %v3289
    %3387 = vmatpush1.bf16.msra.mxu0 %v3288
    %3388 = vmatprep.mubr.bf16.mxu0 %v2971
    %3389 = vmatmul.mubr.bf16.gmra.mrb[0].mxu0 %v2970
    %v3390 = vpop.f32.mrb[0].mxu0
    %v3391 = vadd.f32 0.0, %v3390
    %v3392 = vpop.f32.mrb[0].mxu0
    %v3393 = vadd.f32 0.0, %v3392
    %v3394 = vpop.f32.mrb[0].mxu0
    %v3395 = vadd.f32 0.0, %v3394
    %v3396 = vpop.f32.mrb[0].mxu0
    %v3397 = vadd.f32 0.0, %v3396
    %3398 = vdwg.mxu0
    %3399 = vmatprep.subr.bf16.mxu0 %v3231
    %3400 = vmatpush1.bf16.msra.mxu0 %v3230
    %3401 = vmatprep.subr.bf16.mxu0 %v3235
    %3402 = vmatpush1.bf16.msra.mxu0 %v3234
    %3403 = vmatprep.subr.bf16.mxu0 %v3239
    %3404 = vmatpush1.bf16.msra.mxu0 %v3238
    %3405 = vmatprep.subr.bf16.mxu0 %v3243
    %3406 = vmatpush1.bf16.msra.mxu0 %v3242
    %3407 = vmatprep.subr.bf16.mxu0 %v3247
    %3408 = vmatpush1.bf16.msra.mxu0 %v3246
    %3409 = vmatprep.subr.bf16.mxu0 %v3251
    %3410 = vmatpush1.bf16.msra.mxu0 %v3250
    %3411 = vmatprep.subr.bf16.mxu0 %v3255
    %3412 = vmatpush1.bf16.msra.mxu0 %v3254
    %3413 = vmatprep.subr.bf16.mxu0 %v3259
    %3414 = vmatpush1.bf16.msra.mxu0 %v3258
    %3415 = vmatprep.subr.bf16.mxu0 %v3263
    %3416 = vmatpush1.bf16.msra.mxu0 %v3262
    %3417 = vmatprep.subr.bf16.mxu0 %v3267
    %3418 = vmatpush1.bf16.msra.mxu0 %v3266
    %3419 = vmatprep.subr.bf16.mxu0 %v3271
    %3420 = vmatpush1.bf16.msra.mxu0 %v3270
    %3421 = vmatprep.subr.bf16.mxu0 %v3275
    %3422 = vmatpush1.bf16.msra.mxu0 %v3274
    %3423 = vmatprep.subr.bf16.mxu0 %v3279
    %3424 = vmatpush1.bf16.msra.mxu0 %v3278
    %3425 = vmatprep.subr.bf16.mxu0 %v3283
    %3426 = vmatpush1.bf16.msra.mxu0 %v3282
    %3427 = vmatprep.subr.bf16.mxu0 %v3287
    %3428 = vmatpush1.bf16.msra.mxu0 %v3286
    %3429 = vmatprep.subr.bf16.mxu0 %v3291
    %3430 = vmatpush1.bf16.msra.mxu0 %v3290
    %3431 = vmatprep.mubr.bf16.mxu0 %v2971
    %3432 = vmatmul.mubr.bf16.gmra.mrb[0].mxu0 %v2970
    %v3433 = vpop.f32.mrb[0].mxu0
    %v3434 = vadd.f32 0.0, %v3433
    %v3435 = vpop.f32.mrb[0].mxu0
    %v3436 = vadd.f32 0.0, %v3435
    %v3437 = vpop.f32.mrb[0].mxu0
    %v3438 = vadd.f32 0.0, %v3437
    %v3439 = vpop.f32.mrb[0].mxu0
    %v3440 = vadd.f32 0.0, %v3439
    %3441 = vdwg.mxu0
    %v3442 = vadd.f32 %v3391, %v1195
    %v3443 = vadd.f32 %v3393, %v1199
    %v3444 = vadd.f32 %v3395, %v1195
    %v3445 = vadd.f32 %v3397, %v1199
    %v3446 = vxor.u32 %v3442, 2147483648
    %v3447 = vxor.u32 %v3443, 2147483648
    %v3448 = vxor.u32 %v3444, 2147483648
    %v3449 = vxor.u32 %v3445, 2147483648
    %v3450 = vmul.f32 %v3446, 1.442695
    %v3451 = vpow.pop %v3450
    %v3452 = vmul.f32 %v3447, 1.442695
    %v3453 = vpow.pop %v3452
    %v3454 = vmul.f32 %v3448, 1.442695
    %v3455 = vpow.pop %v3454
    %v3456 = vmul.f32 %v3449, 1.442695
    %v3457 = vpow.pop %v3456
    %v3458 = vadd.f32 %v3451, 1.0
    %v3459 = vadd.f32 %v3453, 1.0
    %v3460 = vadd.f32 %v3455, 1.0
    %v3461 = vadd.f32 %v3457, 1.0
    %v3462 = vrcp.pop %v3458
    %v3463 = vmul.f32 1.0, %v3462
    %v3464 = vrcp.pop %v3459
    %v3465 = vmul.f32 1.0, %v3464
    %v3466 = vrcp.pop %v3460
    %v3467 = vmul.f32 1.0, %v3466
    %v3468 = vrcp.pop %v3461
    %v3469 = vmul.f32 1.0, %v3468
    %v3470 = vadd.f32 %v3434, %v123
    %v3471 = vadd.f32 %v3438, %v123
    %v3472 = vadd.f32 %v3436, %v124
    %v3473 = vadd.f32 %v3440, %v124
    %v3474 = vmul.f32 %v3463, %v3472
    %v3475 = vmul.f32 %v3467, %v3473
    %v3476 = vadd.f32 %v3470, %v3474
    %v3477 = vadd.f32 %v3471, %v3475
    %v3478 = vtanh.pop %v3476
    %v3479 = vtanh.pop %v3477
    %v3480 = vsub.f32 1.0, %v3465
    %v3481 = vsub.f32 1.0, %v3469
    %v3482 = vmul.f32 %v3480, %v3478
    %v3483 = vmul.f32 %v3481, %v3479
    %v3484 = vmul.f32 %v3465, %v2610
    %v3485 = vmul.f32 %v3469, %v2611
    %v3486 = vadd.f32 %v3482, %v3484
    %v3487 = vadd.f32 %v3483, %v3485
    %3488 = vadd.xlane.f32.xlu0 %v3486
    %v3489 = vpop.xlane.xlu0 %3488
    %3490 = vadd.xlane.f32.xlu0 %v3487
    %v3491 = vpop.xlane.xlu0 %3490
    %v3492 = vmul.f32 %v3489, %v363
    %v3493 = vmul.f32 %v3491, %v363
    %v3494 = vsub.f32 %v3486, %v3492
    %v3495 = vsub.f32 %v3487, %v3493
    %v3496 = vmul.f32 %v3494, %v3494
    %v3497 = vmul.f32 %v3495, %v3495
    %3498 = vadd.xlane.f32.xlu0 %v3496
    %v3499 = vpop.xlane.xlu0 %3498
    %3500 = vadd.xlane.f32.xlu0 %v3497
    %v3501 = vpop.xlane.xlu0 %3500
    %v3502 = vmul.f32 %v3499, %v363
    %v3503 = vmul.f32 %v3501, %v363
    %v3504 = vadd.f32 %v3502, 1e-05
    %v3505 = vadd.f32 %v3503, 1e-05
    %v3506 = vrsqrt.pop %v3504
    %v3507 = vrsqrt.pop %v3505
    %v3508 = vmul.f32 %v3494, %v3506
    %v3509 = vmul.f32 %v3495, %v3507
    %v3510 = vmul.f32 %v3508, %v115
    %v3511 = vmul.f32 %v3509, %v115
    %v3512 = vadd.f32 %v3510, %v116
    %v3513 = vadd.f32 %v3511, %v116
    %v3514 = vpack.c.bf16 %v3513, %v3512
    %v3515 = vld [vmem:[#allocation8 + $0x4] sm:$0xf]
    %v3516 = vld [vmem:[#allocation8 + $0x18] sm:$0xf]
    %v3517 = vld [vmem:[#allocation8 + $0x2c] sm:$0xf]
    %v3518 = vld [vmem:[#allocation8 + $0x40] sm:$0xf]
    %v3519 = vld [vmem:[#allocation8 + $0x54] sm:$0xf]
    %v3520 = vld [vmem:[#allocation8 + $0x68] sm:$0xf]
    %v3521 = vld [vmem:[#allocation8 + $0x7c] sm:$0xf]
    %v3522 = vld [vmem:[#allocation8 + $0x90] sm:$0xf]
    %v3523 = vld [vmem:[#allocation8 + $0xa4] sm:$0xf]
    %v3524 = vld [vmem:[#allocation8 + $0xb8] sm:$0xf]
    %v3525 = vld [vmem:[#allocation8 + $0xcc] sm:$0xf]
    %v3526 = vld [vmem:[#allocation8 + $0xe0] sm:$0xf]
    %v3527 = vld [vmem:[#allocation8 + $0xf4] sm:$0xf]
    %v3528 = vld [vmem:[#allocation8 + $0x108] sm:$0xf]
    %v3529 = vld [vmem:[#allocation8 + $0x11c] sm:$0xf]
    %v3530 = vld [vmem:[#allocation8 + $0x130] sm:$0xf]
    %v3547 = vunpack.c.l.b16 %v3515
    %v3548 = vunpack.c.l.b16 %v3516
    %v3549 = vunpack.c.l.b16 %v3517
    %v3550 = vunpack.c.l.b16 %v3518
    %v3551 = vunpack.c.l.b16 %v3519
    %v3552 = vunpack.c.l.b16 %v3520
    %v3553 = vunpack.c.l.b16 %v3521
    %v3554 = vunpack.c.l.b16 %v3522
    %v3555 = vunpack.c.l.b16 %v3523
    %v3556 = vunpack.c.l.b16 %v3524
    %v3557 = vunpack.c.l.b16 %v3525
    %v3558 = vunpack.c.l.b16 %v3526
    %v3559 = vunpack.c.l.b16 %v3527
    %v3560 = vunpack.c.l.b16 %v3528
    %v3561 = vunpack.c.l.b16 %v3529
    %v3562 = vunpack.c.l.b16 %v3530
    %v3563 = vpack.c.b16 %v3548, %v3547
    %v3564 = vpack.c.b16 %v3550, %v3549
    %v3565 = vpack.c.b16 %v3552, %v3551
    %v3566 = vpack.c.b16 %v3554, %v3553
    %v3567 = vpack.c.b16 %v3556, %v3555
    %v3568 = vpack.c.b16 %v3558, %v3557
    %v3569 = vpack.c.b16 %v3560, %v3559
    %v3570 = vpack.c.b16 %v3562, %v3561
    %3579 = vmatprep.subr.bf16.mxu0 0
    %3580 = vmatpush1.bf16.msra.mxu0 %v3563
    %3581 = vmatprep.subr.bf16.mxu0 0
    %3582 = vmatpush1.bf16.msra.mxu0 %v3564
    %3583 = vmatprep.subr.bf16.mxu0 0
    %3584 = vmatpush1.bf16.msra.mxu0 %v3565
    %3585 = vmatprep.subr.bf16.mxu0 0
    %3586 = vmatpush1.bf16.msra.mxu0 %v3566
    %3587 = vmatprep.subr.bf16.mxu0 0
    %3588 = vmatpush1.bf16.msra.mxu0 %v3567
    %3589 = vmatprep.subr.bf16.mxu0 0
    %3590 = vmatpush1.bf16.msra.mxu0 %v3568
    %3591 = vmatprep.subr.bf16.mxu0 0
    %3592 = vmatpush1.bf16.msra.mxu0 %v3569
    %3593 = vmatprep.subr.bf16.mxu0 0
    %3594 = vmatpush1.bf16.msra.mxu0 %v3570
    %3595 = vmatprep.subr.bf16.mxu0 0
    %3596 = vmatpush1.bf16.msra.mxu0 0
    %3597 = vmatprep.subr.bf16.mxu0 0
    %3598 = vmatpush1.bf16.msra.mxu0 0
    %3599 = vmatprep.subr.bf16.mxu0 0
    %3600 = vmatpush1.bf16.msra.mxu0 0
    %3601 = vmatprep.subr.bf16.mxu0 0
    %3602 = vmatpush1.bf16.msra.mxu0 0
    %3603 = vmatprep.subr.bf16.mxu0 0
    %3604 = vmatpush1.bf16.msra.mxu0 0
    %3605 = vmatprep.subr.bf16.mxu0 0
    %3606 = vmatpush1.bf16.msra.mxu0 0
    %3607 = vmatprep.subr.bf16.mxu0 0
    %3608 = vmatpush1.bf16.msra.mxu0 0
    %3609 = vmatprep.subr.bf16.mxu0 0
    %3610 = vmatpush1.bf16.msra.mxu0 0
    %3611 = vmatprep.mubr.bf16.mxu0 0
    %3612 = vmatmul.mubr.bf16.gmra.mrb[0].mxu0 %v3514
    %v3613 = vpop.f32.mrb[0].mxu0
    %v3614 = vadd.f32 %v125, %v3613
    %v3615 = vpop.f32.mrb[0].mxu0
    %v3616 = vpop.f32.mrb[0].mxu0
    %v3617 = vadd.f32 %v125, %v3616
    %v3618 = vpop.f32.mrb[0].mxu0
    %3619 = vdwg.mxu0
    %v3620 = vmax.f32 %v3614, 0.0
    %v3621 = vmax.f32 %v3617, 0.0
    %v3622 = vpack.c.bf16 %v3621, %v3620
    %v3623 = vld [vmem:[#allocation8 + $0x8] sm:$0xf]
    %v3624 = vld [vmem:[#allocation8 + $0x1c] sm:$0xf]
    %v3625 = vld [vmem:[#allocation8 + $0x30] sm:$0xf]
    %v3626 = vld [vmem:[#allocation8 + $0x44] sm:$0xf]
    %v3627 = vld [vmem:[#allocation8 + $0x58] sm:$0xf]
    %v3628 = vld [vmem:[#allocation8 + $0x6c] sm:$0xf]
    %v3629 = vld [vmem:[#allocation8 + $0x80] sm:$0xf]
    %v3630 = vld [vmem:[#allocation8 + $0x94] sm:$0xf]
    %v3631 = vld [vmem:[#allocation8 + $0xa8] sm:$0xf]
    %v3632 = vld [vmem:[#allocation8 + $0xbc] sm:$0xf]
    %v3633 = vld [vmem:[#allocation8 + $0xd0] sm:$0xf]
    %v3634 = vld [vmem:[#allocation8 + $0xe4] sm:$0xf]
    %v3635 = vld [vmem:[#allocation8 + $0xf8] sm:$0xf]
    %v3636 = vld [vmem:[#allocation8 + $0x10c] sm:$0xf]
    %v3637 = vld [vmem:[#allocation8 + $0x120] sm:$0xf]
    %v3638 = vld [vmem:[#allocation8 + $0x134] sm:$0xf]
    %v3655 = vunpack.c.l.b16 %v3623
    %v3656 = vunpack.c.l.b16 %v3624
    %v3657 = vunpack.c.l.b16 %v3625
    %v3658 = vunpack.c.l.b16 %v3626
    %v3659 = vunpack.c.l.b16 %v3627
    %v3660 = vunpack.c.l.b16 %v3628
    %v3661 = vunpack.c.l.b16 %v3629
    %v3662 = vunpack.c.l.b16 %v3630
    %v3663 = vunpack.c.l.b16 %v3631
    %v3664 = vunpack.c.l.b16 %v3632
    %v3665 = vunpack.c.l.b16 %v3633
    %v3666 = vunpack.c.l.b16 %v3634
    %v3667 = vunpack.c.l.b16 %v3635
    %v3668 = vunpack.c.l.b16 %v3636
    %v3669 = vunpack.c.l.b16 %v3637
    %v3670 = vunpack.c.l.b16 %v3638
    %v3671 = vpack.c.b16 %v3656, %v3655
    %v3672 = vpack.c.b16 %v3658, %v3657
    %v3673 = vpack.c.b16 %v3660, %v3659
    %v3674 = vpack.c.b16 %v3662, %v3661
    %v3675 = vpack.c.b16 %v3664, %v3663
    %v3676 = vpack.c.b16 %v3666, %v3665
    %v3677 = vpack.c.b16 %v3668, %v3667
    %v3678 = vpack.c.b16 %v3670, %v3669
    %3687 = vmatprep.subr.bf16.mxu0 0
    %3688 = vmatpush1.bf16.msra.mxu0 %v3671
    %3689 = vmatprep.subr.bf16.mxu0 0
    %3690 = vmatpush1.bf16.msra.mxu0 %v3672
    %3691 = vmatprep.subr.bf16.mxu0 0
    %3692 = vmatpush1.bf16.msra.mxu0 %v3673
    %3693 = vmatprep.subr.bf16.mxu0 0
    %3694 = vmatpush1.bf16.msra.mxu0 %v3674
    %3695 = vmatprep.subr.bf16.mxu0 0
    %3696 = vmatpush1.bf16.msra.mxu0 %v3675
    %3697 = vmatprep.subr.bf16.mxu0 0
    %3698 = vmatpush1.bf16.msra.mxu0 %v3676
    %3699 = vmatprep.subr.bf16.mxu0 0
    %3700 = vmatpush1.bf16.msra.mxu0 %v3677
    %3701 = vmatprep.subr.bf16.mxu0 0
    %3702 = vmatpush1.bf16.msra.mxu0 %v3678
    %3703 = vmatprep.subr.bf16.mxu0 0
    %3704 = vmatpush1.bf16.msra.mxu0 0
    %3705 = vmatprep.subr.bf16.mxu0 0
    %3706 = vmatpush1.bf16.msra.mxu0 0
    %3707 = vmatprep.subr.bf16.mxu0 0
    %3708 = vmatpush1.bf16.msra.mxu0 0
    %3709 = vmatprep.subr.bf16.mxu0 0
    %3710 = vmatpush1.bf16.msra.mxu0 0
    %3711 = vmatprep.subr.bf16.mxu0 0
    %3712 = vmatpush1.bf16.msra.mxu0 0
    %3713 = vmatprep.subr.bf16.mxu0 0
    %3714 = vmatpush1.bf16.msra.mxu0 0
    %3715 = vmatprep.subr.bf16.mxu0 0
    %3716 = vmatpush1.bf16.msra.mxu0 0
    %3717 = vmatprep.subr.bf16.mxu0 0
    %3718 = vmatpush1.bf16.msra.mxu0 0
    %3719 = vmatprep.mubr.bf16.mxu0 0
    %3720 = vmatmul.mubr.bf16.gmra.mrb[0].mxu0 %v3622
    %v3721 = vpop.f32.mrb[0].mxu0
    %v3722 = vadd.f32 0.0, %v3721
    %v3723 = vpop.f32.mrb[0].mxu0
    %v3724 = vpop.f32.mrb[0].mxu0
    %v3725 = vadd.f32 0.0, %v3724
    %v3726 = vpop.f32.mrb[0].mxu0
    %3727 = vdwg.mxu0
    %v3728 = vadd.f32 %v3486, %v3722
    %v3729 = vadd.f32 %v3487, %v3725
    %v3730 = vadd.f32 %v3728, %v126
    %v3731 = vadd.f32 %v3729, %v126
    %3732 = vst [vmem:[#allocation13] sm:$0xff] %v3730
    %3733 = vst [vmem:[#allocation13 + $0x8] sm:$0xff] %v3731
    %3734 = vst.msk [vmem:[#allocation14] sm:$0xff] %vm580, %v2868
    %3735 = vst.msk [vmem:[#allocation14 + $0x8] sm:$0xff] %vm580, %v2869
    %3736 = vadd.xlane.f32.xlu0 %v3730
    %v3737 = vpop.xlane.xlu0 %3736
    %3738 = vadd.xlane.f32.xlu0 %v3731
    %v3739 = vpop.xlane.xlu0 %3738
    %v3740 = vmul.f32 %v3737, %v363
    %v3741 = vmul.f32 %v3739, %v363
    %v3742 = vsub.f32 %v3730, %v3740
    %v3743 = vsub.f32 %v3731, %v3741
    %v3744 = vmul.f32 %v3742, %v3742
    %v3745 = vmul.f32 %v3743, %v3743
    %3746 = vadd.xlane.f32.xlu0 %v3744
    %v3747 = vpop.xlane.xlu0 %3746
    %3748 = vadd.xlane.f32.xlu0 %v3745
    %v3749 = vpop.xlane.xlu0 %3748
    %v3750 = vmul.f32 %v3747, %v363
    %v3751 = vmul.f32 %v3749, %v363
    %v3752 = vadd.f32 %v3750, 1e-05
    %v3753 = vadd.f32 %v3751, 1e-05
    %v3754 = vrsqrt.pop %v3752
    %v3755 = vrsqrt.pop %v3753
    %v3756 = vmul.f32 %v3742, %v3754
    %v3757 = vmul.f32 %v3743, %v3755
    %v3758 = vmul.f32 %v3756, %v117
    %v3759 = vmul.f32 %v3757, %v117
    %v3760 = vadd.f32 %v3758, %v118
    %v3761 = vadd.f32 %v3759, %v118
    %v3762 = vpack.c.bf16 %v3761, %v3760
    %v3763 = vld [vmem:[#allocation8 + $0xc] sm:$0xff]
    %v3764 = vld [vmem:[#allocation8 + $0x20] sm:$0xff]
    %v3765 = vld [vmem:[#allocation8 + $0x34] sm:$0xff]
    %v3766 = vld [vmem:[#allocation8 + $0x48] sm:$0xff]
    %v3767 = vld [vmem:[#allocation8 + $0x5c] sm:$0xff]
    %v3768 = vld [vmem:[#allocation8 + $0x70] sm:$0xff]
    %v3769 = vld [vmem:[#allocation8 + $0x84] sm:$0xff]
    %v3770 = vld [vmem:[#allocation8 + $0x98] sm:$0xff]
    %v3771 = vld [vmem:[#allocation8 + $0xac] sm:$0xff]
    %v3772 = vld [vmem:[#allocation8 + $0xc0] sm:$0xff]
    %v3773 = vld [vmem:[#allocation8 + $0xd4] sm:$0xff]
    %v3774 = vld [vmem:[#allocation8 + $0xe8] sm:$0xff]
    %v3775 = vld [vmem:[#allocation8 + $0xfc] sm:$0xff]
    %v3776 = vld [vmem:[#allocation8 + $0x110] sm:$0xff]
    %v3777 = vld [vmem:[#allocation8 + $0x124] sm:$0xff]
    %v3778 = vld [vmem:[#allocation8 + $0x138] sm:$0xff]
    %v3780 = vlaneseq
    %v3781 = vshrl.u32 %v3780, 7
    %v3782 = vsub.s32 0, %v3781
    %v3783 = vrot.slane %v128, %v3782
    %v3784 = vlaneseq
    %v3785 = vshrl.u32 %v3784, 7
    %v3786 = vsub.s32 1, %v3785
    %v3787 = vrot.slane %v128, %v3786
    %v3806 = vunpack.c.l.b16 %v3763
    %v3807 = vunpack.c.h.b16 %v3763
    %v3808 = vunpack.c.l.b16 %v3764
    %v3809 = vunpack.c.h.b16 %v3764
    %v3810 = vunpack.c.l.b16 %v3765
    %v3811 = vunpack.c.h.b16 %v3765
    %v3812 = vunpack.c.l.b16 %v3766
    %v3813 = vunpack.c.h.b16 %v3766
    %v3814 = vunpack.c.l.b16 %v3767
    %v3815 = vunpack.c.h.b16 %v3767
    %v3816 = vunpack.c.l.b16 %v3768
    %v3817 = vunpack.c.h.b16 %v3768
    %v3818 = vunpack.c.l.b16 %v3769
    %v3819 = vunpack.c.h.b16 %v3769
    %v3820 = vunpack.c.l.b16 %v3770
    %v3821 = vunpack.c.h.b16 %v3770
    %v3822 = vunpack.c.l.b16 %v3771
    %v3823 = vunpack.c.h.b16 %v3771
    %v3824 = vunpack.c.l.b16 %v3772
    %v3825 = vunpack.c.h.b16 %v3772
    %v3826 = vunpack.c.l.b16 %v3773
    %v3827 = vunpack.c.h.b16 %v3773
    %v3828 = vunpack.c.l.b16 %v3774
    %v3829 = vunpack.c.h.b16 %v3774
    %v3830 = vunpack.c.l.b16 %v3775
    %v3831 = vunpack.c.h.b16 %v3775
    %v3832 = vunpack.c.l.b16 %v3776
    %v3833 = vunpack.c.h.b16 %v3776
    %v3834 = vunpack.c.l.b16 %v3777
    %v3835 = vunpack.c.h.b16 %v3777
    %v3836 = vunpack.c.l.b16 %v3778
    %v3837 = vunpack.c.h.b16 %v3778
    %v3838 = vpack.c.b16 %v3808, %v3806
    %v3839 = vpack.c.b16 %v3809, %v3807
    %v3840 = vpack.c.b16 %v3812, %v3810
    %v3841 = vpack.c.b16 %v3813, %v3811
    %v3842 = vpack.c.b16 %v3816, %v3814
    %v3843 = vpack.c.b16 %v3817, %v3815
    %v3844 = vpack.c.b16 %v3820, %v3818
    %v3845 = vpack.c.b16 %v3821, %v3819
    %v3846 = vpack.c.b16 %v3824, %v3822
    %v3847 = vpack.c.b16 %v3825, %v3823
    %v3848 = vpack.c.b16 %v3828, %v3826
    %v3849 = vpack.c.b16 %v3829, %v3827
    %v3850 = vpack.c.b16 %v3832, %v3830
    %v3851 = vpack.c.b16 %v3833, %v3831
    %v3852 = vpack.c.b16 %v3836, %v3834
    %v3853 = vpack.c.b16 %v3837, %v3835
    %3870 = vmatprep.subr.bf16.mxu0 %v3839
    %3871 = vmatpush1.bf16.msra.mxu0 %v3838
    %3872 = vmatprep.subr.bf16.mxu0 %v3841
    %3873 = vmatpush1.bf16.msra.mxu0 %v3840
    %3874 = vmatprep.subr.bf16.mxu0 %v3843
    %3875 = vmatpush1.bf16.msra.mxu0 %v3842
    %3876 = vmatprep.subr.bf16.mxu0 %v3845
    %3877 = vmatpush1.bf16.msra.mxu0 %v3844
    %3878 = vmatprep.subr.bf16.mxu0 %v3847
    %3879 = vmatpush1.bf16.msra.mxu0 %v3846
    %3880 = vmatprep.subr.bf16.mxu0 %v3849
    %3881 = vmatpush1.bf16.msra.mxu0 %v3848
    %3882 = vmatprep.subr.bf16.mxu0 %v3851
    %3883 = vmatpush1.bf16.msra.mxu0 %v3850
    %3884 = vmatprep.subr.bf16.mxu0 %v3853
    %3885 = vmatpush1.bf16.msra.mxu0 %v3852
    %3886 = vmatprep.subr.bf16.mxu0 0
    %3887 = vmatpush1.bf16.msra.mxu0 0
    %3888 = vmatprep.subr.bf16.mxu0 0
    %3889 = vmatpush1.bf16.msra.mxu0 0
    %3890 = vmatprep.subr.bf16.mxu0 0
    %3891 = vmatpush1.bf16.msra.mxu0 0
    %3892 = vmatprep.subr.bf16.mxu0 0
    %3893 = vmatpush1.bf16.msra.mxu0 0
    %3894 = vmatprep.subr.bf16.mxu0 0
    %3895 = vmatpush1.bf16.msra.mxu0 0
    %3896 = vmatprep.subr.bf16.mxu0 0
    %3897 = vmatpush1.bf16.msra.mxu0 0
    %3898 = vmatprep.subr.bf16.mxu0 0
    %3899 = vmatpush1.bf16.msra.mxu0 0
    %3900 = vmatprep.subr.bf16.mxu0 0
    %3901 = vmatpush1.bf16.msra.mxu0 0
    %3902 = vmatprep.mubr.bf16.mxu0 0
    %3903 = vmatmul.mubr.bf16.gmra.mrb[0].mxu0 %v3762
    %v3904 = vpop.f32.mrb[0].mxu0
    %v3905 = vadd.f32 %v3783, %v3904
    %v3906 = vpop.f32.mrb[0].mxu0
    %v3907 = vadd.f32 %v3787, %v3906
    %v3908 = vpop.f32.mrb[0].mxu0
    %v3909 = vadd.f32 %v3783, %v3908
    %v3910 = vpop.f32.mrb[0].mxu0
    %v3911 = vadd.f32 %v3787, %v3910
    %3912 = vdwg.mxu0
    %v3913 = vmax.f32 %v3905, 0.0
    %v3914 = vmax.f32 %v3907, 0.0
    %v3915 = vmax.f32 %v3909, 0.0
    %v3916 = vmax.f32 %v3911, 0.0
    %v3917 = vpack.c.bf16 %v3915, %v3913
    %v3918 = vpack.c.bf16 %v3916, %v3914
    %v3919 = vld [vmem:[#allocation11 + $0x10] sm:$0xf]
    %v3920 = vld [vmem:[#allocation11 + $0x24] sm:$0xf]
    %v3921 = vld [vmem:[#allocation11 + $0x38] sm:$0xf]
    %v3922 = vld [vmem:[#allocation11 + $0x4c] sm:$0xf]
    %v3923 = vld [vmem:[#allocation11 + $0x60] sm:$0xf]
    %v3924 = vld [vmem:[#allocation11 + $0x74] sm:$0xf]
    %v3925 = vld [vmem:[#allocation11 + $0x88] sm:$0xf]
    %v3926 = vld [vmem:[#allocation11 + $0x9c] sm:$0xf]
    %v3927 = vld [vmem:[#allocation11 + $0xb0] sm:$0xf]
    %v3928 = vld [vmem:[#allocation11 + $0xc4] sm:$0xf]
    %v3929 = vld [vmem:[#allocation11 + $0xd8] sm:$0xf]
    %v3930 = vld [vmem:[#allocation11 + $0xec] sm:$0xf]
    %v3931 = vld [vmem:[#allocation11 + $0x100] sm:$0xf]
    %v3932 = vld [vmem:[#allocation11 + $0x114] sm:$0xf]
    %v3933 = vld [vmem:[#allocation11 + $0x128] sm:$0xf]
    %v3934 = vld [vmem:[#allocation11 + $0x13c] sm:$0xf]
    %v3935 = vld [vmem:[#allocation11 + $0x150] sm:$0xf]
    %v3936 = vld [vmem:[#allocation11 + $0x164] sm:$0xf]
    %v3937 = vld [vmem:[#allocation11 + $0x178] sm:$0xf]
    %v3938 = vld [vmem:[#allocation11 + $0x18c] sm:$0xf]
    %v3939 = vld [vmem:[#allocation11 + $0x1a0] sm:$0xf]
    %v3940 = vld [vmem:[#allocation11 + $0x1b4] sm:$0xf]
    %v3941 = vld [vmem:[#allocation11 + $0x1c8] sm:$0xf]
    %v3942 = vld [vmem:[#allocation11 + $0x1dc] sm:$0xf]
    %v3943 = vld [vmem:[#allocation11 + $0x1f0] sm:$0xf]
    %v3944 = vld [vmem:[#allocation11 + $0x204] sm:$0xf]
    %v3945 = vld [vmem:[#allocation11 + $0x218] sm:$0xf]
    %v3946 = vld [vmem:[#allocation11 + $0x22c] sm:$0xf]
    %v3947 = vld [vmem:[#allocation11 + $0x240] sm:$0xf]
    %v3948 = vld [vmem:[#allocation11 + $0x254] sm:$0xf]
    %v3949 = vld [vmem:[#allocation11 + $0x268] sm:$0xf]
    %v3950 = vld [vmem:[#allocation11 + $0x27c] sm:$0xf]
    %v3983 = vunpack.c.l.b16 %v3919
    %v3984 = vunpack.c.l.b16 %v3920
    %v3985 = vunpack.c.l.b16 %v3921
    %v3986 = vunpack.c.l.b16 %v3922
    %v3987 = vunpack.c.l.b16 %v3923
    %v3988 = vunpack.c.l.b16 %v3924
    %v3989 = vunpack.c.l.b16 %v3925
    %v3990 = vunpack.c.l.b16 %v3926
    %v3991 = vunpack.c.l.b16 %v3927
    %v3992 = vunpack.c.l.b16 %v3928
    %v3993 = vunpack.c.l.b16 %v3929
    %v3994 = vunpack.c.l.b16 %v3930
    %v3995 = vunpack.c.l.b16 %v3931
    %v3996 = vunpack.c.l.b16 %v3932
    %v3997 = vunpack.c.l.b16 %v3933
    %v3998 = vunpack.c.l.b16 %v3934
    %v3999 = vunpack.c.l.b16 %v3935
    %v4000 = vunpack.c.l.b16 %v3936
    %v4001 = vunpack.c.l.b16 %v3937
    %v4002 = vunpack.c.l.b16 %v3938
    %v4003 = vunpack.c.l.b16 %v3939
    %v4004 = vunpack.c.l.b16 %v3940
    %v4005 = vunpack.c.l.b16 %v3941
    %v4006 = vunpack.c.l.b16 %v3942
    %v4007 = vunpack.c.l.b16 %v3943
    %v4008 = vunpack.c.l.b16 %v3944
    %v4009 = vunpack.c.l.b16 %v3945
    %v4010 = vunpack.c.l.b16 %v3946
    %v4011 = vunpack.c.l.b16 %v3947
    %v4012 = vunpack.c.l.b16 %v3948
    %v4013 = vunpack.c.l.b16 %v3949
    %v4014 = vunpack.c.l.b16 %v3950
    %v4015 = vpack.c.b16 %v3984, %v3983
    %v4016 = vpack.c.b16 %v3986, %v3985
    %v4017 = vpack.c.b16 %v3988, %v3987
    %v4018 = vpack.c.b16 %v3990, %v3989
    %v4019 = vpack.c.b16 %v3992, %v3991
    %v4020 = vpack.c.b16 %v3994, %v3993
    %v4021 = vpack.c.b16 %v3996, %v3995
    %v4022 = vpack.c.b16 %v3998, %v3997
    %v4023 = vpack.c.b16 %v4000, %v3999
    %v4024 = vpack.c.b16 %v4002, %v4001
    %v4025 = vpack.c.b16 %v4004, %v4003
    %v4026 = vpack.c.b16 %v4006, %v4005
    %v4027 = vpack.c.b16 %v4008, %v4007
    %v4028 = vpack.c.b16 %v4010, %v4009
    %v4029 = vpack.c.b16 %v4012, %v4011
    %v4030 = vpack.c.b16 %v4014, %v4013
    %4047 = vmatprep.subr.bf16.mxu0 0
    %4048 = vmatpush1.bf16.msra.mxu0 %v4015
    %4049 = vmatprep.subr.bf16.mxu0 0
    %4050 = vmatpush1.bf16.msra.mxu0 %v4016
    %4051 = vmatprep.subr.bf16.mxu0 0
    %4052 = vmatpush1.bf16.msra.mxu0 %v4017
    %4053 = vmatprep.subr.bf16.mxu0 0
    %4054 = vmatpush1.bf16.msra.mxu0 %v4018
    %4055 = vmatprep.subr.bf16.mxu0 0
    %4056 = vmatpush1.bf16.msra.mxu0 %v4019
    %4057 = vmatprep.subr.bf16.mxu0 0
    %4058 = vmatpush1.bf16.msra.mxu0 %v4020
    %4059 = vmatprep.subr.bf16.mxu0 0
    %4060 = vmatpush1.bf16.msra.mxu0 %v4021
    %4061 = vmatprep.subr.bf16.mxu0 0
    %4062 = vmatpush1.bf16.msra.mxu0 %v4022
    %4063 = vmatprep.subr.bf16.mxu0 0
    %4064 = vmatpush1.bf16.msra.mxu0 %v4023
    %4065 = vmatprep.subr.bf16.mxu0 0
    %4066 = vmatpush1.bf16.msra.mxu0 %v4024
    %4067 = vmatprep.subr.bf16.mxu0 0
    %4068 = vmatpush1.bf16.msra.mxu0 %v4025
    %4069 = vmatprep.subr.bf16.mxu0 0
    %4070 = vmatpush1.bf16.msra.mxu0 %v4026
    %4071 = vmatprep.subr.bf16.mxu0 0
    %4072 = vmatpush1.bf16.msra.mxu0 %v4027
    %4073 = vmatprep.subr.bf16.mxu0 0
    %4074 = vmatpush1.bf16.msra.mxu0 %v4028
    %4075 = vmatprep.subr.bf16.mxu0 0
    %4076 = vmatpush1.bf16.msra.mxu0 %v4029
    %4077 = vmatprep.subr.bf16.mxu0 0
    %4078 = vmatpush1.bf16.msra.mxu0 %v4030
    %4079 = vmatprep.mubr.bf16.mxu0 %v3918
    %4080 = vmatmul.mubr.bf16.gmra.mrb[0].mxu0 %v3917
    %v4081 = vpop.f32.mrb[0].mxu0
    %v4082 = vadd.f32 %v129, %v4081
    %v4083 = vpop.f32.mrb[0].mxu0
    %v4084 = vpop.f32.mrb[0].mxu0
    %v4085 = vadd.f32 %v129, %v4084
    %v4086 = vpop.f32.mrb[0].mxu0
    %4087 = vdwg.mxu0
    %v4088 = vmax.f32 %v4082, 0.0
    %v4089 = vmax.f32 %v4085, 0.0
    %v4090 = vpack.c.bf16 %v4089, %v4088
    %v4091 = vld [vmem:[#allocation10 + $0x8] sm:$0xf]
    %v4092 = vld [vmem:[#allocation10 + $0x14] sm:$0xf]
    %v4093 = vld [vmem:[#allocation10 + $0x20] sm:$0xf]
    %v4094 = vld [vmem:[#allocation10 + $0x2c] sm:$0xf]
    %v4095 = vld [vmem:[#allocation10 + $0x38] sm:$0xf]
    %v4096 = vld [vmem:[#allocation10 + $0x44] sm:$0xf]
    %v4097 = vld [vmem:[#allocation10 + $0x50] sm:$0xf]
    %v4098 = vld [vmem:[#allocation10 + $0x5c] sm:$0xf]
    %v4099 = vld [vmem:[#allocation10 + $0x68] sm:$0xf]
    %v4100 = vld [vmem:[#allocation10 + $0x74] sm:$0xf]
    %v4101 = vld [vmem:[#allocation10 + $0x80] sm:$0xf]
    %v4102 = vld [vmem:[#allocation10 + $0x8c] sm:$0xf]
    %v4103 = vld [vmem:[#allocation10 + $0x98] sm:$0xf]
    %v4104 = vld [vmem:[#allocation10 + $0xa4] sm:$0xf]
    %v4105 = vld [vmem:[#allocation10 + $0xb0] sm:$0xf]
    %v4106 = vld [vmem:[#allocation10 + $0xbc] sm:$0xf]
    %v4123 = vunpack.c.l.b16 %v4091
    %v4124 = vunpack.c.l.b16 %v4092
    %v4125 = vunpack.c.l.b16 %v4093
    %v4126 = vunpack.c.l.b16 %v4094
    %v4127 = vunpack.c.l.b16 %v4095
    %v4128 = vunpack.c.l.b16 %v4096
    %v4129 = vunpack.c.l.b16 %v4097
    %v4130 = vunpack.c.l.b16 %v4098
    %v4131 = vunpack.c.l.b16 %v4099
    %v4132 = vunpack.c.l.b16 %v4100
    %v4133 = vunpack.c.l.b16 %v4101
    %v4134 = vunpack.c.l.b16 %v4102
    %v4135 = vunpack.c.l.b16 %v4103
    %v4136 = vunpack.c.l.b16 %v4104
    %v4137 = vunpack.c.l.b16 %v4105
    %v4138 = vunpack.c.l.b16 %v4106
    %v4139 = vpack.c.b16 %v4124, %v4123
    %v4140 = vpack.c.b16 %v4126, %v4125
    %v4141 = vpack.c.b16 %v4128, %v4127
    %v4142 = vpack.c.b16 %v4130, %v4129
    %v4143 = vpack.c.b16 %v4132, %v4131
    %v4144 = vpack.c.b16 %v4134, %v4133
    %v4145 = vpack.c.b16 %v4136, %v4135
    %v4146 = vpack.c.b16 %v4138, %v4137
    %4155 = vmatprep.subr.bf16.mxu0 0
    %4156 = vmatpush1.bf16.msra.mxu0 %v4139
    %4157 = vmatprep.subr.bf16.mxu0 0
    %4158 = vmatpush1.bf16.msra.mxu0 %v4140
    %4159 = vmatprep.subr.bf16.mxu0 0
    %4160 = vmatpush1.bf16.msra.mxu0 %v4141
    %4161 = vmatprep.subr.bf16.mxu0 0
    %4162 = vmatpush1.bf16.msra.mxu0 %v4142
    %4163 = vmatprep.subr.bf16.mxu0 0
    %4164 = vmatpush1.bf16.msra.mxu0 %v4143
    %4165 = vmatprep.subr.bf16.mxu0 0
    %4166 = vmatpush1.bf16.msra.mxu0 %v4144
    %4167 = vmatprep.subr.bf16.mxu0 0
    %4168 = vmatpush1.bf16.msra.mxu0 %v4145
    %4169 = vmatprep.subr.bf16.mxu0 0
    %4170 = vmatpush1.bf16.msra.mxu0 %v4146
    %4171 = vmatprep.subr.bf16.mxu0 0
    %4172 = vmatpush1.bf16.msra.mxu0 0
    %4173 = vmatprep.subr.bf16.mxu0 0
    %4174 = vmatpush1.bf16.msra.mxu0 0
    %4175 = vmatprep.subr.bf16.mxu0 0
    %4176 = vmatpush1.bf16.msra.mxu0 0
    %4177 = vmatprep.subr.bf16.mxu0 0
    %4178 = vmatpush1.bf16.msra.mxu0 0
    %4179 = vmatprep.subr.bf16.mxu0 0
    %4180 = vmatpush1.bf16.msra.mxu0 0
    %4181 = vmatprep.subr.bf16.mxu0 0
    %4182 = vmatpush1.bf16.msra.mxu0 0
    %4183 = vmatprep.subr.bf16.mxu0 0
    %4184 = vmatpush1.bf16.msra.mxu0 0
    %4185 = vmatprep.subr.bf16.mxu0 0
    %4186 = vmatpush1.bf16.msra.mxu0 0
    %4187 = vmatprep.mubr.bf16.mxu0 0
    %4188 = vmatmul.mubr.bf16.gmra.mrb[0].mxu0 %v4090
    %v4189 = vpop.f32.mrb[0].mxu0
    %v4190 = vadd.f32 %v130, %v4189
    %v4191 = vpop.f32.mrb[0].mxu0
    %v4192 = vpop.f32.mrb[0].mxu0
    %v4193 = vadd.f32 %v130, %v4192
    %v4194 = vpop.f32.mrb[0].mxu0
    %4195 = vdwg.mxu0
    %v4196 = vpack.c.bf16 %v4193, %v4190
    %v4198 = vunpack.c.l.b16 %v4196
    %v4199 = vunpack.c.h.b16 %v4196
    %v4200 = vpack.c.b16 %v4198, %v4198
    %v4201 = vpack.c.b16 %v4199, %v4199
    %4202 = vxpose.xlu0.b32.start [1/16] %v2868, 128
    %4203 = vxpose.xlu0.b32.cont [2/16] 0.0, 128
    %4204 = vxpose.xlu0.b32.cont [3/16] 0.0, 128
    %4205 = vxpose.xlu0.b32.cont [4/16] 0.0, 128
    %4206 = vxpose.xlu0.b32.cont [5/16] 0.0, 128
    %4207 = vxpose.xlu0.b32.cont [6/16] 0.0, 128
    %4208 = vxpose.xlu0.b32.cont [7/16] 0.0, 128
    %4209 = vxpose.xlu0.b32.cont [8/16] 0.0, 128
    %4210 = vxpose.xlu0.b32.cont [9/16] 0.0, 128
    %4211 = vxpose.xlu0.b32.cont [10/16] 0.0, 128
    %4212 = vxpose.xlu0.b32.cont [11/16] 0.0, 128
    %4213 = vxpose.xlu0.b32.cont [12/16] 0.0, 128
    %4214 = vxpose.xlu0.b32.cont [13/16] 0.0, 128
    %4215 = vxpose.xlu0.b32.cont [14/16] 0.0, 128
    %4216 = vxpose.xlu0.b32.cont [15/16] 0.0, 128
    %4217 = vxpose.xlu0.b32.end [16/16] 0.0, 128
    %v4218 = vpop.trf.xlu0
    %v4219 = vpop.trf.xlu0
    %v4220 = vpop.trf.xlu0
    %v4221 = vpop.trf.xlu0
    %v4222 = vpop.trf.xlu0
    %v4223 = vpop.trf.xlu0
    %v4224 = vpop.trf.xlu0
    %v4225 = vpop.trf.xlu0
    %v4226 = vpop.trf.xlu0
    %v4227 = vpop.trf.xlu0
    %v4228 = vpop.trf.xlu0
    %v4229 = vpop.trf.xlu0
    %v4230 = vpop.trf.xlu0
    %v4231 = vpop.trf.xlu0
    %v4232 = vpop.trf.xlu0
    %v4233 = vpop.trf.xlu0
    %4234 = vxpose.xlu0.b32.start [1/16] %v2869, 128
    %4235 = vxpose.xlu0.b32.cont [2/16] 0.0, 128
    %4236 = vxpose.xlu0.b32.cont [3/16] 0.0, 128
    %4237 = vxpose.xlu0.b32.cont [4/16] 0.0, 128
    %4238 = vxpose.xlu0.b32.cont [5/16] 0.0, 128
    %4239 = vxpose.xlu0.b32.cont [6/16] 0.0, 128
    %4240 = vxpose.xlu0.b32.cont [7/16] 0.0, 128
    %4241 = vxpose.xlu0.b32.cont [8/16] 0.0, 128
    %4242 = vxpose.xlu0.b32.cont [9/16] 0.0, 128
    %4243 = vxpose.xlu0.b32.cont [10/16] 0.0, 128
    %4244 = vxpose.xlu0.b32.cont [11/16] 0.0, 128
    %4245 = vxpose.xlu0.b32.cont [12/16] 0.0, 128
    %4246 = vxpose.xlu0.b32.cont [13/16] 0.0, 128
    %4247 = vxpose.xlu0.b32.cont [14/16] 0.0, 128
    %4248 = vxpose.xlu0.b32.cont [15/16] 0.0, 128
    %4249 = vxpose.xlu0.b32.end [16/16] 0.0, 128
    %v4250 = vpop.trf.xlu0
    %v4251 = vpop.trf.xlu0
    %v4252 = vpop.trf.xlu0
    %v4253 = vpop.trf.xlu0
    %v4254 = vpop.trf.xlu0
    %v4255 = vpop.trf.xlu0
    %v4256 = vpop.trf.xlu0
    %v4257 = vpop.trf.xlu0
    %v4258 = vpop.trf.xlu0
    %v4259 = vpop.trf.xlu0
    %v4260 = vpop.trf.xlu0
    %v4261 = vpop.trf.xlu0
    %v4262 = vpop.trf.xlu0
    %v4263 = vpop.trf.xlu0
    %v4264 = vpop.trf.xlu0
    %v4265 = vpop.trf.xlu0
    %v4266 = vpack.c.bf16 %v4219, %v4218
    %v4267 = vpack.c.bf16 %v4251, %v4250
    %vm4268 = vcmask 64512
    %v4270 = vsel %vm4268, %v4266, 0
    %vm4272 = vcmask 1043456
    %v4274 = vsel %vm4272, %v4200, 0
    %4276 = vmatprep.subr.bf16.mxu0 0
    %4277 = vmatpush1.bf16.msra.mxu0 %v4274
    %4278 = vmatprep.subr.bf16.mxu0 0
    %4279 = vmatpush1.bf16.msra.mxu0 0
    %4280 = vmatprep.subr.bf16.mxu0 0
    %4281 = vmatpush1.bf16.msra.mxu0 0
    %4282 = vmatprep.subr.bf16.mxu0 0
    %4283 = vmatpush1.bf16.msra.mxu0 0
    %4284 = vmatprep.subr.bf16.mxu0 0
    %4285 = vmatpush1.bf16.msra.mxu0 0
    %4286 = vmatprep.subr.bf16.mxu0 0
    %4287 = vmatpush1.bf16.msra.mxu0 0
    %4288 = vmatprep.subr.bf16.mxu0 0
    %4289 = vmatpush1.bf16.msra.mxu0 0
    %4290 = vmatprep.subr.bf16.mxu0 0
    %4291 = vmatpush1.bf16.msra.mxu0 0
    %4292 = vmatprep.subr.bf16.mxu0 0
    %4293 = vmatpush1.bf16.msra.mxu0 0
    %4294 = vmatprep.subr.bf16.mxu0 0
    %4295 = vmatpush1.bf16.msra.mxu0 0
    %4296 = vmatprep.subr.bf16.mxu0 0
    %4297 = vmatpush1.bf16.msra.mxu0 0
    %4298 = vmatprep.subr.bf16.mxu0 0
    %4299 = vmatpush1.bf16.msra.mxu0 0
    %4300 = vmatprep.subr.bf16.mxu0 0
    %4301 = vmatpush1.bf16.msra.mxu0 0
    %4302 = vmatprep.subr.bf16.mxu0 0
    %4303 = vmatpush1.bf16.msra.mxu0 0
    %4304 = vmatprep.subr.bf16.mxu0 0
    %4305 = vmatpush1.bf16.msra.mxu0 0
    %4306 = vmatprep.subr.bf16.mxu0 0
    %4307 = vmatpush1.bf16.msra.mxu0 0
    %4308 = vmatprep.mubr.bf16.mxu0 0
    %4309 = vmatmul.mubr.bf16.gmra.mrb[0].mxu0 %v4270
    %v4310 = vpop.f32.mrb[0].mxu0
    %v4311 = vadd.f32 0.0, %v4310
    %v4312 = vpop.f32.mrb[0].mxu0
    %v4313 = vpop.f32.mrb[0].mxu0
    %v4314 = vadd.f32 0.0, %v4313
    %v4315 = vpop.f32.mrb[0].mxu0
    %4316 = vdwg.mxu0
    %v4318 = vsel %vm4268, %v4267, 0
    %v4321 = vsel %vm4272, %v4201, 0
    %4323 = vmatprep.subr.bf16.mxu0 0
    %4324 = vmatpush1.bf16.msra.mxu0 %v4321
    %4325 = vmatprep.subr.bf16.mxu0 0
    %4326 = vmatpush1.bf16.msra.mxu0 0
    %4327 = vmatprep.subr.bf16.mxu0 0
    %4328 = vmatpush1.bf16.msra.mxu0 0
    %4329 = vmatprep.subr.bf16.mxu0 0
    %4330 = vmatpush1.bf16.msra.mxu0 0
    %4331 = vmatprep.subr.bf16.mxu0 0
    %4332 = vmatpush1.bf16.msra.mxu0 0
    %4333 = vmatprep.subr.bf16.mxu0 0
    %4334 = vmatpush1.bf16.msra.mxu0 0
    %4335 = vmatprep.subr.bf16.mxu0 0
    %4336 = vmatpush1.bf16.msra.mxu0 0
    %4337 = vmatprep.subr.bf16.mxu0 0
    %4338 = vmatpush1.bf16.msra.mxu0 0
    %4339 = vmatprep.subr.bf16.mxu0 0
    %4340 = vmatpush1.bf16.msra.mxu0 0
    %4341 = vmatprep.subr.bf16.mxu0 0
    %4342 = vmatpush1.bf16.msra.mxu0 0
    %4343 = vmatprep.subr.bf16.mxu0 0
    %4344 = vmatpush1.bf16.msra.mxu0 0
    %4345 = vmatprep.subr.bf16.mxu0 0
    %4346 = vmatpush1.bf16.msra.mxu0 0
    %4347 = vmatprep.subr.bf16.mxu0 0
    %4348 = vmatpush1.bf16.msra.mxu0 0
    %4349 = vmatprep.subr.bf16.mxu0 0
    %4350 = vmatpush1.bf16.msra.mxu0 0
    %4351 = vmatprep.subr.bf16.mxu0 0
    %4352 = vmatpush1.bf16.msra.mxu0 0
    %4353 = vmatprep.subr.bf16.mxu0 0
    %4354 = vmatpush1.bf16.msra.mxu0 0
    %4355 = vmatprep.mubr.bf16.mxu0 0
    %4356 = vmatmul.mubr.bf16.gmra.mrb[0].mxu0 %v4318
    %v4357 = vpop.f32.mrb[0].mxu0
    %v4358 = vadd.f32 0.0, %v4357
    %v4359 = vpop.f32.mrb[0].mxu0
    %v4360 = vpop.f32.mrb[0].mxu0
    %v4361 = vadd.f32 0.0, %v4360
    %v4362 = vpop.f32.mrb[0].mxu0
    %4363 = vdwg.mxu0
    %v4364 = vld [vmem:[#allocation2] sm:$0xff]
    %v4365 = vld [vmem:[#allocation2 + $0x8] sm:$0xff]
    %v4366 = vld [vmem:[#allocation2 + $0x10] sm:$0xff]
    %v4367 = vld [vmem:[#allocation2 + $0x18] sm:$0xff]
    %v4368 = vsub.f32 %v4311, %v4364
    %v4369 = vsub.f32 %v4314, %v4365
    %v4370 = vsub.f32 %v4358, %v4366
    %v4371 = vsub.f32 %v4361, %v4367
    %v4372 = vmul.f32 %v4368, %v4368
    %v4373 = vmul.f32 %v4369, %v4369
    %v4374 = vmul.f32 %v4370, %v4370
    %v4375 = vmul.f32 %v4371, %v4371
    %4376 = vadd.xlane.f32.xlu0 %v4372
    %v4377 = vpop.xlane.xlu0 %4376
    %4378 = vadd.xlane.f32.xlu0 %v4373
    %v4379 = vpop.xlane.xlu0 %4378
    %4380 = vadd.xlane.f32.xlu0 %v4374
    %v4381 = vpop.xlane.xlu0 %4380
    %4382 = vadd.xlane.f32.xlu0 %v4375
    %v4383 = vpop.xlane.xlu0 %4382
    %v4384 = vadd.f32 %v4377, %v4379
    %v4385 = vadd.f32 %v4384, %v4381
    %v4386 = vadd.f32 %v4385, %v4383
    %v4387 = vrot.slane %v4386, 4
    %v4388 = vadd.f32 %v4386, %v4387
    %v4389 = vrot.slane %v4388, 2
    %v4390 = vadd.f32 %v4388, %v4389
    %v4391 = vrot.slane %v4390, 1
    %v4392 = vadd.f32 %v4390, %v4391
    %vm4393 = vcmask 0
    %4394 = vst.msk [vmem:[#allocation16] sm:$0x1] %vm4393, %v4392
    // Predicated region
    $region50: #{tpu_custom_call.1} parent=1 // pred_check
      _
    $region51: #{tpu_custom_call.1} parent=1 // pred_check_branch
      %4396 = sbr.rel (0) target = $region53
    $region52: #{tpu_custom_call.1} parent=1 // pred_region
      %s4398 = ssub.s32 256, 256
      %4399 = vsyncadd [#allocation4], %s4398
      %s4400 = sshll.u32 [#allocation13], 4
      %s4401 = int_to_ptr.vmem [resolvable:$true] %s4400
      %4406 = dma.vmem_to_hbm [thread:$0]  %s4401, 256, %s6, [#allocation4], 128, 128, 8
    $region53: #{tpu_custom_call.1} parent=1 // pred_fallthru
      _
    // Predicated region
    $region54: #{tpu_custom_call.1} parent=1 // pred_check
      _
    $region55: #{tpu_custom_call.1} parent=1 // pred_check_branch
      %4408 = sbr.rel (0) target = $region57
    $region56: #{tpu_custom_call.1} parent=1 // pred_region
      %s4410 = ssub.s32 256, 256
      %4411 = vsyncadd [#allocation15], %s4410
      %s4412 = sshll.u32 [#allocation14], 4
      %s4413 = int_to_ptr.vmem [resolvable:$true] %s4412
      %4418 = dma.vmem_to_hbm [thread:$0]  %s4413, 256, %s7, [#allocation15], 128, 128, 8
    $region57: #{tpu_custom_call.1} parent=1 // pred_fallthru
      _
    // Predicated region
    $region58: #{tpu_custom_call.1} parent=1 // pred_check
      _
    $region59: #{tpu_custom_call.1} parent=1 // pred_check_branch
      %4420 = sbr.rel (0) target = $region61
    $region60: #{tpu_custom_call.1} parent=1 // pred_region
      %s4422 = ssub.s32 16, 16
      %4423 = vsyncadd [#allocation15], %s4422
      %s4425 = sshll.u32 [#allocation16], 4
      %s4426 = int_to_ptr.vmem [resolvable:$true] %s4425
      %4428 = dma.vmem_to_hbm [thread:$0]  %s4426, 16, %s8, [#allocation15]
    $region61: #{tpu_custom_call.1} parent=1 // pred_fallthru
      _
    // Predicated region
    $region62: #{tpu_custom_call.1} parent=1 // pred_check
      _
    $region63: #{tpu_custom_call.1} parent=1 // pred_check_branch
      %4430 = sbr.rel (0) target = $region65
    $region64: #{tpu_custom_call.1} parent=1 // pred_region
      %4431 = dma.done [#allocation4], 256
    $region65: #{tpu_custom_call.1} parent=1 // pred_fallthru
      _
    // Predicated region
    $region66: #{tpu_custom_call.1} parent=1 // pred_check
      _
    $region67: #{tpu_custom_call.1} parent=1 // pred_check_branch
      %4433 = sbr.rel (0) target = $region69
    $region68: #{tpu_custom_call.1} parent=1 // pred_region
      %4434 = dma.done [#allocation15], 256
    $region69: #{tpu_custom_call.1} parent=1 // pred_fallthru
      _
    // Predicated region
    $region70: #{tpu_custom_call.1} parent=1 // pred_check
      _
    $region71: #{tpu_custom_call.1} parent=1 // pred_check_branch
      %4436 = sbr.rel (0) target = $region73
    $region72: #{tpu_custom_call.1} parent=1 // pred_region
      %4437 = dma.done [#allocation15], 16
    $region73: #{tpu_custom_call.1} parent=1 // pred_fallthru
      _
    %4438 = vsyncpa [#allocation3], 1
    %4439 = vsyncpa [#allocation6], 1
    %4440 = vsyncpa [#allocation9], 1
    %4441 = vsyncpa [#allocation12], 1
    %4442 = vsyncpa [#allocation4], 1
    %4443 = vsyncpa [#allocation15], 1

</llo_original>
